<compile_context>
chip_gen: v5e
topology: v5e:2x2
jax: 0.10.0
libtpu: 0.0.40
codegen_flags: <defaults>
</compile_context>

<pallas_src>
import jax
import jax.numpy as jnp
from jax.experimental import pallas as pl
from jax.experimental.pallas import tpu as pltpu


# -----------------------------------------------------------------------------
# Fused Pallas kernel: encoder LSTM stack -> decoder LSTM stack -> FC head
# -----------------------------------------------------------------------------
def make_fused_lstm_kernel(num_layers, hidden, t_enc, t_dec, batch):
    L, H = num_layers, hidden

    def kernel(*refs):
        # refs layout:
        #   0: x_enc (T_enc, B, I)        1: x_dec (T_dec, B, I)
        #   2 .. 2+3L-1:    encoder (wih, whh, b) per layer
        #   2+3L .. 2+6L-1: decoder (wih, whh, b) per layer
        #   2+6L: fc_w (H, O)             3+6L: fc_b (1, O)
        #   4+6L: out (T_dec*B, O)        <- output
        #   5+6L: dec_top (T_dec*B, H)    <- VMEM scratch (flat, no reshape)
        x_enc_ref, x_dec_ref = refs[0], refs[1]
        w_refs = refs[2:2 + 6 * L]
        fc_w = refs[2 + 6 * L][...]
        fc_b = refs[3 + 6 * L][...]
        out_ref = refs[4 + 6 * L]
        dec_top_sc = refs[5 + 6 * L]

        def load_weights(base):
            ws = []
            for l in range(L):
                wih = w_refs[base + 3 * l][...]
                whh = w_refs[base + 3 * l + 1][...]
                # hoist the bias broadcast out of the per-step body
                b = jnp.broadcast_to(w_refs[base + 3 * l + 2][...],
                                     (batch, 4 * H))
                ws.append((wih, whh, b))
            return ws

        enc_w = load_weights(0)
        dec_w = load_weights(3 * L)

        def cell(x_t, h, c, wih, whh, b):
            # one lane-dense (B, 4H) matmul per operand instead of 4x (B, H)
            gates = (jnp.dot(x_t, wih, preferred_element_type=jnp.float32)
                     + jnp.dot(h, whh, preferred_element_type=jnp.float32)
                     + b)
            # PyTorch gate order along 4H: input, forget, cell(g), output
            i_g = jax.nn.sigmoid(gates[:, 0 * H:1 * H])
            f_g = jax.nn.sigmoid(gates[:, 1 * H:2 * H])
            g_g = jnp.tanh(gates[:, 2 * H:3 * H])
            o_g = jax.nn.sigmoid(gates[:, 3 * H:4 * H])
            c_new = f_g * c + i_g * g_g
            h_new = o_g * jnp.tanh(c_new)
            return h_new, c_new

        def stack_step(x_t, hs, cs, weights):
            new_hs, new_cs = [], []
            inp = x_t
            for l in range(L):
                wih, whh, b = weights[l]
                h_new, c_new = cell(inp, hs[l], cs[l], wih, whh, b)
                new_hs.append(h_new)
                new_cs.append(c_new)
                inp = h_new
            return new_hs, new_cs

        zeros = jnp.zeros((batch, H), jnp.float32)
        hs = [zeros] * L
        cs = [zeros] * L

        # Encoder: only the final per-layer (h, c) is needed; the top-layer
        # sequence is never materialized.
        for t in range(t_enc):
            hs, cs = stack_step(x_enc_ref[t], hs, cs, enc_w)

        # Decoder: keep only the top layer's hidden sequence (FC input),
        # written as flat rows (static slices) so no reshape is needed later.
        for t in range(t_dec):
            hs, cs = stack_step(x_dec_ref[t], hs, cs, dec_w)
            dec_top_sc[pl.ds(t * batch, batch), :] = hs[-1]

        # FC head fused in-kernel: one (T_dec*B, H) @ (H, O) matmul, one store.
        out_ref[...] = (jnp.dot(dec_top_sc[...], fc_w,
                                preferred_element_type=jnp.float32) + fc_b)

    return kernel


# -----------------------------------------------------------------------------
# Wrapper (batch_first public API, matching PyTorch)
# -----------------------------------------------------------------------------
def lstm_model_forward_impl(x_enc, x_dec, enc_params, dec_params, fc_w, fc_b):
    B, T_enc, _ = x_enc.shape
    T_dec = x_dec.shape[1]
    L = len(enc_params)
    H = enc_params[0][1].shape[0]          # whh: (H, 4H)
    O = fc_w.shape[-1]

    # single entry transpose to time-major; everything stays (T, B, F) inside
    x_enc_t = jnp.transpose(x_enc, (1, 0, 2))
    x_dec_t = jnp.transpose(x_dec, (1, 0, 2))

    flat_w = []
    for (wih, whh, b) in tuple(enc_params) + tuple(dec_params):
        flat_w += [wih, whh, b]

    n_in = 2 + len(flat_w) + 2
    vmem = pltpu.MemorySpace.VMEM

    y_flat = pl.pallas_call(
        make_fused_lstm_kernel(L, H, T_enc, T_dec, B),
        out_shape=jax.ShapeDtypeStruct((T_dec * B, O), jnp.float32),
        in_specs=[pl.BlockSpec(memory_space=vmem)] * n_in,
        out_specs=pl.BlockSpec(memory_space=vmem),
        scratch_shapes=[pltpu.VMEM((T_dec * B, H), jnp.float32)],
    )(x_enc_t, x_dec_t, *flat_w, fc_w, fc_b)

    # only the tiny final result is transposed back to batch-first
    return jnp.transpose(y_flat.reshape(T_dec, B, O), (1, 0, 2))


lstm_model_forward = jax.jit(lstm_model_forward_impl)


# -----------------------------------------------------------------------------
# Pure-JAX reference (for the correctness check)
# -----------------------------------------------------------------------------
def lstm_layer_ref(x_tbi, h0, c0, wih, whh, b):
    H = h0.shape[-1]

    def step(carry, x_t):
        h, c = carry
        g = x_t @ wih + h @ whh + b
        i_g = jax.nn.sigmoid(g[:, :H])
        f_g = jax.nn.sigmoid(g[:, H:2 * H])
        g_g = jnp.tanh(g[:, 2 * H:3 * H])
        o_g = jax.nn.sigmoid(g[:, 3 * H:])
        c = f_g * c + i_g * g_g
        h = o_g * jnp.tanh(c)
        return (h, c), h

    (hn, cn), out = jax.lax.scan(step, (h0, c0), x_tbi)
    return out, hn, cn


def model_ref(x_enc, x_dec, enc_params, dec_params, fc_w, fc_b):
    B = x_enc.shape[0]
    L = len(enc_params)
    H = enc_params[0][1].shape[0]
    z = jnp.zeros((B, H), jnp.float32)

    def stacked(x_btf, h0s, c0s, params):
        x = jnp.transpose(x_btf, (1, 0, 2))
        hs, cs = [], []
        for l, (wih, whh, b) in enumerate(params):
            x, hn, cn = lstm_layer_ref(x, h0s[l], c0s[l], wih, whh, b)
            hs.append(hn)
            cs.append(cn)
        return jnp.transpose(x, (1, 0, 2)), hs, cs

    _, hn, cn = stacked(x_enc, [z] * L, [z] * L, enc_params)
    dec_out, _, _ = stacked(x_dec, hn, cn, dec_params)
    return dec_out @ fc_w + fc_b


# -----------------------------------------------------------------------------
# Deterministic parameter init (PyTorch-style uniform(-1/sqrt(H), 1/sqrt(H)))
# Fused-gate layout: W_ih (in, 4H), W_hh (H, 4H), bias (1, 4H) = b_ih + b_hh.
# -----------------------------------------------------------------------------
def init_lstm_params(key, input_size, hidden_size, num_layers):
    params = []
    bound = hidden_size ** -0.5
    for l in range(num_layers):
        in_sz = input_size if l == 0 else hidden_size
        key, k1, k2, k3, k4 = jax.random.split(key, 5)
        wih = jax.random.uniform(k1, (in_sz, 4 * hidden_size), jnp.float32,
                                 -bound, bound)
        whh = jax.random.uniform(k2, (hidden_size, 4 * hidden_size), jnp.float32,
                                 -bound, bound)
        b_ih = jax.random.uniform(k3, (1, 4 * hidden_size), jnp.float32,
                                  -bound, bound)
        b_hh = jax.random.uniform(k4, (1, 4 * hidden_size), jnp.float32,
                                  -bound, bound)
        params.append((wih, whh, b_ih + b_hh))
    return key, params


if __name__ == "__main__":
    B, T_ENC, T_DEC = 2, 8, 8
    INPUT_SIZE, HIDDEN, NUM_LAYERS, OUTPUT_SIZE = 16, 32, 2, 4

    key = jax.random.PRNGKey(0)
    key, enc_params = init_lstm_params(key, INPUT_SIZE, HIDDEN, NUM_LAYERS)
    key, dec_params = init_lstm_params(key, INPUT_SIZE, HIDDEN, NUM_LAYERS)
    key, kw, kb, kx1, kx2 = jax.random.split(key, 5)
    bound = HIDDEN ** -0.5
    fc_w = jax.random.uniform(kw, (HIDDEN, OUTPUT_SIZE), jnp.float32, -bound, bound)
    fc_b = jax.random.uniform(kb, (1, OUTPUT_SIZE), jnp.float32, -bound, bound)

    x_enc = jax.random.normal(kx1, (B, T_ENC, INPUT_SIZE), jnp.float32)
    x_dec = jax.random.normal(kx2, (B, T_DEC, INPUT_SIZE), jnp.float32)

    out = lstm_model_forward(x_enc, x_dec, tuple(enc_params), tuple(dec_params),
                             fc_w, fc_b)
    out = jax.block_until_ready(out)
    assert out.shape == (B, T_DEC, OUTPUT_SIZE), out.shape

    ref = model_ref(x_enc, x_dec, enc_params, dec_params, fc_w, fc_b)
    assert jnp.allclose(out, ref, rtol=1e-3, atol=1e-4), "mismatch vs JAX reference"

    print("KERNEL_OK")
</pallas_src>

<mosaic_0001>
module attributes {stable_mosaic.version = 11 : i64} {
  func.func @kernel(%arg0: memref<8x2x16xf32, #tpu.memory_space<vmem>>, %arg1: memref<8x2x16xf32, #tpu.memory_space<vmem>>, %arg2: memref<16x128xf32, #tpu.memory_space<vmem>>, %arg3: memref<32x128xf32, #tpu.memory_space<vmem>>, %arg4: memref<1x128xf32, #tpu.memory_space<vmem>>, %arg5: memref<32x128xf32, #tpu.memory_space<vmem>>, %arg6: memref<32x128xf32, #tpu.memory_space<vmem>>, %arg7: memref<1x128xf32, #tpu.memory_space<vmem>>, %arg8: memref<16x128xf32, #tpu.memory_space<vmem>>, %arg9: memref<32x128xf32, #tpu.memory_space<vmem>>, %arg10: memref<1x128xf32, #tpu.memory_space<vmem>>, %arg11: memref<32x128xf32, #tpu.memory_space<vmem>>, %arg12: memref<32x128xf32, #tpu.memory_space<vmem>>, %arg13: memref<1x128xf32, #tpu.memory_space<vmem>>, %arg14: memref<32x4xf32, #tpu.memory_space<vmem>>, %arg15: memref<1x4xf32, #tpu.memory_space<vmem>>, %arg16: memref<16x4xf32, #tpu.memory_space<vmem>>, %arg17: memref<16x32xf32, #tpu.memory_space<vmem>>) attributes {dimension_semantics = [], scalar_prefetch = 0 : i64, scratch_operands = 1 : i64, tpu.core_type = #tpu.core_type<tc>} {
    %c0 = arith.constant 0 : index
    %c0_0 = arith.constant 0 : index
    %0 = vector.load %arg14[%c0, %c0_0] : memref<32x4xf32, #tpu.memory_space<vmem>>, vector<32x4xf32>
    %c0_1 = arith.constant 0 : index
    %c0_2 = arith.constant 0 : index
    %1 = vector.load %arg15[%c0_1, %c0_2] : memref<1x4xf32, #tpu.memory_space<vmem>>, vector<1x4xf32>
    %c0_3 = arith.constant 0 : index
    %c0_4 = arith.constant 0 : index
    %2 = vector.load %arg2[%c0_3, %c0_4] : memref<16x128xf32, #tpu.memory_space<vmem>>, vector<16x128xf32>
    %c0_5 = arith.constant 0 : index
    %c0_6 = arith.constant 0 : index
    %3 = vector.load %arg3[%c0_5, %c0_6] : memref<32x128xf32, #tpu.memory_space<vmem>>, vector<32x128xf32>
    %c0_7 = arith.constant 0 : index
    %c0_8 = arith.constant 0 : index
    %4 = vector.load %arg4[%c0_7, %c0_8] : memref<1x128xf32, #tpu.memory_space<vmem>>, vector<1x128xf32>
    %5 = vector.shape_cast %4 : vector<1x128xf32> to vector<1x128xf32>
    %6 = vector.broadcast %5 : vector<1x128xf32> to vector<2x128xf32>
    %c0_9 = arith.constant 0 : index
    %c0_10 = arith.constant 0 : index
    %7 = vector.load %arg5[%c0_9, %c0_10] : memref<32x128xf32, #tpu.memory_space<vmem>>, vector<32x128xf32>
    %c0_11 = arith.constant 0 : index
    %c0_12 = arith.constant 0 : index
    %8 = vector.load %arg6[%c0_11, %c0_12] : memref<32x128xf32, #tpu.memory_space<vmem>>, vector<32x128xf32>
    %c0_13 = arith.constant 0 : index
    %c0_14 = arith.constant 0 : index
    %9 = vector.load %arg7[%c0_13, %c0_14] : memref<1x128xf32, #tpu.memory_space<vmem>>, vector<1x128xf32>
    %10 = vector.shape_cast %9 : vector<1x128xf32> to vector<1x128xf32>
    %11 = vector.broadcast %10 : vector<1x128xf32> to vector<2x128xf32>
    %c0_15 = arith.constant 0 : index
    %c0_16 = arith.constant 0 : index
    %12 = vector.load %arg8[%c0_15, %c0_16] : memref<16x128xf32, #tpu.memory_space<vmem>>, vector<16x128xf32>
    %c0_17 = arith.constant 0 : index
    %c0_18 = arith.constant 0 : index
    %13 = vector.load %arg9[%c0_17, %c0_18] : memref<32x128xf32, #tpu.memory_space<vmem>>, vector<32x128xf32>
    %c0_19 = arith.constant 0 : index
    %c0_20 = arith.constant 0 : index
    %14 = vector.load %arg10[%c0_19, %c0_20] : memref<1x128xf32, #tpu.memory_space<vmem>>, vector<1x128xf32>
    %15 = vector.shape_cast %14 : vector<1x128xf32> to vector<1x128xf32>
    %16 = vector.broadcast %15 : vector<1x128xf32> to vector<2x128xf32>
    %c0_21 = arith.constant 0 : index
    %c0_22 = arith.constant 0 : index
    %17 = vector.load %arg11[%c0_21, %c0_22] : memref<32x128xf32, #tpu.memory_space<vmem>>, vector<32x128xf32>
    %c0_23 = arith.constant 0 : index
    %c0_24 = arith.constant 0 : index
    %18 = vector.load %arg12[%c0_23, %c0_24] : memref<32x128xf32, #tpu.memory_space<vmem>>, vector<32x128xf32>
    %c0_25 = arith.constant 0 : index
    %c0_26 = arith.constant 0 : index
    %19 = vector.load %arg13[%c0_25, %c0_26] : memref<1x128xf32, #tpu.memory_space<vmem>>, vector<1x128xf32>
    %20 = vector.shape_cast %19 : vector<1x128xf32> to vector<1x128xf32>
    %21 = vector.broadcast %20 : vector<1x128xf32> to vector<2x128xf32>
    %cst = arith.constant 0.000000e+00 : f32
    %22 = vector.broadcast %cst : f32 to vector<2x32xf32>
    %c0_27 = arith.constant 0 : index
    %c0_28 = arith.constant 0 : index
    %c0_29 = arith.constant 0 : index
    %23 = vector.load %arg0[%c0_27, %c0_28, %c0_29] : memref<8x2x16xf32, #tpu.memory_space<vmem>>, vector<1x2x16xf32>
    %24 = vector.shape_cast %23 : vector<1x2x16xf32> to vector<2x16xf32>
    %cst_30 = arith.constant dense<0.000000e+00> : vector<2x128xf32>
    %25 = tpu.matmul %24, %2, %cst_30 {dimension_numbers = #tpu.dot_dimension_numbers<[1], [0], [0], [1], [0, 0, 1, 1], [], []>} : vector<2x16xf32>, vector<16x128xf32>, vector<2x128xf32> -> vector<2x128xf32>
    %cst_31 = arith.constant dense<0.000000e+00> : vector<2x128xf32>
    %26 = tpu.matmul %22, %3, %cst_31 {dimension_numbers = #tpu.dot_dimension_numbers<[1], [0], [0], [1], [0, 0, 1, 1], [], []>} : vector<2x32xf32>, vector<32x128xf32>, vector<2x128xf32> -> vector<2x128xf32>
    %27 = arith.addf %25, %26 : vector<2x128xf32>
    %28 = arith.addf %27, %6 : vector<2x128xf32>
    %29 = vector.extract_strided_slice %28 {offsets = [0, 0], sizes = [2, 32], strides = [1, 1]} : vector<2x128xf32> to vector<2x32xf32>
    %30 = arith.negf %29 : vector<2x32xf32>
    %31 = math.exp %30 : vector<2x32xf32>
    %cst_32 = arith.constant 1.000000e+00 : f32
    %32 = vector.broadcast %cst_32 : f32 to vector<2x32xf32>
    %33 = arith.addf %32, %31 : vector<2x32xf32>
    %34 = arith.divf %32, %33 : vector<2x32xf32>
    %35 = vector.extract_strided_slice %28 {offsets = [0, 32], sizes = [2, 32], strides = [1, 1]} : vector<2x128xf32> to vector<2x32xf32>
    %36 = arith.negf %35 : vector<2x32xf32>
    %37 = math.exp %36 : vector<2x32xf32>
    %cst_33 = arith.constant 1.000000e+00 : f32
    %38 = vector.broadcast %cst_33 : f32 to vector<2x32xf32>
    %39 = arith.addf %38, %37 : vector<2x32xf32>
    %40 = arith.divf %38, %39 : vector<2x32xf32>
    %41 = vector.extract_strided_slice %28 {offsets = [0, 64], sizes = [2, 32], strides = [1, 1]} : vector<2x128xf32> to vector<2x32xf32>
    %42 = math.tanh %41 : vector<2x32xf32>
    %43 = vector.extract_strided_slice %28 {offsets = [0, 96], sizes = [2, 32], strides = [1, 1]} : vector<2x128xf32> to vector<2x32xf32>
    %44 = arith.negf %43 : vector<2x32xf32>
    %45 = math.exp %44 : vector<2x32xf32>
    %cst_34 = arith.constant 1.000000e+00 : f32
    %46 = vector.broadcast %cst_34 : f32 to vector<2x32xf32>
    %47 = arith.addf %46, %45 : vector<2x32xf32>
    %48 = arith.divf %46, %47 : vector<2x32xf32>
    %49 = arith.mulf %40, %22 : vector<2x32xf32>
    %50 = arith.mulf %34, %42 : vector<2x32xf32>
    %51 = arith.addf %49, %50 : vector<2x32xf32>
    %52 = math.tanh %51 : vector<2x32xf32>
    %53 = arith.mulf %48, %52 : vector<2x32xf32>
    %cst_35 = arith.constant dense<0.000000e+00> : vector<2x128xf32>
    %54 = tpu.matmul %53, %7, %cst_35 {dimension_numbers = #tpu.dot_dimension_numbers<[1], [0], [0], [1], [0, 0, 1, 1], [], []>} : vector<2x32xf32>, vector<32x128xf32>, vector<2x128xf32> -> vector<2x128xf32>
    %cst_36 = arith.constant dense<0.000000e+00> : vector<2x128xf32>
    %55 = tpu.matmul %22, %8, %cst_36 {dimension_numbers = #tpu.dot_dimension_numbers<[1], [0], [0], [1], [0, 0, 1, 1], [], []>} : vector<2x32xf32>, vector<32x128xf32>, vector<2x128xf32> -> vector<2x128xf32>
    %56 = arith.addf %54, %55 : vector<2x128xf32>
    %57 = arith.addf %56, %11 : vector<2x128xf32>
    %58 = vector.extract_strided_slice %57 {offsets = [0, 0], sizes = [2, 32], strides = [1, 1]} : vector<2x128xf32> to vector<2x32xf32>
    %59 = arith.negf %58 : vector<2x32xf32>
    %60 = math.exp %59 : vector<2x32xf32>
    %cst_37 = arith.constant 1.000000e+00 : f32
    %61 = vector.broadcast %cst_37 : f32 to vector<2x32xf32>
    %62 = arith.addf %61, %60 : vector<2x32xf32>
    %63 = arith.divf %61, %62 : vector<2x32xf32>
    %64 = vector.extract_strided_slice %57 {offsets = [0, 32], sizes = [2, 32], strides = [1, 1]} : vector<2x128xf32> to vector<2x32xf32>
    %65 = arith.negf %64 : vector<2x32xf32>
    %66 = math.exp %65 : vector<2x32xf32>
    %cst_38 = arith.constant 1.000000e+00 : f32
    %67 = vector.broadcast %cst_38 : f32 to vector<2x32xf32>
    %68 = arith.addf %67, %66 : vector<2x32xf32>
    %69 = arith.divf %67, %68 : vector<2x32xf32>
    %70 = vector.extract_strided_slice %57 {offsets = [0, 64], sizes = [2, 32], strides = [1, 1]} : vector<2x128xf32> to vector<2x32xf32>
    %71 = math.tanh %70 : vector<2x32xf32>
    %72 = vector.extract_strided_slice %57 {offsets = [0, 96], sizes = [2, 32], strides = [1, 1]} : vector<2x128xf32> to vector<2x32xf32>
    %73 = arith.negf %72 : vector<2x32xf32>
    %74 = math.exp %73 : vector<2x32xf32>
    %cst_39 = arith.constant 1.000000e+00 : f32
    %75 = vector.broadcast %cst_39 : f32 to vector<2x32xf32>
    %76 = arith.addf %75, %74 : vector<2x32xf32>
    %77 = arith.divf %75, %76 : vector<2x32xf32>
    %78 = arith.mulf %69, %22 : vector<2x32xf32>
    %79 = arith.mulf %63, %71 : vector<2x32xf32>
    %80 = arith.addf %78, %79 : vector<2x32xf32>
    %81 = math.tanh %80 : vector<2x32xf32>
    %82 = arith.mulf %77, %81 : vector<2x32xf32>
    %c1 = arith.constant 1 : index
    %c0_40 = arith.constant 0 : index
    %c0_41 = arith.constant 0 : index
    %83 = vector.load %arg0[%c1, %c0_40, %c0_41] : memref<8x2x16xf32, #tpu.memory_space<vmem>>, vector<1x2x16xf32>
    %84 = vector.shape_cast %83 : vector<1x2x16xf32> to vector<2x16xf32>
    %cst_42 = arith.constant dense<0.000000e+00> : vector<2x128xf32>
    %85 = tpu.matmul %84, %2, %cst_42 {dimension_numbers = #tpu.dot_dimension_numbers<[1], [0], [0], [1], [0, 0, 1, 1], [], []>} : vector<2x16xf32>, vector<16x128xf32>, vector<2x128xf32> -> vector<2x128xf32>
    %cst_43 = arith.constant dense<0.000000e+00> : vector<2x128xf32>
    %86 = tpu.matmul %53, %3, %cst_43 {dimension_numbers = #tpu.dot_dimension_numbers<[1], [0], [0], [1], [0, 0, 1, 1], [], []>} : vector<2x32xf32>, vector<32x128xf32>, vector<2x128xf32> -> vector<2x128xf32>
    %87 = arith.addf %85, %86 : vector<2x128xf32>
    %88 = arith.addf %87, %6 : vector<2x128xf32>
    %89 = vector.extract_strided_slice %88 {offsets = [0, 0], sizes = [2, 32], strides = [1, 1]} : vector<2x128xf32> to vector<2x32xf32>
    %90 = arith.negf %89 : vector<2x32xf32>
    %91 = math.exp %90 : vector<2x32xf32>
    %cst_44 = arith.constant 1.000000e+00 : f32
    %92 = vector.broadcast %cst_44 : f32 to vector<2x32xf32>
    %93 = arith.addf %92, %91 : vector<2x32xf32>
    %94 = arith.divf %92, %93 : vector<2x32xf32>
    %95 = vector.extract_strided_slice %88 {offsets = [0, 32], sizes = [2, 32], strides = [1, 1]} : vector<2x128xf32> to vector<2x32xf32>
    %96 = arith.negf %95 : vector<2x32xf32>
    %97 = math.exp %96 : vector<2x32xf32>
    %cst_45 = arith.constant 1.000000e+00 : f32
    %98 = vector.broadcast %cst_45 : f32 to vector<2x32xf32>
    %99 = arith.addf %98, %97 : vector<2x32xf32>
    %100 = arith.divf %98, %99 : vector<2x32xf32>
    %101 = vector.extract_strided_slice %88 {offsets = [0, 64], sizes = [2, 32], strides = [1, 1]} : vector<2x128xf32> to vector<2x32xf32>
    %102 = math.tanh %101 : vector<2x32xf32>
    %103 = vector.extract_strided_slice %88 {offsets = [0, 96], sizes = [2, 32], strides = [1, 1]} : vector<2x128xf32> to vector<2x32xf32>
    %104 = arith.negf %103 : vector<2x32xf32>
    %105 = math.exp %104 : vector<2x32xf32>
    %cst_46 = arith.constant 1.000000e+00 : f32
    %106 = vector.broadcast %cst_46 : f32 to vector<2x32xf32>
    %107 = arith.addf %106, %105 : vector<2x32xf32>
    %108 = arith.divf %106, %107 : vector<2x32xf32>
    %109 = arith.mulf %100, %51 : vector<2x32xf32>
    %110 = arith.mulf %94, %102 : vector<2x32xf32>
    %111 = arith.addf %109, %110 : vector<2x32xf32>
    %112 = math.tanh %111 : vector<2x32xf32>
    %113 = arith.mulf %108, %112 : vector<2x32xf32>
    %cst_47 = arith.constant dense<0.000000e+00> : vector<2x128xf32>
    %114 = tpu.matmul %113, %7, %cst_47 {dimension_numbers = #tpu.dot_dimension_numbers<[1], [0], [0], [1], [0, 0, 1, 1], [], []>} : vector<2x32xf32>, vector<32x128xf32>, vector<2x128xf32> -> vector<2x128xf32>
    %cst_48 = arith.constant dense<0.000000e+00> : vector<2x128xf32>
    %115 = tpu.matmul %82, %8, %cst_48 {dimension_numbers = #tpu.dot_dimension_numbers<[1], [0], [0], [1], [0, 0, 1, 1], [], []>} : vector<2x32xf32>, vector<32x128xf32>, vector<2x128xf32> -> vector<2x128xf32>
    %116 = arith.addf %114, %115 : vector<2x128xf32>
    %117 = arith.addf %116, %11 : vector<2x128xf32>
    %118 = vector.extract_strided_slice %117 {offsets = [0, 0], sizes = [2, 32], strides = [1, 1]} : vector<2x128xf32> to vector<2x32xf32>
    %119 = arith.negf %118 : vector<2x32xf32>
    %120 = math.exp %119 : vector<2x32xf32>
    %cst_49 = arith.constant 1.000000e+00 : f32
    %121 = vector.broadcast %cst_49 : f32 to vector<2x32xf32>
    %122 = arith.addf %121, %120 : vector<2x32xf32>
    %123 = arith.divf %121, %122 : vector<2x32xf32>
    %124 = vector.extract_strided_slice %117 {offsets = [0, 32], sizes = [2, 32], strides = [1, 1]} : vector<2x128xf32> to vector<2x32xf32>
    %125 = arith.negf %124 : vector<2x32xf32>
    %126 = math.exp %125 : vector<2x32xf32>
    %cst_50 = arith.constant 1.000000e+00 : f32
    %127 = vector.broadcast %cst_50 : f32 to vector<2x32xf32>
    %128 = arith.addf %127, %126 : vector<2x32xf32>
    %129 = arith.divf %127, %128 : vector<2x32xf32>
    %130 = vector.extract_strided_slice %117 {offsets = [0, 64], sizes = [2, 32], strides = [1, 1]} : vector<2x128xf32> to vector<2x32xf32>
    %131 = math.tanh %130 : vector<2x32xf32>
    %132 = vector.extract_strided_slice %117 {offsets = [0, 96], sizes = [2, 32], strides = [1, 1]} : vector<2x128xf32> to vector<2x32xf32>
    %133 = arith.negf %132 : vector<2x32xf32>
    %134 = math.exp %133 : vector<2x32xf32>
    %cst_51 = arith.constant 1.000000e+00 : f32
    %135 = vector.broadcast %cst_51 : f32 to vector<2x32xf32>
    %136 = arith.addf %135, %134 : vector<2x32xf32>
    %137 = arith.divf %135, %136 : vector<2x32xf32>
    %138 = arith.mulf %129, %80 : vector<2x32xf32>
    %139 = arith.mulf %123, %131 : vector<2x32xf32>
    %140 = arith.addf %138, %139 : vector<2x32xf32>
    %141 = math.tanh %140 : vector<2x32xf32>
    %142 = arith.mulf %137, %141 : vector<2x32xf32>
    %c2 = arith.constant 2 : index
    %c0_52 = arith.constant 0 : index
    %c0_53 = arith.constant 0 : index
    %143 = vector.load %arg0[%c2, %c0_52, %c0_53] : memref<8x2x16xf32, #tpu.memory_space<vmem>>, vector<1x2x16xf32>
    %144 = vector.shape_cast %143 : vector<1x2x16xf32> to vector<2x16xf32>
    %cst_54 = arith.constant dense<0.000000e+00> : vector<2x128xf32>
    %145 = tpu.matmul %144, %2, %cst_54 {dimension_numbers = #tpu.dot_dimension_numbers<[1], [0], [0], [1], [0, 0, 1, 1], [], []>} : vector<2x16xf32>, vector<16x128xf32>, vector<2x128xf32> -> vector<2x128xf32>
    %cst_55 = arith.constant dense<0.000000e+00> : vector<2x128xf32>
    %146 = tpu.matmul %113, %3, %cst_55 {dimension_numbers = #tpu.dot_dimension_numbers<[1], [0], [0], [1], [0, 0, 1, 1], [], []>} : vector<2x32xf32>, vector<32x128xf32>, vector<2x128xf32> -> vector<2x128xf32>
    %147 = arith.addf %145, %146 : vector<2x128xf32>
    %148 = arith.addf %147, %6 : vector<2x128xf32>
    %149 = vector.extract_strided_slice %148 {offsets = [0, 0], sizes = [2, 32], strides = [1, 1]} : vector<2x128xf32> to vector<2x32xf32>
    %150 = arith.negf %149 : vector<2x32xf32>
    %151 = math.exp %150 : vector<2x32xf32>
    %cst_56 = arith.constant 1.000000e+00 : f32
    %152 = vector.broadcast %cst_56 : f32 to vector<2x32xf32>
    %153 = arith.addf %152, %151 : vector<2x32xf32>
    %154 = arith.divf %152, %153 : vector<2x32xf32>
    %155 = vector.extract_strided_slice %148 {offsets = [0, 32], sizes = [2, 32], strides = [1, 1]} : vector<2x128xf32> to vector<2x32xf32>
    %156 = arith.negf %155 : vector<2x32xf32>
    %157 = math.exp %156 : vector<2x32xf32>
    %cst_57 = arith.constant 1.000000e+00 : f32
    %158 = vector.broadcast %cst_57 : f32 to vector<2x32xf32>
    %159 = arith.addf %158, %157 : vector<2x32xf32>
    %160 = arith.divf %158, %159 : vector<2x32xf32>
    %161 = vector.extract_strided_slice %148 {offsets = [0, 64], sizes = [2, 32], strides = [1, 1]} : vector<2x128xf32> to vector<2x32xf32>
    %162 = math.tanh %161 : vector<2x32xf32>
    %163 = vector.extract_strided_slice %148 {offsets = [0, 96], sizes = [2, 32], strides = [1, 1]} : vector<2x128xf32> to vector<2x32xf32>
    %164 = arith.negf %163 : vector<2x32xf32>
    %165 = math.exp %164 : vector<2x32xf32>
    %cst_58 = arith.constant 1.000000e+00 : f32
    %166 = vector.broadcast %cst_58 : f32 to vector<2x32xf32>
    %167 = arith.addf %166, %165 : vector<2x32xf32>
    %168 = arith.divf %166, %167 : vector<2x32xf32>
    %169 = arith.mulf %160, %111 : vector<2x32xf32>
    %170 = arith.mulf %154, %162 : vector<2x32xf32>
    %171 = arith.addf %169, %170 : vector<2x32xf32>
    %172 = math.tanh %171 : vector<2x32xf32>
    %173 = arith.mulf %168, %172 : vector<2x32xf32>
    %cst_59 = arith.constant dense<0.000000e+00> : vector<2x128xf32>
    %174 = tpu.matmul %173, %7, %cst_59 {dimension_numbers = #tpu.dot_dimension_numbers<[1], [0], [0], [1], [0, 0, 1, 1], [], []>} : vector<2x32xf32>, vector<32x128xf32>, vector<2x128xf32> -> vector<2x128xf32>
    %cst_60 = arith.constant dense<0.000000e+00> : vector<2x128xf32>
    %175 = tpu.matmul %142, %8, %cst_60 {dimension_numbers = #tpu.dot_dimension_numbers<[1], [0], [0], [1], [0, 0, 1, 1], [], []>} : vector<2x32xf32>, vector<32x128xf32>, vector<2x128xf32> -> vector<2x128xf32>
    %176 = arith.addf %174, %175 : vector<2x128xf32>
    %177 = arith.addf %176, %11 : vector<2x128xf32>
    %178 = vector.extract_strided_slice %177 {offsets = [0, 0], sizes = [2, 32], strides = [1, 1]} : vector<2x128xf32> to vector<2x32xf32>
    %179 = arith.negf %178 : vector<2x32xf32>
    %180 = math.exp %179 : vector<2x32xf32>
    %cst_61 = arith.constant 1.000000e+00 : f32
    %181 = vector.broadcast %cst_61 : f32 to vector<2x32xf32>
    %182 = arith.addf %181, %180 : vector<2x32xf32>
    %183 = arith.divf %181, %182 : vector<2x32xf32>
    %184 = vector.extract_strided_slice %177 {offsets = [0, 32], sizes = [2, 32], strides = [1, 1]} : vector<2x128xf32> to vector<2x32xf32>
    %185 = arith.negf %184 : vector<2x32xf32>
    %186 = math.exp %185 : vector<2x32xf32>
    %cst_62 = arith.constant 1.000000e+00 : f32
    %187 = vector.broadcast %cst_62 : f32 to vector<2x32xf32>
    %188 = arith.addf %187, %186 : vector<2x32xf32>
    %189 = arith.divf %187, %188 : vector<2x32xf32>
    %190 = vector.extract_strided_slice %177 {offsets = [0, 64], sizes = [2, 32], strides = [1, 1]} : vector<2x128xf32> to vector<2x32xf32>
    %191 = math.tanh %190 : vector<2x32xf32>
    %192 = vector.extract_strided_slice %177 {offsets = [0, 96], sizes = [2, 32], strides = [1, 1]} : vector<2x128xf32> to vector<2x32xf32>
    %193 = arith.negf %192 : vector<2x32xf32>
    %194 = math.exp %193 : vector<2x32xf32>
    %cst_63 = arith.constant 1.000000e+00 : f32
    %195 = vector.broadcast %cst_63 : f32 to vector<2x32xf32>
    %196 = arith.addf %195, %194 : vector<2x32xf32>
    %197 = arith.divf %195, %196 : vector<2x32xf32>
    %198 = arith.mulf %189, %140 : vector<2x32xf32>
    %199 = arith.mulf %183, %191 : vector<2x32xf32>
    %200 = arith.addf %198, %199 : vector<2x32xf32>
    %201 = math.tanh %200 : vector<2x32xf32>
    %202 = arith.mulf %197, %201 : vector<2x32xf32>
    %c3 = arith.constant 3 : index
    %c0_64 = arith.constant 0 : index
    %c0_65 = arith.constant 0 : index
    %203 = vector.load %arg0[%c3, %c0_64, %c0_65] : memref<8x2x16xf32, #tpu.memory_space<vmem>>, vector<1x2x16xf32>
    %204 = vector.shape_cast %203 : vector<1x2x16xf32> to vector<2x16xf32>
    %cst_66 = arith.constant dense<0.000000e+00> : vector<2x128xf32>
    %205 = tpu.matmul %204, %2, %cst_66 {dimension_numbers = #tpu.dot_dimension_numbers<[1], [0], [0], [1], [0, 0, 1, 1], [], []>} : vector<2x16xf32>, vector<16x128xf32>, vector<2x128xf32> -> vector<2x128xf32>
    %cst_67 = arith.constant dense<0.000000e+00> : vector<2x128xf32>
    %206 = tpu.matmul %173, %3, %cst_67 {dimension_numbers = #tpu.dot_dimension_numbers<[1], [0], [0], [1], [0, 0, 1, 1], [], []>} : vector<2x32xf32>, vector<32x128xf32>, vector<2x128xf32> -> vector<2x128xf32>
    %207 = arith.addf %205, %206 : vector<2x128xf32>
    %208 = arith.addf %207, %6 : vector<2x128xf32>
    %209 = vector.extract_strided_slice %208 {offsets = [0, 0], sizes = [2, 32], strides = [1, 1]} : vector<2x128xf32> to vector<2x32xf32>
    %210 = arith.negf %209 : vector<2x32xf32>
    %211 = math.exp %210 : vector<2x32xf32>
    %cst_68 = arith.constant 1.000000e+00 : f32
    %212 = vector.broadcast %cst_68 : f32 to vector<2x32xf32>
    %213 = arith.addf %212, %211 : vector<2x32xf32>
    %214 = arith.divf %212, %213 : vector<2x32xf32>
    %215 = vector.extract_strided_slice %208 {offsets = [0, 32], sizes = [2, 32], strides = [1, 1]} : vector<2x128xf32> to vector<2x32xf32>
    %216 = arith.negf %215 : vector<2x32xf32>
    %217 = math.exp %216 : vector<2x32xf32>
    %cst_69 = arith.constant 1.000000e+00 : f32
    %218 = vector.broadcast %cst_69 : f32 to vector<2x32xf32>
    %219 = arith.addf %218, %217 : vector<2x32xf32>
    %220 = arith.divf %218, %219 : vector<2x32xf32>
    %221 = vector.extract_strided_slice %208 {offsets = [0, 64], sizes = [2, 32], strides = [1, 1]} : vector<2x128xf32> to vector<2x32xf32>
    %222 = math.tanh %221 : vector<2x32xf32>
    %223 = vector.extract_strided_slice %208 {offsets = [0, 96], sizes = [2, 32], strides = [1, 1]} : vector<2x128xf32> to vector<2x32xf32>
    %224 = arith.negf %223 : vector<2x32xf32>
    %225 = math.exp %224 : vector<2x32xf32>
    %cst_70 = arith.constant 1.000000e+00 : f32
    %226 = vector.broadcast %cst_70 : f32 to vector<2x32xf32>
    %227 = arith.addf %226, %225 : vector<2x32xf32>
    %228 = arith.divf %226, %227 : vector<2x32xf32>
    %229 = arith.mulf %220, %171 : vector<2x32xf32>
    %230 = arith.mulf %214, %222 : vector<2x32xf32>
    %231 = arith.addf %229, %230 : vector<2x32xf32>
    %232 = math.tanh %231 : vector<2x32xf32>
    %233 = arith.mulf %228, %232 : vector<2x32xf32>
    %cst_71 = arith.constant dense<0.000000e+00> : vector<2x128xf32>
    %234 = tpu.matmul %233, %7, %cst_71 {dimension_numbers = #tpu.dot_dimension_numbers<[1], [0], [0], [1], [0, 0, 1, 1], [], []>} : vector<2x32xf32>, vector<32x128xf32>, vector<2x128xf32> -> vector<2x128xf32>
    %cst_72 = arith.constant dense<0.000000e+00> : vector<2x128xf32>
    %235 = tpu.matmul %202, %8, %cst_72 {dimension_numbers = #tpu.dot_dimension_numbers<[1], [0], [0], [1], [0, 0, 1, 1], [], []>} : vector<2x32xf32>, vector<32x128xf32>, vector<2x128xf32> -> vector<2x128xf32>
    %236 = arith.addf %234, %235 : vector<2x128xf32>
    %237 = arith.addf %236, %11 : vector<2x128xf32>
    %238 = vector.extract_strided_slice %237 {offsets = [0, 0], sizes = [2, 32], strides = [1, 1]} : vector<2x128xf32> to vector<2x32xf32>
    %239 = arith.negf %238 : vector<2x32xf32>
    %240 = math.exp %239 : vector<2x32xf32>
    %cst_73 = arith.constant 1.000000e+00 : f32
    %241 = vector.broadcast %cst_73 : f32 to vector<2x32xf32>
    %242 = arith.addf %241, %240 : vector<2x32xf32>
    %243 = arith.divf %241, %242 : vector<2x32xf32>
    %244 = vector.extract_strided_slice %237 {offsets = [0, 32], sizes = [2, 32], strides = [1, 1]} : vector<2x128xf32> to vector<2x32xf32>
    %245 = arith.negf %244 : vector<2x32xf32>
    %246 = math.exp %245 : vector<2x32xf32>
    %cst_74 = arith.constant 1.000000e+00 : f32
    %247 = vector.broadcast %cst_74 : f32 to vector<2x32xf32>
    %248 = arith.addf %247, %246 : vector<2x32xf32>
    %249 = arith.divf %247, %248 : vector<2x32xf32>
    %250 = vector.extract_strided_slice %237 {offsets = [0, 64], sizes = [2, 32], strides = [1, 1]} : vector<2x128xf32> to vector<2x32xf32>
    %251 = math.tanh %250 : vector<2x32xf32>
    %252 = vector.extract_strided_slice %237 {offsets = [0, 96], sizes = [2, 32], strides = [1, 1]} : vector<2x128xf32> to vector<2x32xf32>
    %253 = arith.negf %252 : vector<2x32xf32>
    %254 = math.exp %253 : vector<2x32xf32>
    %cst_75 = arith.constant 1.000000e+00 : f32
    %255 = vector.broadcast %cst_75 : f32 to vector<2x32xf32>
    %256 = arith.addf %255, %254 : vector<2x32xf32>
    %257 = arith.divf %255, %256 : vector<2x32xf32>
    %258 = arith.mulf %249, %200 : vector<2x32xf32>
    %259 = arith.mulf %243, %251 : vector<2x32xf32>
    %260 = arith.addf %258, %259 : vector<2x32xf32>
    %261 = math.tanh %260 : vector<2x32xf32>
    %262 = arith.mulf %257, %261 : vector<2x32xf32>
    %c4 = arith.constant 4 : index
    %c0_76 = arith.constant 0 : index
    %c0_77 = arith.constant 0 : index
    %263 = vector.load %arg0[%c4, %c0_76, %c0_77] : memref<8x2x16xf32, #tpu.memory_space<vmem>>, vector<1x2x16xf32>
    %264 = vector.shape_cast %263 : vector<1x2x16xf32> to vector<2x16xf32>
    %cst_78 = arith.constant dense<0.000000e+00> : vector<2x128xf32>
    %265 = tpu.matmul %264, %2, %cst_78 {dimension_numbers = #tpu.dot_dimension_numbers<[1], [0], [0], [1], [0, 0, 1, 1], [], []>} : vector<2x16xf32>, vector<16x128xf32>, vector<2x128xf32> -> vector<2x128xf32>
    %cst_79 = arith.constant dense<0.000000e+00> : vector<2x128xf32>
    %266 = tpu.matmul %233, %3, %cst_79 {dimension_numbers = #tpu.dot_dimension_numbers<[1], [0], [0], [1], [0, 0, 1, 1], [], []>} : vector<2x32xf32>, vector<32x128xf32>, vector<2x128xf32> -> vector<2x128xf32>
    %267 = arith.addf %265, %266 : vector<2x128xf32>
    %268 = arith.addf %267, %6 : vector<2x128xf32>
    %269 = vector.extract_strided_slice %268 {offsets = [0, 0], sizes = [2, 32], strides = [1, 1]} : vector<2x128xf32> to vector<2x32xf32>
    %270 = arith.negf %269 : vector<2x32xf32>
    %271 = math.exp %270 : vector<2x32xf32>
    %cst_80 = arith.constant 1.000000e+00 : f32
    %272 = vector.broadcast %cst_80 : f32 to vector<2x32xf32>
    %273 = arith.addf %272, %271 : vector<2x32xf32>
    %274 = arith.divf %272, %273 : vector<2x32xf32>
    %275 = vector.extract_strided_slice %268 {offsets = [0, 32], sizes = [2, 32], strides = [1, 1]} : vector<2x128xf32> to vector<2x32xf32>
    %276 = arith.negf %275 : vector<2x32xf32>
    %277 = math.exp %276 : vector<2x32xf32>
    %cst_81 = arith.constant 1.000000e+00 : f32
    %278 = vector.broadcast %cst_81 : f32 to vector<2x32xf32>
    %279 = arith.addf %278, %277 : vector<2x32xf32>
    %280 = arith.divf %278, %279 : vector<2x32xf32>
    %281 = vector.extract_strided_slice %268 {offsets = [0, 64], sizes = [2, 32], strides = [1, 1]} : vector<2x128xf32> to vector<2x32xf32>
    %282 = math.tanh %281 : vector<2x32xf32>
    %283 = vector.extract_strided_slice %268 {offsets = [0, 96], sizes = [2, 32], strides = [1, 1]} : vector<2x128xf32> to vector<2x32xf32>
    %284 = arith.negf %283 : vector<2x32xf32>
    %285 = math.exp %284 : vector<2x32xf32>
    %cst_82 = arith.constant 1.000000e+00 : f32
    %286 = vector.broadcast %cst_82 : f32 to vector<2x32xf32>
    %287 = arith.addf %286, %285 : vector<2x32xf32>
    %288 = arith.divf %286, %287 : vector<2x32xf32>
    %289 = arith.mulf %280, %231 : vector<2x32xf32>
    %290 = arith.mulf %274, %282 : vector<2x32xf32>
    %291 = arith.addf %289, %290 : vector<2x32xf32>
    %292 = math.tanh %291 : vector<2x32xf32>
    %293 = arith.mulf %288, %292 : vector<2x32xf32>
    %cst_83 = arith.constant dense<0.000000e+00> : vector<2x128xf32>
    %294 = tpu.matmul %293, %7, %cst_83 {dimension_numbers = #tpu.dot_dimension_numbers<[1], [0], [0], [1], [0, 0, 1, 1], [], []>} : vector<2x32xf32>, vector<32x128xf32>, vector<2x128xf32> -> vector<2x128xf32>
    %cst_84 = arith.constant dense<0.000000e+00> : vector<2x128xf32>
    %295 = tpu.matmul %262, %8, %cst_84 {dimension_numbers = #tpu.dot_dimension_numbers<[1], [0], [0], [1], [0, 0, 1, 1], [], []>} : vector<2x32xf32>, vector<32x128xf32>, vector<2x128xf32> -> vector<2x128xf32>
    %296 = arith.addf %294, %295 : vector<2x128xf32>
    %297 = arith.addf %296, %11 : vector<2x128xf32>
    %298 = vector.extract_strided_slice %297 {offsets = [0, 0], sizes = [2, 32], strides = [1, 1]} : vector<2x128xf32> to vector<2x32xf32>
    %299 = arith.negf %298 : vector<2x32xf32>
    %300 = math.exp %299 : vector<2x32xf32>
    %cst_85 = arith.constant 1.000000e+00 : f32
    %301 = vector.broadcast %cst_85 : f32 to vector<2x32xf32>
    %302 = arith.addf %301, %300 : vector<2x32xf32>
    %303 = arith.divf %301, %302 : vector<2x32xf32>
    %304 = vector.extract_strided_slice %297 {offsets = [0, 32], sizes = [2, 32], strides = [1, 1]} : vector<2x128xf32> to vector<2x32xf32>
    %305 = arith.negf %304 : vector<2x32xf32>
    %306 = math.exp %305 : vector<2x32xf32>
    %cst_86 = arith.constant 1.000000e+00 : f32
    %307 = vector.broadcast %cst_86 : f32 to vector<2x32xf32>
    %308 = arith.addf %307, %306 : vector<2x32xf32>
    %309 = arith.divf %307, %308 : vector<2x32xf32>
    %310 = vector.extract_strided_slice %297 {offsets = [0, 64], sizes = [2, 32], strides = [1, 1]} : vector<2x128xf32> to vector<2x32xf32>
    %311 = math.tanh %310 : vector<2x32xf32>
    %312 = vector.extract_strided_slice %297 {offsets = [0, 96], sizes = [2, 32], strides = [1, 1]} : vector<2x128xf32> to vector<2x32xf32>
    %313 = arith.negf %312 : vector<2x32xf32>
    %314 = math.exp %313 : vector<2x32xf32>
    %cst_87 = arith.constant 1.000000e+00 : f32
    %315 = vector.broadcast %cst_87 : f32 to vector<2x32xf32>
    %316 = arith.addf %315, %314 : vector<2x32xf32>
    %317 = arith.divf %315, %316 : vector<2x32xf32>
    %318 = arith.mulf %309, %260 : vector<2x32xf32>
    %319 = arith.mulf %303, %311 : vector<2x32xf32>
    %320 = arith.addf %318, %319 : vector<2x32xf32>
    %321 = math.tanh %320 : vector<2x32xf32>
    %322 = arith.mulf %317, %321 : vector<2x32xf32>
    %c5 = arith.constant 5 : index
    %c0_88 = arith.constant 0 : index
    %c0_89 = arith.constant 0 : index
    %323 = vector.load %arg0[%c5, %c0_88, %c0_89] : memref<8x2x16xf32, #tpu.memory_space<vmem>>, vector<1x2x16xf32>
    %324 = vector.shape_cast %323 : vector<1x2x16xf32> to vector<2x16xf32>
    %cst_90 = arith.constant dense<0.000000e+00> : vector<2x128xf32>
    %325 = tpu.matmul %324, %2, %cst_90 {dimension_numbers = #tpu.dot_dimension_numbers<[1], [0], [0], [1], [0, 0, 1, 1], [], []>} : vector<2x16xf32>, vector<16x128xf32>, vector<2x128xf32> -> vector<2x128xf32>
    %cst_91 = arith.constant dense<0.000000e+00> : vector<2x128xf32>
    %326 = tpu.matmul %293, %3, %cst_91 {dimension_numbers = #tpu.dot_dimension_numbers<[1], [0], [0], [1], [0, 0, 1, 1], [], []>} : vector<2x32xf32>, vector<32x128xf32>, vector<2x128xf32> -> vector<2x128xf32>
    %327 = arith.addf %325, %326 : vector<2x128xf32>
    %328 = arith.addf %327, %6 : vector<2x128xf32>
    %329 = vector.extract_strided_slice %328 {offsets = [0, 0], sizes = [2, 32], strides = [1, 1]} : vector<2x128xf32> to vector<2x32xf32>
    %330 = arith.negf %329 : vector<2x32xf32>
    %331 = math.exp %330 : vector<2x32xf32>
    %cst_92 = arith.constant 1.000000e+00 : f32
    %332 = vector.broadcast %cst_92 : f32 to vector<2x32xf32>
    %333 = arith.addf %332, %331 : vector<2x32xf32>
    %334 = arith.divf %332, %333 : vector<2x32xf32>
    %335 = vector.extract_strided_slice %328 {offsets = [0, 32], sizes = [2, 32], strides = [1, 1]} : vector<2x128xf32> to vector<2x32xf32>
    %336 = arith.negf %335 : vector<2x32xf32>
    %337 = math.exp %336 : vector<2x32xf32>
    %cst_93 = arith.constant 1.000000e+00 : f32
    %338 = vector.broadcast %cst_93 : f32 to vector<2x32xf32>
    %339 = arith.addf %338, %337 : vector<2x32xf32>
    %340 = arith.divf %338, %339 : vector<2x32xf32>
    %341 = vector.extract_strided_slice %328 {offsets = [0, 64], sizes = [2, 32], strides = [1, 1]} : vector<2x128xf32> to vector<2x32xf32>
    %342 = math.tanh %341 : vector<2x32xf32>
    %343 = vector.extract_strided_slice %328 {offsets = [0, 96], sizes = [2, 32], strides = [1, 1]} : vector<2x128xf32> to vector<2x32xf32>
    %344 = arith.negf %343 : vector<2x32xf32>
    %345 = math.exp %344 : vector<2x32xf32>
    %cst_94 = arith.constant 1.000000e+00 : f32
    %346 = vector.broadcast %cst_94 : f32 to vector<2x32xf32>
    %347 = arith.addf %346, %345 : vector<2x32xf32>
    %348 = arith.divf %346, %347 : vector<2x32xf32>
    %349 = arith.mulf %340, %291 : vector<2x32xf32>
    %350 = arith.mulf %334, %342 : vector<2x32xf32>
    %351 = arith.addf %349, %350 : vector<2x32xf32>
    %352 = math.tanh %351 : vector<2x32xf32>
    %353 = arith.mulf %348, %352 : vector<2x32xf32>
    %cst_95 = arith.constant dense<0.000000e+00> : vector<2x128xf32>
    %354 = tpu.matmul %353, %7, %cst_95 {dimension_numbers = #tpu.dot_dimension_numbers<[1], [0], [0], [1], [0, 0, 1, 1], [], []>} : vector<2x32xf32>, vector<32x128xf32>, vector<2x128xf32> -> vector<2x128xf32>
    %cst_96 = arith.constant dense<0.000000e+00> : vector<2x128xf32>
    %355 = tpu.matmul %322, %8, %cst_96 {dimension_numbers = #tpu.dot_dimension_numbers<[1], [0], [0], [1], [0, 0, 1, 1], [], []>} : vector<2x32xf32>, vector<32x128xf32>, vector<2x128xf32> -> vector<2x128xf32>
    %356 = arith.addf %354, %355 : vector<2x128xf32>
    %357 = arith.addf %356, %11 : vector<2x128xf32>
    %358 = vector.extract_strided_slice %357 {offsets = [0, 0], sizes = [2, 32], strides = [1, 1]} : vector<2x128xf32> to vector<2x32xf32>
    %359 = arith.negf %358 : vector<2x32xf32>
    %360 = math.exp %359 : vector<2x32xf32>
    %cst_97 = arith.constant 1.000000e+00 : f32
    %361 = vector.broadcast %cst_97 : f32 to vector<2x32xf32>
    %362 = arith.addf %361, %360 : vector<2x32xf32>
    %363 = arith.divf %361, %362 : vector<2x32xf32>
    %364 = vector.extract_strided_slice %357 {offsets = [0, 32], sizes = [2, 32], strides = [1, 1]} : vector<2x128xf32> to vector<2x32xf32>
    %365 = arith.negf %364 : vector<2x32xf32>
    %366 = math.exp %365 : vector<2x32xf32>
    %cst_98 = arith.constant 1.000000e+00 : f32
    %367 = vector.broadcast %cst_98 : f32 to vector<2x32xf32>
    %368 = arith.addf %367, %366 : vector<2x32xf32>
    %369 = arith.divf %367, %368 : vector<2x32xf32>
    %370 = vector.extract_strided_slice %357 {offsets = [0, 64], sizes = [2, 32], strides = [1, 1]} : vector<2x128xf32> to vector<2x32xf32>
    %371 = math.tanh %370 : vector<2x32xf32>
    %372 = vector.extract_strided_slice %357 {offsets = [0, 96], sizes = [2, 32], strides = [1, 1]} : vector<2x128xf32> to vector<2x32xf32>
    %373 = arith.negf %372 : vector<2x32xf32>
    %374 = math.exp %373 : vector<2x32xf32>
    %cst_99 = arith.constant 1.000000e+00 : f32
    %375 = vector.broadcast %cst_99 : f32 to vector<2x32xf32>
    %376 = arith.addf %375, %374 : vector<2x32xf32>
    %377 = arith.divf %375, %376 : vector<2x32xf32>
    %378 = arith.mulf %369, %320 : vector<2x32xf32>
    %379 = arith.mulf %363, %371 : vector<2x32xf32>
    %380 = arith.addf %378, %379 : vector<2x32xf32>
    %381 = math.tanh %380 : vector<2x32xf32>
    %382 = arith.mulf %377, %381 : vector<2x32xf32>
    %c6 = arith.constant 6 : index
    %c0_100 = arith.constant 0 : index
    %c0_101 = arith.constant 0 : index
    %383 = vector.load %arg0[%c6, %c0_100, %c0_101] : memref<8x2x16xf32, #tpu.memory_space<vmem>>, vector<1x2x16xf32>
    %384 = vector.shape_cast %383 : vector<1x2x16xf32> to vector<2x16xf32>
    %cst_102 = arith.constant dense<0.000000e+00> : vector<2x128xf32>
    %385 = tpu.matmul %384, %2, %cst_102 {dimension_numbers = #tpu.dot_dimension_numbers<[1], [0], [0], [1], [0, 0, 1, 1], [], []>} : vector<2x16xf32>, vector<16x128xf32>, vector<2x128xf32> -> vector<2x128xf32>
    %cst_103 = arith.constant dense<0.000000e+00> : vector<2x128xf32>
    %386 = tpu.matmul %353, %3, %cst_103 {dimension_numbers = #tpu.dot_dimension_numbers<[1], [0], [0], [1], [0, 0, 1, 1], [], []>} : vector<2x32xf32>, vector<32x128xf32>, vector<2x128xf32> -> vector<2x128xf32>
    %387 = arith.addf %385, %386 : vector<2x128xf32>
    %388 = arith.addf %387, %6 : vector<2x128xf32>
    %389 = vector.extract_strided_slice %388 {offsets = [0, 0], sizes = [2, 32], strides = [1, 1]} : vector<2x128xf32> to vector<2x32xf32>
    %390 = arith.negf %389 : vector<2x32xf32>
    %391 = math.exp %390 : vector<2x32xf32>
    %cst_104 = arith.constant 1.000000e+00 : f32
    %392 = vector.broadcast %cst_104 : f32 to vector<2x32xf32>
    %393 = arith.addf %392, %391 : vector<2x32xf32>
    %394 = arith.divf %392, %393 : vector<2x32xf32>
    %395 = vector.extract_strided_slice %388 {offsets = [0, 32], sizes = [2, 32], strides = [1, 1]} : vector<2x128xf32> to vector<2x32xf32>
    %396 = arith.negf %395 : vector<2x32xf32>
    %397 = math.exp %396 : vector<2x32xf32>
    %cst_105 = arith.constant 1.000000e+00 : f32
    %398 = vector.broadcast %cst_105 : f32 to vector<2x32xf32>
    %399 = arith.addf %398, %397 : vector<2x32xf32>
    %400 = arith.divf %398, %399 : vector<2x32xf32>
    %401 = vector.extract_strided_slice %388 {offsets = [0, 64], sizes = [2, 32], strides = [1, 1]} : vector<2x128xf32> to vector<2x32xf32>
    %402 = math.tanh %401 : vector<2x32xf32>
    %403 = vector.extract_strided_slice %388 {offsets = [0, 96], sizes = [2, 32], strides = [1, 1]} : vector<2x128xf32> to vector<2x32xf32>
    %404 = arith.negf %403 : vector<2x32xf32>
    %405 = math.exp %404 : vector<2x32xf32>
    %cst_106 = arith.constant 1.000000e+00 : f32
    %406 = vector.broadcast %cst_106 : f32 to vector<2x32xf32>
    %407 = arith.addf %406, %405 : vector<2x32xf32>
    %408 = arith.divf %406, %407 : vector<2x32xf32>
    %409 = arith.mulf %400, %351 : vector<2x32xf32>
    %410 = arith.mulf %394, %402 : vector<2x32xf32>
    %411 = arith.addf %409, %410 : vector<2x32xf32>
    %412 = math.tanh %411 : vector<2x32xf32>
    %413 = arith.mulf %408, %412 : vector<2x32xf32>
    %cst_107 = arith.constant dense<0.000000e+00> : vector<2x128xf32>
    %414 = tpu.matmul %413, %7, %cst_107 {dimension_numbers = #tpu.dot_dimension_numbers<[1], [0], [0], [1], [0, 0, 1, 1], [], []>} : vector<2x32xf32>, vector<32x128xf32>, vector<2x128xf32> -> vector<2x128xf32>
    %cst_108 = arith.constant dense<0.000000e+00> : vector<2x128xf32>
    %415 = tpu.matmul %382, %8, %cst_108 {dimension_numbers = #tpu.dot_dimension_numbers<[1], [0], [0], [1], [0, 0, 1, 1], [], []>} : vector<2x32xf32>, vector<32x128xf32>, vector<2x128xf32> -> vector<2x128xf32>
    %416 = arith.addf %414, %415 : vector<2x128xf32>
    %417 = arith.addf %416, %11 : vector<2x128xf32>
    %418 = vector.extract_strided_slice %417 {offsets = [0, 0], sizes = [2, 32], strides = [1, 1]} : vector<2x128xf32> to vector<2x32xf32>
    %419 = arith.negf %418 : vector<2x32xf32>
    %420 = math.exp %419 : vector<2x32xf32>
    %cst_109 = arith.constant 1.000000e+00 : f32
    %421 = vector.broadcast %cst_109 : f32 to vector<2x32xf32>
    %422 = arith.addf %421, %420 : vector<2x32xf32>
    %423 = arith.divf %421, %422 : vector<2x32xf32>
    %424 = vector.extract_strided_slice %417 {offsets = [0, 32], sizes = [2, 32], strides = [1, 1]} : vector<2x128xf32> to vector<2x32xf32>
    %425 = arith.negf %424 : vector<2x32xf32>
    %426 = math.exp %425 : vector<2x32xf32>
    %cst_110 = arith.constant 1.000000e+00 : f32
    %427 = vector.broadcast %cst_110 : f32 to vector<2x32xf32>
    %428 = arith.addf %427, %426 : vector<2x32xf32>
    %429 = arith.divf %427, %428 : vector<2x32xf32>
    %430 = vector.extract_strided_slice %417 {offsets = [0, 64], sizes = [2, 32], strides = [1, 1]} : vector<2x128xf32> to vector<2x32xf32>
    %431 = math.tanh %430 : vector<2x32xf32>
    %432 = vector.extract_strided_slice %417 {offsets = [0, 96], sizes = [2, 32], strides = [1, 1]} : vector<2x128xf32> to vector<2x32xf32>
    %433 = arith.negf %432 : vector<2x32xf32>
    %434 = math.exp %433 : vector<2x32xf32>
    %cst_111 = arith.constant 1.000000e+00 : f32
    %435 = vector.broadcast %cst_111 : f32 to vector<2x32xf32>
    %436 = arith.addf %435, %434 : vector<2x32xf32>
    %437 = arith.divf %435, %436 : vector<2x32xf32>
    %438 = arith.mulf %429, %380 : vector<2x32xf32>
    %439 = arith.mulf %423, %431 : vector<2x32xf32>
    %440 = arith.addf %438, %439 : vector<2x32xf32>
    %441 = math.tanh %440 : vector<2x32xf32>
    %442 = arith.mulf %437, %441 : vector<2x32xf32>
    %c7 = arith.constant 7 : index
    %c0_112 = arith.constant 0 : index
    %c0_113 = arith.constant 0 : index
    %443 = vector.load %arg0[%c7, %c0_112, %c0_113] : memref<8x2x16xf32, #tpu.memory_space<vmem>>, vector<1x2x16xf32>
    %444 = vector.shape_cast %443 : vector<1x2x16xf32> to vector<2x16xf32>
    %cst_114 = arith.constant dense<0.000000e+00> : vector<2x128xf32>
    %445 = tpu.matmul %444, %2, %cst_114 {dimension_numbers = #tpu.dot_dimension_numbers<[1], [0], [0], [1], [0, 0, 1, 1], [], []>} : vector<2x16xf32>, vector<16x128xf32>, vector<2x128xf32> -> vector<2x128xf32>
    %cst_115 = arith.constant dense<0.000000e+00> : vector<2x128xf32>
    %446 = tpu.matmul %413, %3, %cst_115 {dimension_numbers = #tpu.dot_dimension_numbers<[1], [0], [0], [1], [0, 0, 1, 1], [], []>} : vector<2x32xf32>, vector<32x128xf32>, vector<2x128xf32> -> vector<2x128xf32>
    %447 = arith.addf %445, %446 : vector<2x128xf32>
    %448 = arith.addf %447, %6 : vector<2x128xf32>
    %449 = vector.extract_strided_slice %448 {offsets = [0, 0], sizes = [2, 32], strides = [1, 1]} : vector<2x128xf32> to vector<2x32xf32>
    %450 = arith.negf %449 : vector<2x32xf32>
    %451 = math.exp %450 : vector<2x32xf32>
    %cst_116 = arith.constant 1.000000e+00 : f32
    %452 = vector.broadcast %cst_116 : f32 to vector<2x32xf32>
    %453 = arith.addf %452, %451 : vector<2x32xf32>
    %454 = arith.divf %452, %453 : vector<2x32xf32>
    %455 = vector.extract_strided_slice %448 {offsets = [0, 32], sizes = [2, 32], strides = [1, 1]} : vector<2x128xf32> to vector<2x32xf32>
    %456 = arith.negf %455 : vector<2x32xf32>
    %457 = math.exp %456 : vector<2x32xf32>
    %cst_117 = arith.constant 1.000000e+00 : f32
    %458 = vector.broadcast %cst_117 : f32 to vector<2x32xf32>
    %459 = arith.addf %458, %457 : vector<2x32xf32>
    %460 = arith.divf %458, %459 : vector<2x32xf32>
    %461 = vector.extract_strided_slice %448 {offsets = [0, 64], sizes = [2, 32], strides = [1, 1]} : vector<2x128xf32> to vector<2x32xf32>
    %462 = math.tanh %461 : vector<2x32xf32>
    %463 = vector.extract_strided_slice %448 {offsets = [0, 96], sizes = [2, 32], strides = [1, 1]} : vector<2x128xf32> to vector<2x32xf32>
    %464 = arith.negf %463 : vector<2x32xf32>
    %465 = math.exp %464 : vector<2x32xf32>
    %cst_118 = arith.constant 1.000000e+00 : f32
    %466 = vector.broadcast %cst_118 : f32 to vector<2x32xf32>
    %467 = arith.addf %466, %465 : vector<2x32xf32>
    %468 = arith.divf %466, %467 : vector<2x32xf32>
    %469 = arith.mulf %460, %411 : vector<2x32xf32>
    %470 = arith.mulf %454, %462 : vector<2x32xf32>
    %471 = arith.addf %469, %470 : vector<2x32xf32>
    %472 = math.tanh %471 : vector<2x32xf32>
    %473 = arith.mulf %468, %472 : vector<2x32xf32>
    %cst_119 = arith.constant dense<0.000000e+00> : vector<2x128xf32>
    %474 = tpu.matmul %473, %7, %cst_119 {dimension_numbers = #tpu.dot_dimension_numbers<[1], [0], [0], [1], [0, 0, 1, 1], [], []>} : vector<2x32xf32>, vector<32x128xf32>, vector<2x128xf32> -> vector<2x128xf32>
    %cst_120 = arith.constant dense<0.000000e+00> : vector<2x128xf32>
    %475 = tpu.matmul %442, %8, %cst_120 {dimension_numbers = #tpu.dot_dimension_numbers<[1], [0], [0], [1], [0, 0, 1, 1], [], []>} : vector<2x32xf32>, vector<32x128xf32>, vector<2x128xf32> -> vector<2x128xf32>
    %476 = arith.addf %474, %475 : vector<2x128xf32>
    %477 = arith.addf %476, %11 : vector<2x128xf32>
    %478 = vector.extract_strided_slice %477 {offsets = [0, 0], sizes = [2, 32], strides = [1, 1]} : vector<2x128xf32> to vector<2x32xf32>
    %479 = arith.negf %478 : vector<2x32xf32>
    %480 = math.exp %479 : vector<2x32xf32>
    %cst_121 = arith.constant 1.000000e+00 : f32
    %481 = vector.broadcast %cst_121 : f32 to vector<2x32xf32>
    %482 = arith.addf %481, %480 : vector<2x32xf32>
    %483 = arith.divf %481, %482 : vector<2x32xf32>
    %484 = vector.extract_strided_slice %477 {offsets = [0, 32], sizes = [2, 32], strides = [1, 1]} : vector<2x128xf32> to vector<2x32xf32>
    %485 = arith.negf %484 : vector<2x32xf32>
    %486 = math.exp %485 : vector<2x32xf32>
    %cst_122 = arith.constant 1.000000e+00 : f32
    %487 = vector.broadcast %cst_122 : f32 to vector<2x32xf32>
    %488 = arith.addf %487, %486 : vector<2x32xf32>
    %489 = arith.divf %487, %488 : vector<2x32xf32>
    %490 = vector.extract_strided_slice %477 {offsets = [0, 64], sizes = [2, 32], strides = [1, 1]} : vector<2x128xf32> to vector<2x32xf32>
    %491 = math.tanh %490 : vector<2x32xf32>
    %492 = vector.extract_strided_slice %477 {offsets = [0, 96], sizes = [2, 32], strides = [1, 1]} : vector<2x128xf32> to vector<2x32xf32>
    %493 = arith.negf %492 : vector<2x32xf32>
    %494 = math.exp %493 : vector<2x32xf32>
    %cst_123 = arith.constant 1.000000e+00 : f32
    %495 = vector.broadcast %cst_123 : f32 to vector<2x32xf32>
    %496 = arith.addf %495, %494 : vector<2x32xf32>
    %497 = arith.divf %495, %496 : vector<2x32xf32>
    %498 = arith.mulf %489, %440 : vector<2x32xf32>
    %499 = arith.mulf %483, %491 : vector<2x32xf32>
    %500 = arith.addf %498, %499 : vector<2x32xf32>
    %501 = math.tanh %500 : vector<2x32xf32>
    %502 = arith.mulf %497, %501 : vector<2x32xf32>
    %c0_124 = arith.constant 0 : index
    %c0_125 = arith.constant 0 : index
    %c0_126 = arith.constant 0 : index
    %503 = vector.load %arg1[%c0_124, %c0_125, %c0_126] : memref<8x2x16xf32, #tpu.memory_space<vmem>>, vector<1x2x16xf32>
    %504 = vector.shape_cast %503 : vector<1x2x16xf32> to vector<2x16xf32>
    %cst_127 = arith.constant dense<0.000000e+00> : vector<2x128xf32>
    %505 = tpu.matmul %504, %12, %cst_127 {dimension_numbers = #tpu.dot_dimension_numbers<[1], [0], [0], [1], [0, 0, 1, 1], [], []>} : vector<2x16xf32>, vector<16x128xf32>, vector<2x128xf32> -> vector<2x128xf32>
    %cst_128 = arith.constant dense<0.000000e+00> : vector<2x128xf32>
    %506 = tpu.matmul %473, %13, %cst_128 {dimension_numbers = #tpu.dot_dimension_numbers<[1], [0], [0], [1], [0, 0, 1, 1], [], []>} : vector<2x32xf32>, vector<32x128xf32>, vector<2x128xf32> -> vector<2x128xf32>
    %507 = arith.addf %505, %506 : vector<2x128xf32>
    %508 = arith.addf %507, %16 : vector<2x128xf32>
    %509 = vector.extract_strided_slice %508 {offsets = [0, 0], sizes = [2, 32], strides = [1, 1]} : vector<2x128xf32> to vector<2x32xf32>
    %510 = arith.negf %509 : vector<2x32xf32>
    %511 = math.exp %510 : vector<2x32xf32>
    %cst_129 = arith.constant 1.000000e+00 : f32
    %512 = vector.broadcast %cst_129 : f32 to vector<2x32xf32>
    %513 = arith.addf %512, %511 : vector<2x32xf32>
    %514 = arith.divf %512, %513 : vector<2x32xf32>
    %515 = vector.extract_strided_slice %508 {offsets = [0, 32], sizes = [2, 32], strides = [1, 1]} : vector<2x128xf32> to vector<2x32xf32>
    %516 = arith.negf %515 : vector<2x32xf32>
    %517 = math.exp %516 : vector<2x32xf32>
    %cst_130 = arith.constant 1.000000e+00 : f32
    %518 = vector.broadcast %cst_130 : f32 to vector<2x32xf32>
    %519 = arith.addf %518, %517 : vector<2x32xf32>
    %520 = arith.divf %518, %519 : vector<2x32xf32>
    %521 = vector.extract_strided_slice %508 {offsets = [0, 64], sizes = [2, 32], strides = [1, 1]} : vector<2x128xf32> to vector<2x32xf32>
    %522 = math.tanh %521 : vector<2x32xf32>
    %523 = vector.extract_strided_slice %508 {offsets = [0, 96], sizes = [2, 32], strides = [1, 1]} : vector<2x128xf32> to vector<2x32xf32>
    %524 = arith.negf %523 : vector<2x32xf32>
    %525 = math.exp %524 : vector<2x32xf32>
    %cst_131 = arith.constant 1.000000e+00 : f32
    %526 = vector.broadcast %cst_131 : f32 to vector<2x32xf32>
    %527 = arith.addf %526, %525 : vector<2x32xf32>
    %528 = arith.divf %526, %527 : vector<2x32xf32>
    %529 = arith.mulf %520, %471 : vector<2x32xf32>
    %530 = arith.mulf %514, %522 : vector<2x32xf32>
    %531 = arith.addf %529, %530 : vector<2x32xf32>
    %532 = math.tanh %531 : vector<2x32xf32>
    %533 = arith.mulf %528, %532 : vector<2x32xf32>
    %cst_132 = arith.constant dense<0.000000e+00> : vector<2x128xf32>
    %534 = tpu.matmul %533, %17, %cst_132 {dimension_numbers = #tpu.dot_dimension_numbers<[1], [0], [0], [1], [0, 0, 1, 1], [], []>} : vector<2x32xf32>, vector<32x128xf32>, vector<2x128xf32> -> vector<2x128xf32>
    %cst_133 = arith.constant dense<0.000000e+00> : vector<2x128xf32>
    %535 = tpu.matmul %502, %18, %cst_133 {dimension_numbers = #tpu.dot_dimension_numbers<[1], [0], [0], [1], [0, 0, 1, 1], [], []>} : vector<2x32xf32>, vector<32x128xf32>, vector<2x128xf32> -> vector<2x128xf32>
    %536 = arith.addf %534, %535 : vector<2x128xf32>
    %537 = arith.addf %536, %21 : vector<2x128xf32>
    %538 = vector.extract_strided_slice %537 {offsets = [0, 0], sizes = [2, 32], strides = [1, 1]} : vector<2x128xf32> to vector<2x32xf32>
    %539 = arith.negf %538 : vector<2x32xf32>
    %540 = math.exp %539 : vector<2x32xf32>
    %cst_134 = arith.constant 1.000000e+00 : f32
    %541 = vector.broadcast %cst_134 : f32 to vector<2x32xf32>
    %542 = arith.addf %541, %540 : vector<2x32xf32>
    %543 = arith.divf %541, %542 : vector<2x32xf32>
    %544 = vector.extract_strided_slice %537 {offsets = [0, 32], sizes = [2, 32], strides = [1, 1]} : vector<2x128xf32> to vector<2x32xf32>
    %545 = arith.negf %544 : vector<2x32xf32>
    %546 = math.exp %545 : vector<2x32xf32>
    %cst_135 = arith.constant 1.000000e+00 : f32
    %547 = vector.broadcast %cst_135 : f32 to vector<2x32xf32>
    %548 = arith.addf %547, %546 : vector<2x32xf32>
    %549 = arith.divf %547, %548 : vector<2x32xf32>
    %550 = vector.extract_strided_slice %537 {offsets = [0, 64], sizes = [2, 32], strides = [1, 1]} : vector<2x128xf32> to vector<2x32xf32>
    %551 = math.tanh %550 : vector<2x32xf32>
    %552 = vector.extract_strided_slice %537 {offsets = [0, 96], sizes = [2, 32], strides = [1, 1]} : vector<2x128xf32> to vector<2x32xf32>
    %553 = arith.negf %552 : vector<2x32xf32>
    %554 = math.exp %553 : vector<2x32xf32>
    %cst_136 = arith.constant 1.000000e+00 : f32
    %555 = vector.broadcast %cst_136 : f32 to vector<2x32xf32>
    %556 = arith.addf %555, %554 : vector<2x32xf32>
    %557 = arith.divf %555, %556 : vector<2x32xf32>
    %558 = arith.mulf %549, %500 : vector<2x32xf32>
    %559 = arith.mulf %543, %551 : vector<2x32xf32>
    %560 = arith.addf %558, %559 : vector<2x32xf32>
    %561 = math.tanh %560 : vector<2x32xf32>
    %562 = arith.mulf %557, %561 : vector<2x32xf32>
    %c0_137 = arith.constant 0 : index
    %c0_138 = arith.constant 0 : index
    %563 = vector.load %arg17[%c0_137, %c0_138] : memref<16x32xf32, #tpu.memory_space<vmem>>, vector<2x32xf32>
    tpu.vector_store %arg17[%c0_137, %c0_138], %562 {strides = array<i32>} : memref<16x32xf32, #tpu.memory_space<vmem>>, vector<2x32xf32>,
    %c1_139 = arith.constant 1 : index
    %c0_140 = arith.constant 0 : index
    %c0_141 = arith.constant 0 : index
    %564 = vector.load %arg1[%c1_139, %c0_140, %c0_141] : memref<8x2x16xf32, #tpu.memory_space<vmem>>, vector<1x2x16xf32>
    %565 = vector.shape_cast %564 : vector<1x2x16xf32> to vector<2x16xf32>
    %cst_142 = arith.constant dense<0.000000e+00> : vector<2x128xf32>
    %566 = tpu.matmul %565, %12, %cst_142 {dimension_numbers = #tpu.dot_dimension_numbers<[1], [0], [0], [1], [0, 0, 1, 1], [], []>} : vector<2x16xf32>, vector<16x128xf32>, vector<2x128xf32> -> vector<2x128xf32>
    %cst_143 = arith.constant dense<0.000000e+00> : vector<2x128xf32>
    %567 = tpu.matmul %533, %13, %cst_143 {dimension_numbers = #tpu.dot_dimension_numbers<[1], [0], [0], [1], [0, 0, 1, 1], [], []>} : vector<2x32xf32>, vector<32x128xf32>, vector<2x128xf32> -> vector<2x128xf32>
    %568 = arith.addf %566, %567 : vector<2x128xf32>
    %569 = arith.addf %568, %16 : vector<2x128xf32>
    %570 = vector.extract_strided_slice %569 {offsets = [0, 0], sizes = [2, 32], strides = [1, 1]} : vector<2x128xf32> to vector<2x32xf32>
    %571 = arith.negf %570 : vector<2x32xf32>
    %572 = math.exp %571 : vector<2x32xf32>
    %cst_144 = arith.constant 1.000000e+00 : f32
    %573 = vector.broadcast %cst_144 : f32 to vector<2x32xf32>
    %574 = arith.addf %573, %572 : vector<2x32xf32>
    %575 = arith.divf %573, %574 : vector<2x32xf32>
    %576 = vector.extract_strided_slice %569 {offsets = [0, 32], sizes = [2, 32], strides = [1, 1]} : vector<2x128xf32> to vector<2x32xf32>
    %577 = arith.negf %576 : vector<2x32xf32>
    %578 = math.exp %577 : vector<2x32xf32>
    %cst_145 = arith.constant 1.000000e+00 : f32
    %579 = vector.broadcast %cst_145 : f32 to vector<2x32xf32>
    %580 = arith.addf %579, %578 : vector<2x32xf32>
    %581 = arith.divf %579, %580 : vector<2x32xf32>
    %582 = vector.extract_strided_slice %569 {offsets = [0, 64], sizes = [2, 32], strides = [1, 1]} : vector<2x128xf32> to vector<2x32xf32>
    %583 = math.tanh %582 : vector<2x32xf32>
    %584 = vector.extract_strided_slice %569 {offsets = [0, 96], sizes = [2, 32], strides = [1, 1]} : vector<2x128xf32> to vector<2x32xf32>
    %585 = arith.negf %584 : vector<2x32xf32>
    %586 = math.exp %585 : vector<2x32xf32>
    %cst_146 = arith.constant 1.000000e+00 : f32
    %587 = vector.broadcast %cst_146 : f32 to vector<2x32xf32>
    %588 = arith.addf %587, %586 : vector<2x32xf32>
    %589 = arith.divf %587, %588 : vector<2x32xf32>
    %590 = arith.mulf %581, %531 : vector<2x32xf32>
    %591 = arith.mulf %575, %583 : vector<2x32xf32>
    %592 = arith.addf %590, %591 : vector<2x32xf32>
    %593 = math.tanh %592 : vector<2x32xf32>
    %594 = arith.mulf %589, %593 : vector<2x32xf32>
    %cst_147 = arith.constant dense<0.000000e+00> : vector<2x128xf32>
    %595 = tpu.matmul %594, %17, %cst_147 {dimension_numbers = #tpu.dot_dimension_numbers<[1], [0], [0], [1], [0, 0, 1, 1], [], []>} : vector<2x32xf32>, vector<32x128xf32>, vector<2x128xf32> -> vector<2x128xf32>
    %cst_148 = arith.constant dense<0.000000e+00> : vector<2x128xf32>
    %596 = tpu.matmul %562, %18, %cst_148 {dimension_numbers = #tpu.dot_dimension_numbers<[1], [0], [0], [1], [0, 0, 1, 1], [], []>} : vector<2x32xf32>, vector<32x128xf32>, vector<2x128xf32> -> vector<2x128xf32>
    %597 = arith.addf %595, %596 : vector<2x128xf32>
    %598 = arith.addf %597, %21 : vector<2x128xf32>
    %599 = vector.extract_strided_slice %598 {offsets = [0, 0], sizes = [2, 32], strides = [1, 1]} : vector<2x128xf32> to vector<2x32xf32>
    %600 = arith.negf %599 : vector<2x32xf32>
    %601 = math.exp %600 : vector<2x32xf32>
    %cst_149 = arith.constant 1.000000e+00 : f32
    %602 = vector.broadcast %cst_149 : f32 to vector<2x32xf32>
    %603 = arith.addf %602, %601 : vector<2x32xf32>
    %604 = arith.divf %602, %603 : vector<2x32xf32>
    %605 = vector.extract_strided_slice %598 {offsets = [0, 32], sizes = [2, 32], strides = [1, 1]} : vector<2x128xf32> to vector<2x32xf32>
    %606 = arith.negf %605 : vector<2x32xf32>
    %607 = math.exp %606 : vector<2x32xf32>
    %cst_150 = arith.constant 1.000000e+00 : f32
    %608 = vector.broadcast %cst_150 : f32 to vector<2x32xf32>
    %609 = arith.addf %608, %607 : vector<2x32xf32>
    %610 = arith.divf %608, %609 : vector<2x32xf32>
    %611 = vector.extract_strided_slice %598 {offsets = [0, 64], sizes = [2, 32], strides = [1, 1]} : vector<2x128xf32> to vector<2x32xf32>
    %612 = math.tanh %611 : vector<2x32xf32>
    %613 = vector.extract_strided_slice %598 {offsets = [0, 96], sizes = [2, 32], strides = [1, 1]} : vector<2x128xf32> to vector<2x32xf32>
    %614 = arith.negf %613 : vector<2x32xf32>
    %615 = math.exp %614 : vector<2x32xf32>
    %cst_151 = arith.constant 1.000000e+00 : f32
    %616 = vector.broadcast %cst_151 : f32 to vector<2x32xf32>
    %617 = arith.addf %616, %615 : vector<2x32xf32>
    %618 = arith.divf %616, %617 : vector<2x32xf32>
    %619 = arith.mulf %610, %560 : vector<2x32xf32>
    %620 = arith.mulf %604, %612 : vector<2x32xf32>
    %621 = arith.addf %619, %620 : vector<2x32xf32>
    %622 = math.tanh %621 : vector<2x32xf32>
    %623 = arith.mulf %618, %622 : vector<2x32xf32>
    %c2_152 = arith.constant 2 : index
    %c0_153 = arith.constant 0 : index
    %624 = vector.load %arg17[%c2_152, %c0_153] : memref<16x32xf32, #tpu.memory_space<vmem>>, vector<2x32xf32>
    tpu.vector_store %arg17[%c2_152, %c0_153], %623 {strides = array<i32>} : memref<16x32xf32, #tpu.memory_space<vmem>>, vector<2x32xf32>,
    %c2_154 = arith.constant 2 : index
    %c0_155 = arith.constant 0 : index
    %c0_156 = arith.constant 0 : index
    %625 = vector.load %arg1[%c2_154, %c0_155, %c0_156] : memref<8x2x16xf32, #tpu.memory_space<vmem>>, vector<1x2x16xf32>
    %626 = vector.shape_cast %625 : vector<1x2x16xf32> to vector<2x16xf32>
    %cst_157 = arith.constant dense<0.000000e+00> : vector<2x128xf32>
    %627 = tpu.matmul %626, %12, %cst_157 {dimension_numbers = #tpu.dot_dimension_numbers<[1], [0], [0], [1], [0, 0, 1, 1], [], []>} : vector<2x16xf32>, vector<16x128xf32>, vector<2x128xf32> -> vector<2x128xf32>
    %cst_158 = arith.constant dense<0.000000e+00> : vector<2x128xf32>
    %628 = tpu.matmul %594, %13, %cst_158 {dimension_numbers = #tpu.dot_dimension_numbers<[1], [0], [0], [1], [0, 0, 1, 1], [], []>} : vector<2x32xf32>, vector<32x128xf32>, vector<2x128xf32> -> vector<2x128xf32>
    %629 = arith.addf %627, %628 : vector<2x128xf32>
    %630 = arith.addf %629, %16 : vector<2x128xf32>
    %631 = vector.extract_strided_slice %630 {offsets = [0, 0], sizes = [2, 32], strides = [1, 1]} : vector<2x128xf32> to vector<2x32xf32>
    %632 = arith.negf %631 : vector<2x32xf32>
    %633 = math.exp %632 : vector<2x32xf32>
    %cst_159 = arith.constant 1.000000e+00 : f32
    %634 = vector.broadcast %cst_159 : f32 to vector<2x32xf32>
    %635 = arith.addf %634, %633 : vector<2x32xf32>
    %636 = arith.divf %634, %635 : vector<2x32xf32>
    %637 = vector.extract_strided_slice %630 {offsets = [0, 32], sizes = [2, 32], strides = [1, 1]} : vector<2x128xf32> to vector<2x32xf32>
    %638 = arith.negf %637 : vector<2x32xf32>
    %639 = math.exp %638 : vector<2x32xf32>
    %cst_160 = arith.constant 1.000000e+00 : f32
    %640 = vector.broadcast %cst_160 : f32 to vector<2x32xf32>
    %641 = arith.addf %640, %639 : vector<2x32xf32>
    %642 = arith.divf %640, %641 : vector<2x32xf32>
    %643 = vector.extract_strided_slice %630 {offsets = [0, 64], sizes = [2, 32], strides = [1, 1]} : vector<2x128xf32> to vector<2x32xf32>
    %644 = math.tanh %643 : vector<2x32xf32>
    %645 = vector.extract_strided_slice %630 {offsets = [0, 96], sizes = [2, 32], strides = [1, 1]} : vector<2x128xf32> to vector<2x32xf32>
    %646 = arith.negf %645 : vector<2x32xf32>
    %647 = math.exp %646 : vector<2x32xf32>
    %cst_161 = arith.constant 1.000000e+00 : f32
    %648 = vector.broadcast %cst_161 : f32 to vector<2x32xf32>
    %649 = arith.addf %648, %647 : vector<2x32xf32>
    %650 = arith.divf %648, %649 : vector<2x32xf32>
    %651 = arith.mulf %642, %592 : vector<2x32xf32>
    %652 = arith.mulf %636, %644 : vector<2x32xf32>
    %653 = arith.addf %651, %652 : vector<2x32xf32>
    %654 = math.tanh %653 : vector<2x32xf32>
    %655 = arith.mulf %650, %654 : vector<2x32xf32>
    %cst_162 = arith.constant dense<0.000000e+00> : vector<2x128xf32>
    %656 = tpu.matmul %655, %17, %cst_162 {dimension_numbers = #tpu.dot_dimension_numbers<[1], [0], [0], [1], [0, 0, 1, 1], [], []>} : vector<2x32xf32>, vector<32x128xf32>, vector<2x128xf32> -> vector<2x128xf32>
    %cst_163 = arith.constant dense<0.000000e+00> : vector<2x128xf32>
    %657 = tpu.matmul %623, %18, %cst_163 {dimension_numbers = #tpu.dot_dimension_numbers<[1], [0], [0], [1], [0, 0, 1, 1], [], []>} : vector<2x32xf32>, vector<32x128xf32>, vector<2x128xf32> -> vector<2x128xf32>
    %658 = arith.addf %656, %657 : vector<2x128xf32>
    %659 = arith.addf %658, %21 : vector<2x128xf32>
    %660 = vector.extract_strided_slice %659 {offsets = [0, 0], sizes = [2, 32], strides = [1, 1]} : vector<2x128xf32> to vector<2x32xf32>
    %661 = arith.negf %660 : vector<2x32xf32>
    %662 = math.exp %661 : vector<2x32xf32>
    %cst_164 = arith.constant 1.000000e+00 : f32
    %663 = vector.broadcast %cst_164 : f32 to vector<2x32xf32>
    %664 = arith.addf %663, %662 : vector<2x32xf32>
    %665 = arith.divf %663, %664 : vector<2x32xf32>
    %666 = vector.extract_strided_slice %659 {offsets = [0, 32], sizes = [2, 32], strides = [1, 1]} : vector<2x128xf32> to vector<2x32xf32>
    %667 = arith.negf %666 : vector<2x32xf32>
    %668 = math.exp %667 : vector<2x32xf32>
    %cst_165 = arith.constant 1.000000e+00 : f32
    %669 = vector.broadcast %cst_165 : f32 to vector<2x32xf32>
    %670 = arith.addf %669, %668 : vector<2x32xf32>
    %671 = arith.divf %669, %670 : vector<2x32xf32>
    %672 = vector.extract_strided_slice %659 {offsets = [0, 64], sizes = [2, 32], strides = [1, 1]} : vector<2x128xf32> to vector<2x32xf32>
    %673 = math.tanh %672 : vector<2x32xf32>
    %674 = vector.extract_strided_slice %659 {offsets = [0, 96], sizes = [2, 32], strides = [1, 1]} : vector<2x128xf32> to vector<2x32xf32>
    %675 = arith.negf %674 : vector<2x32xf32>
    %676 = math.exp %675 : vector<2x32xf32>
    %cst_166 = arith.constant 1.000000e+00 : f32
    %677 = vector.broadcast %cst_166 : f32 to vector<2x32xf32>
    %678 = arith.addf %677, %676 : vector<2x32xf32>
    %679 = arith.divf %677, %678 : vector<2x32xf32>
    %680 = arith.mulf %671, %621 : vector<2x32xf32>
    %681 = arith.mulf %665, %673 : vector<2x32xf32>
    %682 = arith.addf %680, %681 : vector<2x32xf32>
    %683 = math.tanh %682 : vector<2x32xf32>
    %684 = arith.mulf %679, %683 : vector<2x32xf32>
    %c4_167 = arith.constant 4 : index
    %c0_168 = arith.constant 0 : index
    %685 = vector.load %arg17[%c4_167, %c0_168] : memref<16x32xf32, #tpu.memory_space<vmem>>, vector<2x32xf32>
    tpu.vector_store %arg17[%c4_167, %c0_168], %684 {strides = array<i32>} : memref<16x32xf32, #tpu.memory_space<vmem>>, vector<2x32xf32>,
    %c3_169 = arith.constant 3 : index
    %c0_170 = arith.constant 0 : index
    %c0_171 = arith.constant 0 : index
    %686 = vector.load %arg1[%c3_169, %c0_170, %c0_171] : memref<8x2x16xf32, #tpu.memory_space<vmem>>, vector<1x2x16xf32>
    %687 = vector.shape_cast %686 : vector<1x2x16xf32> to vector<2x16xf32>
    %cst_172 = arith.constant dense<0.000000e+00> : vector<2x128xf32>
    %688 = tpu.matmul %687, %12, %cst_172 {dimension_numbers = #tpu.dot_dimension_numbers<[1], [0], [0], [1], [0, 0, 1, 1], [], []>} : vector<2x16xf32>, vector<16x128xf32>, vector<2x128xf32> -> vector<2x128xf32>
    %cst_173 = arith.constant dense<0.000000e+00> : vector<2x128xf32>
    %689 = tpu.matmul %655, %13, %cst_173 {dimension_numbers = #tpu.dot_dimension_numbers<[1], [0], [0], [1], [0, 0, 1, 1], [], []>} : vector<2x32xf32>, vector<32x128xf32>, vector<2x128xf32> -> vector<2x128xf32>
    %690 = arith.addf %688, %689 : vector<2x128xf32>
    %691 = arith.addf %690, %16 : vector<2x128xf32>
    %692 = vector.extract_strided_slice %691 {offsets = [0, 0], sizes = [2, 32], strides = [1, 1]} : vector<2x128xf32> to vector<2x32xf32>
    %693 = arith.negf %692 : vector<2x32xf32>
    %694 = math.exp %693 : vector<2x32xf32>
    %cst_174 = arith.constant 1.000000e+00 : f32
    %695 = vector.broadcast %cst_174 : f32 to vector<2x32xf32>
    %696 = arith.addf %695, %694 : vector<2x32xf32>
    %697 = arith.divf %695, %696 : vector<2x32xf32>
    %698 = vector.extract_strided_slice %691 {offsets = [0, 32], sizes = [2, 32], strides = [1, 1]} : vector<2x128xf32> to vector<2x32xf32>
    %699 = arith.negf %698 : vector<2x32xf32>
    %700 = math.exp %699 : vector<2x32xf32>
    %cst_175 = arith.constant 1.000000e+00 : f32
    %701 = vector.broadcast %cst_175 : f32 to vector<2x32xf32>
    %702 = arith.addf %701, %700 : vector<2x32xf32>
    %703 = arith.divf %701, %702 : vector<2x32xf32>
    %704 = vector.extract_strided_slice %691 {offsets = [0, 64], sizes = [2, 32], strides = [1, 1]} : vector<2x128xf32> to vector<2x32xf32>
    %705 = math.tanh %704 : vector<2x32xf32>
    %706 = vector.extract_strided_slice %691 {offsets = [0, 96], sizes = [2, 32], strides = [1, 1]} : vector<2x128xf32> to vector<2x32xf32>
    %707 = arith.negf %706 : vector<2x32xf32>
    %708 = math.exp %707 : vector<2x32xf32>
    %cst_176 = arith.constant 1.000000e+00 : f32
    %709 = vector.broadcast %cst_176 : f32 to vector<2x32xf32>
    %710 = arith.addf %709, %708 : vector<2x32xf32>
    %711 = arith.divf %709, %710 : vector<2x32xf32>
    %712 = arith.mulf %703, %653 : vector<2x32xf32>
    %713 = arith.mulf %697, %705 : vector<2x32xf32>
    %714 = arith.addf %712, %713 : vector<2x32xf32>
    %715 = math.tanh %714 : vector<2x32xf32>
    %716 = arith.mulf %711, %715 : vector<2x32xf32>
    %cst_177 = arith.constant dense<0.000000e+00> : vector<2x128xf32>
    %717 = tpu.matmul %716, %17, %cst_177 {dimension_numbers = #tpu.dot_dimension_numbers<[1], [0], [0], [1], [0, 0, 1, 1], [], []>} : vector<2x32xf32>, vector<32x128xf32>, vector<2x128xf32> -> vector<2x128xf32>
    %cst_178 = arith.constant dense<0.000000e+00> : vector<2x128xf32>
    %718 = tpu.matmul %684, %18, %cst_178 {dimension_numbers = #tpu.dot_dimension_numbers<[1], [0], [0], [1], [0, 0, 1, 1], [], []>} : vector<2x32xf32>, vector<32x128xf32>, vector<2x128xf32> -> vector<2x128xf32>
    %719 = arith.addf %717, %718 : vector<2x128xf32>
    %720 = arith.addf %719, %21 : vector<2x128xf32>
    %721 = vector.extract_strided_slice %720 {offsets = [0, 0], sizes = [2, 32], strides = [1, 1]} : vector<2x128xf32> to vector<2x32xf32>
    %722 = arith.negf %721 : vector<2x32xf32>
    %723 = math.exp %722 : vector<2x32xf32>
    %cst_179 = arith.constant 1.000000e+00 : f32
    %724 = vector.broadcast %cst_179 : f32 to vector<2x32xf32>
    %725 = arith.addf %724, %723 : vector<2x32xf32>
    %726 = arith.divf %724, %725 : vector<2x32xf32>
    %727 = vector.extract_strided_slice %720 {offsets = [0, 32], sizes = [2, 32], strides = [1, 1]} : vector<2x128xf32> to vector<2x32xf32>
    %728 = arith.negf %727 : vector<2x32xf32>
    %729 = math.exp %728 : vector<2x32xf32>
    %cst_180 = arith.constant 1.000000e+00 : f32
    %730 = vector.broadcast %cst_180 : f32 to vector<2x32xf32>
    %731 = arith.addf %730, %729 : vector<2x32xf32>
    %732 = arith.divf %730, %731 : vector<2x32xf32>
    %733 = vector.extract_strided_slice %720 {offsets = [0, 64], sizes = [2, 32], strides = [1, 1]} : vector<2x128xf32> to vector<2x32xf32>
    %734 = math.tanh %733 : vector<2x32xf32>
    %735 = vector.extract_strided_slice %720 {offsets = [0, 96], sizes = [2, 32], strides = [1, 1]} : vector<2x128xf32> to vector<2x32xf32>
    %736 = arith.negf %735 : vector<2x32xf32>
    %737 = math.exp %736 : vector<2x32xf32>
    %cst_181 = arith.constant 1.000000e+00 : f32
    %738 = vector.broadcast %cst_181 : f32 to vector<2x32xf32>
    %739 = arith.addf %738, %737 : vector<2x32xf32>
    %740 = arith.divf %738, %739 : vector<2x32xf32>
    %741 = arith.mulf %732, %682 : vector<2x32xf32>
    %742 = arith.mulf %726, %734 : vector<2x32xf32>
    %743 = arith.addf %741, %742 : vector<2x32xf32>
    %744 = math.tanh %743 : vector<2x32xf32>
    %745 = arith.mulf %740, %744 : vector<2x32xf32>
    %c6_182 = arith.constant 6 : index
    %c0_183 = arith.constant 0 : index
    %746 = vector.load %arg17[%c6_182, %c0_183] : memref<16x32xf32, #tpu.memory_space<vmem>>, vector<2x32xf32>
    tpu.vector_store %arg17[%c6_182, %c0_183], %745 {strides = array<i32>} : memref<16x32xf32, #tpu.memory_space<vmem>>, vector<2x32xf32>,
    %c4_184 = arith.constant 4 : index
    %c0_185 = arith.constant 0 : index
    %c0_186 = arith.constant 0 : index
    %747 = vector.load %arg1[%c4_184, %c0_185, %c0_186] : memref<8x2x16xf32, #tpu.memory_space<vmem>>, vector<1x2x16xf32>
    %748 = vector.shape_cast %747 : vector<1x2x16xf32> to vector<2x16xf32>
    %cst_187 = arith.constant dense<0.000000e+00> : vector<2x128xf32>
    %749 = tpu.matmul %748, %12, %cst_187 {dimension_numbers = #tpu.dot_dimension_numbers<[1], [0], [0], [1], [0, 0, 1, 1], [], []>} : vector<2x16xf32>, vector<16x128xf32>, vector<2x128xf32> -> vector<2x128xf32>
    %cst_188 = arith.constant dense<0.000000e+00> : vector<2x128xf32>
    %750 = tpu.matmul %716, %13, %cst_188 {dimension_numbers = #tpu.dot_dimension_numbers<[1], [0], [0], [1], [0, 0, 1, 1], [], []>} : vector<2x32xf32>, vector<32x128xf32>, vector<2x128xf32> -> vector<2x128xf32>
    %751 = arith.addf %749, %750 : vector<2x128xf32>
    %752 = arith.addf %751, %16 : vector<2x128xf32>
    %753 = vector.extract_strided_slice %752 {offsets = [0, 0], sizes = [2, 32], strides = [1, 1]} : vector<2x128xf32> to vector<2x32xf32>
    %754 = arith.negf %753 : vector<2x32xf32>
    %755 = math.exp %754 : vector<2x32xf32>
    %cst_189 = arith.constant 1.000000e+00 : f32
    %756 = vector.broadcast %cst_189 : f32 to vector<2x32xf32>
    %757 = arith.addf %756, %755 : vector<2x32xf32>
    %758 = arith.divf %756, %757 : vector<2x32xf32>
    %759 = vector.extract_strided_slice %752 {offsets = [0, 32], sizes = [2, 32], strides = [1, 1]} : vector<2x128xf32> to vector<2x32xf32>
    %760 = arith.negf %759 : vector<2x32xf32>
    %761 = math.exp %760 : vector<2x32xf32>
    %cst_190 = arith.constant 1.000000e+00 : f32
    %762 = vector.broadcast %cst_190 : f32 to vector<2x32xf32>
    %763 = arith.addf %762, %761 : vector<2x32xf32>
    %764 = arith.divf %762, %763 : vector<2x32xf32>
    %765 = vector.extract_strided_slice %752 {offsets = [0, 64], sizes = [2, 32], strides = [1, 1]} : vector<2x128xf32> to vector<2x32xf32>
    %766 = math.tanh %765 : vector<2x32xf32>
    %767 = vector.extract_strided_slice %752 {offsets = [0, 96], sizes = [2, 32], strides = [1, 1]} : vector<2x128xf32> to vector<2x32xf32>
    %768 = arith.negf %767 : vector<2x32xf32>
    %769 = math.exp %768 : vector<2x32xf32>
    %cst_191 = arith.constant 1.000000e+00 : f32
    %770 = vector.broadcast %cst_191 : f32 to vector<2x32xf32>
    %771 = arith.addf %770, %769 : vector<2x32xf32>
    %772 = arith.divf %770, %771 : vector<2x32xf32>
    %773 = arith.mulf %764, %714 : vector<2x32xf32>
    %774 = arith.mulf %758, %766 : vector<2x32xf32>
    %775 = arith.addf %773, %774 : vector<2x32xf32>
    %776 = math.tanh %775 : vector<2x32xf32>
    %777 = arith.mulf %772, %776 : vector<2x32xf32>
    %cst_192 = arith.constant dense<0.000000e+00> : vector<2x128xf32>
    %778 = tpu.matmul %777, %17, %cst_192 {dimension_numbers = #tpu.dot_dimension_numbers<[1], [0], [0], [1], [0, 0, 1, 1], [], []>} : vector<2x32xf32>, vector<32x128xf32>, vector<2x128xf32> -> vector<2x128xf32>
    %cst_193 = arith.constant dense<0.000000e+00> : vector<2x128xf32>
    %779 = tpu.matmul %745, %18, %cst_193 {dimension_numbers = #tpu.dot_dimension_numbers<[1], [0], [0], [1], [0, 0, 1, 1], [], []>} : vector<2x32xf32>, vector<32x128xf32>, vector<2x128xf32> -> vector<2x128xf32>
    %780 = arith.addf %778, %779 : vector<2x128xf32>
    %781 = arith.addf %780, %21 : vector<2x128xf32>
    %782 = vector.extract_strided_slice %781 {offsets = [0, 0], sizes = [2, 32], strides = [1, 1]} : vector<2x128xf32> to vector<2x32xf32>
    %783 = arith.negf %782 : vector<2x32xf32>
    %784 = math.exp %783 : vector<2x32xf32>
    %cst_194 = arith.constant 1.000000e+00 : f32
    %785 = vector.broadcast %cst_194 : f32 to vector<2x32xf32>
    %786 = arith.addf %785, %784 : vector<2x32xf32>
    %787 = arith.divf %785, %786 : vector<2x32xf32>
    %788 = vector.extract_strided_slice %781 {offsets = [0, 32], sizes = [2, 32], strides = [1, 1]} : vector<2x128xf32> to vector<2x32xf32>
    %789 = arith.negf %788 : vector<2x32xf32>
    %790 = math.exp %789 : vector<2x32xf32>
    %cst_195 = arith.constant 1.000000e+00 : f32
    %791 = vector.broadcast %cst_195 : f32 to vector<2x32xf32>
    %792 = arith.addf %791, %790 : vector<2x32xf32>
    %793 = arith.divf %791, %792 : vector<2x32xf32>
    %794 = vector.extract_strided_slice %781 {offsets = [0, 64], sizes = [2, 32], strides = [1, 1]} : vector<2x128xf32> to vector<2x32xf32>
    %795 = math.tanh %794 : vector<2x32xf32>
    %796 = vector.extract_strided_slice %781 {offsets = [0, 96], sizes = [2, 32], strides = [1, 1]} : vector<2x128xf32> to vector<2x32xf32>
    %797 = arith.negf %796 : vector<2x32xf32>
    %798 = math.exp %797 : vector<2x32xf32>
    %cst_196 = arith.constant 1.000000e+00 : f32
    %799 = vector.broadcast %cst_196 : f32 to vector<2x32xf32>
    %800 = arith.addf %799, %798 : vector<2x32xf32>
    %801 = arith.divf %799, %800 : vector<2x32xf32>
    %802 = arith.mulf %793, %743 : vector<2x32xf32>
    %803 = arith.mulf %787, %795 : vector<2x32xf32>
    %804 = arith.addf %802, %803 : vector<2x32xf32>
    %805 = math.tanh %804 : vector<2x32xf32>
    %806 = arith.mulf %801, %805 : vector<2x32xf32>
    %c8 = arith.constant 8 : index
    %c0_197 = arith.constant 0 : index
    %807 = vector.load %arg17[%c8, %c0_197] : memref<16x32xf32, #tpu.memory_space<vmem>>, vector<2x32xf32>
    tpu.vector_store %arg17[%c8, %c0_197], %806 {strides = array<i32>} : memref<16x32xf32, #tpu.memory_space<vmem>>, vector<2x32xf32>,
    %c5_198 = arith.constant 5 : index
    %c0_199 = arith.constant 0 : index
    %c0_200 = arith.constant 0 : index
    %808 = vector.load %arg1[%c5_198, %c0_199, %c0_200] : memref<8x2x16xf32, #tpu.memory_space<vmem>>, vector<1x2x16xf32>
    %809 = vector.shape_cast %808 : vector<1x2x16xf32> to vector<2x16xf32>
    %cst_201 = arith.constant dense<0.000000e+00> : vector<2x128xf32>
    %810 = tpu.matmul %809, %12, %cst_201 {dimension_numbers = #tpu.dot_dimension_numbers<[1], [0], [0], [1], [0, 0, 1, 1], [], []>} : vector<2x16xf32>, vector<16x128xf32>, vector<2x128xf32> -> vector<2x128xf32>
    %cst_202 = arith.constant dense<0.000000e+00> : vector<2x128xf32>
    %811 = tpu.matmul %777, %13, %cst_202 {dimension_numbers = #tpu.dot_dimension_numbers<[1], [0], [0], [1], [0, 0, 1, 1], [], []>} : vector<2x32xf32>, vector<32x128xf32>, vector<2x128xf32> -> vector<2x128xf32>
    %812 = arith.addf %810, %811 : vector<2x128xf32>
    %813 = arith.addf %812, %16 : vector<2x128xf32>
    %814 = vector.extract_strided_slice %813 {offsets = [0, 0], sizes = [2, 32], strides = [1, 1]} : vector<2x128xf32> to vector<2x32xf32>
    %815 = arith.negf %814 : vector<2x32xf32>
    %816 = math.exp %815 : vector<2x32xf32>
    %cst_203 = arith.constant 1.000000e+00 : f32
    %817 = vector.broadcast %cst_203 : f32 to vector<2x32xf32>
    %818 = arith.addf %817, %816 : vector<2x32xf32>
    %819 = arith.divf %817, %818 : vector<2x32xf32>
    %820 = vector.extract_strided_slice %813 {offsets = [0, 32], sizes = [2, 32], strides = [1, 1]} : vector<2x128xf32> to vector<2x32xf32>
    %821 = arith.negf %820 : vector<2x32xf32>
    %822 = math.exp %821 : vector<2x32xf32>
    %cst_204 = arith.constant 1.000000e+00 : f32
    %823 = vector.broadcast %cst_204 : f32 to vector<2x32xf32>
    %824 = arith.addf %823, %822 : vector<2x32xf32>
    %825 = arith.divf %823, %824 : vector<2x32xf32>
    %826 = vector.extract_strided_slice %813 {offsets = [0, 64], sizes = [2, 32], strides = [1, 1]} : vector<2x128xf32> to vector<2x32xf32>
    %827 = math.tanh %826 : vector<2x32xf32>
    %828 = vector.extract_strided_slice %813 {offsets = [0, 96], sizes = [2, 32], strides = [1, 1]} : vector<2x128xf32> to vector<2x32xf32>
    %829 = arith.negf %828 : vector<2x32xf32>
    %830 = math.exp %829 : vector<2x32xf32>
    %cst_205 = arith.constant 1.000000e+00 : f32
    %831 = vector.broadcast %cst_205 : f32 to vector<2x32xf32>
    %832 = arith.addf %831, %830 : vector<2x32xf32>
    %833 = arith.divf %831, %832 : vector<2x32xf32>
    %834 = arith.mulf %825, %775 : vector<2x32xf32>
    %835 = arith.mulf %819, %827 : vector<2x32xf32>
    %836 = arith.addf %834, %835 : vector<2x32xf32>
    %837 = math.tanh %836 : vector<2x32xf32>
    %838 = arith.mulf %833, %837 : vector<2x32xf32>
    %cst_206 = arith.constant dense<0.000000e+00> : vector<2x128xf32>
    %839 = tpu.matmul %838, %17, %cst_206 {dimension_numbers = #tpu.dot_dimension_numbers<[1], [0], [0], [1], [0, 0, 1, 1], [], []>} : vector<2x32xf32>, vector<32x128xf32>, vector<2x128xf32> -> vector<2x128xf32>
    %cst_207 = arith.constant dense<0.000000e+00> : vector<2x128xf32>
    %840 = tpu.matmul %806, %18, %cst_207 {dimension_numbers = #tpu.dot_dimension_numbers<[1], [0], [0], [1], [0, 0, 1, 1], [], []>} : vector<2x32xf32>, vector<32x128xf32>, vector<2x128xf32> -> vector<2x128xf32>
    %841 = arith.addf %839, %840 : vector<2x128xf32>
    %842 = arith.addf %841, %21 : vector<2x128xf32>
    %843 = vector.extract_strided_slice %842 {offsets = [0, 0], sizes = [2, 32], strides = [1, 1]} : vector<2x128xf32> to vector<2x32xf32>
    %844 = arith.negf %843 : vector<2x32xf32>
    %845 = math.exp %844 : vector<2x32xf32>
    %cst_208 = arith.constant 1.000000e+00 : f32
    %846 = vector.broadcast %cst_208 : f32 to vector<2x32xf32>
    %847 = arith.addf %846, %845 : vector<2x32xf32>
    %848 = arith.divf %846, %847 : vector<2x32xf32>
    %849 = vector.extract_strided_slice %842 {offsets = [0, 32], sizes = [2, 32], strides = [1, 1]} : vector<2x128xf32> to vector<2x32xf32>
    %850 = arith.negf %849 : vector<2x32xf32>
    %851 = math.exp %850 : vector<2x32xf32>
    %cst_209 = arith.constant 1.000000e+00 : f32
    %852 = vector.broadcast %cst_209 : f32 to vector<2x32xf32>
    %853 = arith.addf %852, %851 : vector<2x32xf32>
    %854 = arith.divf %852, %853 : vector<2x32xf32>
    %855 = vector.extract_strided_slice %842 {offsets = [0, 64], sizes = [2, 32], strides = [1, 1]} : vector<2x128xf32> to vector<2x32xf32>
    %856 = math.tanh %855 : vector<2x32xf32>
    %857 = vector.extract_strided_slice %842 {offsets = [0, 96], sizes = [2, 32], strides = [1, 1]} : vector<2x128xf32> to vector<2x32xf32>
    %858 = arith.negf %857 : vector<2x32xf32>
    %859 = math.exp %858 : vector<2x32xf32>
    %cst_210 = arith.constant 1.000000e+00 : f32
    %860 = vector.broadcast %cst_210 : f32 to vector<2x32xf32>
    %861 = arith.addf %860, %859 : vector<2x32xf32>
    %862 = arith.divf %860, %861 : vector<2x32xf32>
    %863 = arith.mulf %854, %804 : vector<2x32xf32>
    %864 = arith.mulf %848, %856 : vector<2x32xf32>
    %865 = arith.addf %863, %864 : vector<2x32xf32>
    %866 = math.tanh %865 : vector<2x32xf32>
    %867 = arith.mulf %862, %866 : vector<2x32xf32>
    %c10 = arith.constant 10 : index
    %c0_211 = arith.constant 0 : index
    %868 = vector.load %arg17[%c10, %c0_211] : memref<16x32xf32, #tpu.memory_space<vmem>>, vector<2x32xf32>
    tpu.vector_store %arg17[%c10, %c0_211], %867 {strides = array<i32>} : memref<16x32xf32, #tpu.memory_space<vmem>>, vector<2x32xf32>,
    %c6_212 = arith.constant 6 : index
    %c0_213 = arith.constant 0 : index
    %c0_214 = arith.constant 0 : index
    %869 = vector.load %arg1[%c6_212, %c0_213, %c0_214] : memref<8x2x16xf32, #tpu.memory_space<vmem>>, vector<1x2x16xf32>
    %870 = vector.shape_cast %869 : vector<1x2x16xf32> to vector<2x16xf32>
    %cst_215 = arith.constant dense<0.000000e+00> : vector<2x128xf32>
    %871 = tpu.matmul %870, %12, %cst_215 {dimension_numbers = #tpu.dot_dimension_numbers<[1], [0], [0], [1], [0, 0, 1, 1], [], []>} : vector<2x16xf32>, vector<16x128xf32>, vector<2x128xf32> -> vector<2x128xf32>
    %cst_216 = arith.constant dense<0.000000e+00> : vector<2x128xf32>
    %872 = tpu.matmul %838, %13, %cst_216 {dimension_numbers = #tpu.dot_dimension_numbers<[1], [0], [0], [1], [0, 0, 1, 1], [], []>} : vector<2x32xf32>, vector<32x128xf32>, vector<2x128xf32> -> vector<2x128xf32>
    %873 = arith.addf %871, %872 : vector<2x128xf32>
    %874 = arith.addf %873, %16 : vector<2x128xf32>
    %875 = vector.extract_strided_slice %874 {offsets = [0, 0], sizes = [2, 32], strides = [1, 1]} : vector<2x128xf32> to vector<2x32xf32>
    %876 = arith.negf %875 : vector<2x32xf32>
    %877 = math.exp %876 : vector<2x32xf32>
    %cst_217 = arith.constant 1.000000e+00 : f32
    %878 = vector.broadcast %cst_217 : f32 to vector<2x32xf32>
    %879 = arith.addf %878, %877 : vector<2x32xf32>
    %880 = arith.divf %878, %879 : vector<2x32xf32>
    %881 = vector.extract_strided_slice %874 {offsets = [0, 32], sizes = [2, 32], strides = [1, 1]} : vector<2x128xf32> to vector<2x32xf32>
    %882 = arith.negf %881 : vector<2x32xf32>
    %883 = math.exp %882 : vector<2x32xf32>
    %cst_218 = arith.constant 1.000000e+00 : f32
    %884 = vector.broadcast %cst_218 : f32 to vector<2x32xf32>
    %885 = arith.addf %884, %883 : vector<2x32xf32>
    %886 = arith.divf %884, %885 : vector<2x32xf32>
    %887 = vector.extract_strided_slice %874 {offsets = [0, 64], sizes = [2, 32], strides = [1, 1]} : vector<2x128xf32> to vector<2x32xf32>
    %888 = math.tanh %887 : vector<2x32xf32>
    %889 = vector.extract_strided_slice %874 {offsets = [0, 96], sizes = [2, 32], strides = [1, 1]} : vector<2x128xf32> to vector<2x32xf32>
    %890 = arith.negf %889 : vector<2x32xf32>
    %891 = math.exp %890 : vector<2x32xf32>
    %cst_219 = arith.constant 1.000000e+00 : f32
    %892 = vector.broadcast %cst_219 : f32 to vector<2x32xf32>
    %893 = arith.addf %892, %891 : vector<2x32xf32>
    %894 = arith.divf %892, %893 : vector<2x32xf32>
    %895 = arith.mulf %886, %836 : vector<2x32xf32>
    %896 = arith.mulf %880, %888 : vector<2x32xf32>
    %897 = arith.addf %895, %896 : vector<2x32xf32>
    %898 = math.tanh %897 : vector<2x32xf32>
    %899 = arith.mulf %894, %898 : vector<2x32xf32>
    %cst_220 = arith.constant dense<0.000000e+00> : vector<2x128xf32>
    %900 = tpu.matmul %899, %17, %cst_220 {dimension_numbers = #tpu.dot_dimension_numbers<[1], [0], [0], [1], [0, 0, 1, 1], [], []>} : vector<2x32xf32>, vector<32x128xf32>, vector<2x128xf32> -> vector<2x128xf32>
    %cst_221 = arith.constant dense<0.000000e+00> : vector<2x128xf32>
    %901 = tpu.matmul %867, %18, %cst_221 {dimension_numbers = #tpu.dot_dimension_numbers<[1], [0], [0], [1], [0, 0, 1, 1], [], []>} : vector<2x32xf32>, vector<32x128xf32>, vector<2x128xf32> -> vector<2x128xf32>
    %902 = arith.addf %900, %901 : vector<2x128xf32>
    %903 = arith.addf %902, %21 : vector<2x128xf32>
    %904 = vector.extract_strided_slice %903 {offsets = [0, 0], sizes = [2, 32], strides = [1, 1]} : vector<2x128xf32> to vector<2x32xf32>
    %905 = arith.negf %904 : vector<2x32xf32>
    %906 = math.exp %905 : vector<2x32xf32>
    %cst_222 = arith.constant 1.000000e+00 : f32
    %907 = vector.broadcast %cst_222 : f32 to vector<2x32xf32>
    %908 = arith.addf %907, %906 : vector<2x32xf32>
    %909 = arith.divf %907, %908 : vector<2x32xf32>
    %910 = vector.extract_strided_slice %903 {offsets = [0, 32], sizes = [2, 32], strides = [1, 1]} : vector<2x128xf32> to vector<2x32xf32>
    %911 = arith.negf %910 : vector<2x32xf32>
    %912 = math.exp %911 : vector<2x32xf32>
    %cst_223 = arith.constant 1.000000e+00 : f32
    %913 = vector.broadcast %cst_223 : f32 to vector<2x32xf32>
    %914 = arith.addf %913, %912 : vector<2x32xf32>
    %915 = arith.divf %913, %914 : vector<2x32xf32>
    %916 = vector.extract_strided_slice %903 {offsets = [0, 64], sizes = [2, 32], strides = [1, 1]} : vector<2x128xf32> to vector<2x32xf32>
    %917 = math.tanh %916 : vector<2x32xf32>
    %918 = vector.extract_strided_slice %903 {offsets = [0, 96], sizes = [2, 32], strides = [1, 1]} : vector<2x128xf32> to vector<2x32xf32>
    %919 = arith.negf %918 : vector<2x32xf32>
    %920 = math.exp %919 : vector<2x32xf32>
    %cst_224 = arith.constant 1.000000e+00 : f32
    %921 = vector.broadcast %cst_224 : f32 to vector<2x32xf32>
    %922 = arith.addf %921, %920 : vector<2x32xf32>
    %923 = arith.divf %921, %922 : vector<2x32xf32>
    %924 = arith.mulf %915, %865 : vector<2x32xf32>
    %925 = arith.mulf %909, %917 : vector<2x32xf32>
    %926 = arith.addf %924, %925 : vector<2x32xf32>
    %927 = math.tanh %926 : vector<2x32xf32>
    %928 = arith.mulf %923, %927 : vector<2x32xf32>
    %c12 = arith.constant 12 : index
    %c0_225 = arith.constant 0 : index
    %929 = vector.load %arg17[%c12, %c0_225] : memref<16x32xf32, #tpu.memory_space<vmem>>, vector<2x32xf32>
    tpu.vector_store %arg17[%c12, %c0_225], %928 {strides = array<i32>} : memref<16x32xf32, #tpu.memory_space<vmem>>, vector<2x32xf32>,
    %c7_226 = arith.constant 7 : index
    %c0_227 = arith.constant 0 : index
    %c0_228 = arith.constant 0 : index
    %930 = vector.load %arg1[%c7_226, %c0_227, %c0_228] : memref<8x2x16xf32, #tpu.memory_space<vmem>>, vector<1x2x16xf32>
    %931 = vector.shape_cast %930 : vector<1x2x16xf32> to vector<2x16xf32>
    %cst_229 = arith.constant dense<0.000000e+00> : vector<2x128xf32>
    %932 = tpu.matmul %931, %12, %cst_229 {dimension_numbers = #tpu.dot_dimension_numbers<[1], [0], [0], [1], [0, 0, 1, 1], [], []>} : vector<2x16xf32>, vector<16x128xf32>, vector<2x128xf32> -> vector<2x128xf32>
    %cst_230 = arith.constant dense<0.000000e+00> : vector<2x128xf32>
    %933 = tpu.matmul %899, %13, %cst_230 {dimension_numbers = #tpu.dot_dimension_numbers<[1], [0], [0], [1], [0, 0, 1, 1], [], []>} : vector<2x32xf32>, vector<32x128xf32>, vector<2x128xf32> -> vector<2x128xf32>
    %934 = arith.addf %932, %933 : vector<2x128xf32>
    %935 = arith.addf %934, %16 : vector<2x128xf32>
    %936 = vector.extract_strided_slice %935 {offsets = [0, 0], sizes = [2, 32], strides = [1, 1]} : vector<2x128xf32> to vector<2x32xf32>
    %937 = arith.negf %936 : vector<2x32xf32>
    %938 = math.exp %937 : vector<2x32xf32>
    %cst_231 = arith.constant 1.000000e+00 : f32
    %939 = vector.broadcast %cst_231 : f32 to vector<2x32xf32>
    %940 = arith.addf %939, %938 : vector<2x32xf32>
    %941 = arith.divf %939, %940 : vector<2x32xf32>
    %942 = vector.extract_strided_slice %935 {offsets = [0, 32], sizes = [2, 32], strides = [1, 1]} : vector<2x128xf32> to vector<2x32xf32>
    %943 = arith.negf %942 : vector<2x32xf32>
    %944 = math.exp %943 : vector<2x32xf32>
    %cst_232 = arith.constant 1.000000e+00 : f32
    %945 = vector.broadcast %cst_232 : f32 to vector<2x32xf32>
    %946 = arith.addf %945, %944 : vector<2x32xf32>
    %947 = arith.divf %945, %946 : vector<2x32xf32>
    %948 = vector.extract_strided_slice %935 {offsets = [0, 64], sizes = [2, 32], strides = [1, 1]} : vector<2x128xf32> to vector<2x32xf32>
    %949 = math.tanh %948 : vector<2x32xf32>
    %950 = vector.extract_strided_slice %935 {offsets = [0, 96], sizes = [2, 32], strides = [1, 1]} : vector<2x128xf32> to vector<2x32xf32>
    %951 = arith.negf %950 : vector<2x32xf32>
    %952 = math.exp %951 : vector<2x32xf32>
    %cst_233 = arith.constant 1.000000e+00 : f32
    %953 = vector.broadcast %cst_233 : f32 to vector<2x32xf32>
    %954 = arith.addf %953, %952 : vector<2x32xf32>
    %955 = arith.divf %953, %954 : vector<2x32xf32>
    %956 = arith.mulf %947, %897 : vector<2x32xf32>
    %957 = arith.mulf %941, %949 : vector<2x32xf32>
    %958 = arith.addf %956, %957 : vector<2x32xf32>
    %959 = math.tanh %958 : vector<2x32xf32>
    %960 = arith.mulf %955, %959 : vector<2x32xf32>
    %cst_234 = arith.constant dense<0.000000e+00> : vector<2x128xf32>
    %961 = tpu.matmul %960, %17, %cst_234 {dimension_numbers = #tpu.dot_dimension_numbers<[1], [0], [0], [1], [0, 0, 1, 1], [], []>} : vector<2x32xf32>, vector<32x128xf32>, vector<2x128xf32> -> vector<2x128xf32>
    %cst_235 = arith.constant dense<0.000000e+00> : vector<2x128xf32>
    %962 = tpu.matmul %928, %18, %cst_235 {dimension_numbers = #tpu.dot_dimension_numbers<[1], [0], [0], [1], [0, 0, 1, 1], [], []>} : vector<2x32xf32>, vector<32x128xf32>, vector<2x128xf32> -> vector<2x128xf32>
    %963 = arith.addf %961, %962 : vector<2x128xf32>
    %964 = arith.addf %963, %21 : vector<2x128xf32>
    %965 = vector.extract_strided_slice %964 {offsets = [0, 0], sizes = [2, 32], strides = [1, 1]} : vector<2x128xf32> to vector<2x32xf32>
    %966 = arith.negf %965 : vector<2x32xf32>
    %967 = math.exp %966 : vector<2x32xf32>
    %cst_236 = arith.constant 1.000000e+00 : f32
    %968 = vector.broadcast %cst_236 : f32 to vector<2x32xf32>
    %969 = arith.addf %968, %967 : vector<2x32xf32>
    %970 = arith.divf %968, %969 : vector<2x32xf32>
    %971 = vector.extract_strided_slice %964 {offsets = [0, 32], sizes = [2, 32], strides = [1, 1]} : vector<2x128xf32> to vector<2x32xf32>
    %972 = arith.negf %971 : vector<2x32xf32>
    %973 = math.exp %972 : vector<2x32xf32>
    %cst_237 = arith.constant 1.000000e+00 : f32
    %974 = vector.broadcast %cst_237 : f32 to vector<2x32xf32>
    %975 = arith.addf %974, %973 : vector<2x32xf32>
    %976 = arith.divf %974, %975 : vector<2x32xf32>
    %977 = vector.extract_strided_slice %964 {offsets = [0, 64], sizes = [2, 32], strides = [1, 1]} : vector<2x128xf32> to vector<2x32xf32>
    %978 = math.tanh %977 : vector<2x32xf32>
    %979 = vector.extract_strided_slice %964 {offsets = [0, 96], sizes = [2, 32], strides = [1, 1]} : vector<2x128xf32> to vector<2x32xf32>
    %980 = arith.negf %979 : vector<2x32xf32>
    %981 = math.exp %980 : vector<2x32xf32>
    %cst_238 = arith.constant 1.000000e+00 : f32
    %982 = vector.broadcast %cst_238 : f32 to vector<2x32xf32>
    %983 = arith.addf %982, %981 : vector<2x32xf32>
    %984 = arith.divf %982, %983 : vector<2x32xf32>
    %985 = arith.mulf %976, %926 : vector<2x32xf32>
    %986 = arith.mulf %970, %978 : vector<2x32xf32>
    %987 = arith.addf %985, %986 : vector<2x32xf32>
    %988 = math.tanh %987 : vector<2x32xf32>
    %989 = arith.mulf %984, %988 : vector<2x32xf32>
    %c14 = arith.constant 14 : index
    %c0_239 = arith.constant 0 : index
    %990 = vector.load %arg17[%c14, %c0_239] : memref<16x32xf32, #tpu.memory_space<vmem>>, vector<2x32xf32>
    tpu.vector_store %arg17[%c14, %c0_239], %989 {strides = array<i32>} : memref<16x32xf32, #tpu.memory_space<vmem>>, vector<2x32xf32>,
    %c0_240 = arith.constant 0 : index
    %c0_241 = arith.constant 0 : index
    %991 = vector.load %arg17[%c0_240, %c0_241] : memref<16x32xf32, #tpu.memory_space<vmem>>, vector<16x32xf32>
    %cst_242 = arith.constant dense<0.000000e+00> : vector<16x4xf32>
    %992 = tpu.matmul %991, %0, %cst_242 {dimension_numbers = #tpu.dot_dimension_numbers<[1], [0], [0], [1], [0, 0, 1, 1], [], []>} : vector<16x32xf32>, vector<32x4xf32>, vector<16x4xf32> -> vector<16x4xf32>
    %993 = vector.broadcast %1 : vector<1x4xf32> to vector<16x4xf32>
    %994 = arith.addf %992, %993 : vector<16x4xf32>
    %c0_243 = arith.constant 0 : index
    %c0_244 = arith.constant 0 : index
    %995 = vector.load %arg16[%c0_243, %c0_244] : memref<16x4xf32, #tpu.memory_space<vmem>>, vector<16x4xf32>
    tpu.vector_store %arg16[%c0_243, %c0_244], %994 {strides = array<i32>} : memref<16x4xf32, #tpu.memory_space<vmem>>, vector<16x4xf32>,
    return
  }
}

</mosaic_0001>

<llo_original>
// kernel: lstm_model_forward_impl.1
$region0: #{lstm_model_forward_impl.1}
  #allocation0 [shape = 'u32[]', space=smem, size = 0x4, offset = 0x4, fixed_abs, tag = 'smem constant byte address 0x4 - core index']
  #allocation1 [shape = 'u32[72,128]{1,0:T(1,128)}', space=vmem, size = 0x9000, scoped, tag = 'internal scratch']
  #allocation2 [shape = 'f32[16,32]{1,0:T(8,128)}', space=vmem, size = 0x2000, scoped, tag = 'scratch operand']
  %s0 = inlined_call_operand.vmem [shape: f32[8,2,16], index: 0, kind: input, shape index: {}]
  %s1 = inlined_call_operand.vmem [shape: f32[8,2,16], index: 1, kind: input, shape index: {}]
  %s2 = inlined_call_operand.vmem [shape: f32[16,128], index: 2, kind: input, shape index: {}]
  %s3 = inlined_call_operand.vmem [shape: f32[32,128], index: 3, kind: input, shape index: {}]
  %s4 = inlined_call_operand.vmem [shape: f32[1,128], index: 4, kind: input, shape index: {}]
  %s5 = inlined_call_operand.vmem [shape: f32[32,128], index: 5, kind: input, shape index: {}]
  %s6 = inlined_call_operand.hbm [shape: f32[32,128], index: 6, kind: input, shape index: {}]
  %s7 = inlined_call_operand.vmem [shape: f32[1,128], index: 7, kind: input, shape index: {}]
  %s8 = inlined_call_operand.hbm [shape: f32[16,128], index: 8, kind: input, shape index: {}]
  %s9 = inlined_call_operand.hbm [shape: f32[32,128], index: 9, kind: input, shape index: {}]
  %s10 = inlined_call_operand.vmem [shape: f32[1,128], index: 10, kind: input, shape index: {}]
  %s11 = inlined_call_operand.hbm [shape: f32[32,128], index: 11, kind: input, shape index: {}]
  %s12 = inlined_call_operand.hbm [shape: f32[32,128], index: 12, kind: input, shape index: {}]
  %s13 = inlined_call_operand.vmem [shape: f32[1,128], index: 13, kind: input, shape index: {}]
  %s14 = inlined_call_operand.vmem [shape: f32[32,4], index: 14, kind: input, shape index: {}]
  %s15 = inlined_call_operand.vmem [shape: f32[1,4], index: 15, kind: input, shape index: {}]
  %s16 = inlined_call_operand.vmem [shape: f32[16,4], index: 16, kind: output, shape index: {}]
  %s17 = sld [smem:[#allocation0]]
  $region94: #{lstm_model_forward_impl.1} parent=0
    _
  %s19 = ssub.s32 1, %s17
  %s20 = scalar_select 0, %s19, %s17
  $region1: #{lstm_model_forward_impl.1} parent=0
    #allocation3 [shape = 'u8[16384]{0}', space=vmem, size = 0x4000, scoped, tag = 'input window, operand 6, single buffered']
    #allocation4 [shape = 's32[1]{0}', space=sflag, size = 0x4, scoped, tag = 'scoped memory for lstm_model_forward_impl.1']
    #allocation5 [shape = 'u8[8192]{0}', space=vmem, size = 0x2000, scoped, tag = 'input window, operand 8, single buffered']
    #allocation6 [shape = 's32[1]{0}', space=sflag, size = 0x4, scoped, tag = 'scoped memory for lstm_model_forward_impl.1']
    #allocation7 [shape = 'u8[16384]{0}', space=vmem, size = 0x4000, scoped, tag = 'input window, operand 9, single buffered']
    #allocation8 [shape = 'u8[16384]{0}', space=vmem, size = 0x4000, scoped, tag = 'input window, operand 11, single buffered']
    #allocation9 [shape = 's32[1]{0}', space=sflag, size = 0x4, scoped, tag = 'scoped memory for lstm_model_forward_impl.1']
    #allocation10 [shape = 'u8[16384]{0}', space=vmem, size = 0x4000, scoped, tag = 'input window, operand 12, single buffered']
    %21 = vsyncpa [#allocation4], 0
    %22 = vsyncpa [#allocation6], 0
    %23 = vsyncpa [#allocation9], 0
    // Predicated region
    $region2: #{lstm_model_forward_impl.1} parent=1 // pred_check
      _
    $region3: #{lstm_model_forward_impl.1} parent=1 // pred_check_branch
      %25 = sbr.rel (0) target = $region5
    $region4: #{lstm_model_forward_impl.1} parent=1 // pred_region
      _
    $region5: #{lstm_model_forward_impl.1} parent=1 // pred_fallthru
      _
    // Predicated region
    $region6: #{lstm_model_forward_impl.1} parent=1 // pred_check
      _
    $region7: #{lstm_model_forward_impl.1} parent=1 // pred_check_branch
      %27 = sbr.rel (0) target = $region9
    $region8: #{lstm_model_forward_impl.1} parent=1 // pred_region
      _
    $region9: #{lstm_model_forward_impl.1} parent=1 // pred_fallthru
      _
    // Predicated region
    $region10: #{lstm_model_forward_impl.1} parent=1 // pred_check
      _
    $region11: #{lstm_model_forward_impl.1} parent=1 // pred_check_branch
      %29 = sbr.rel (0) target = $region13
    $region12: #{lstm_model_forward_impl.1} parent=1 // pred_region
      _
    $region13: #{lstm_model_forward_impl.1} parent=1 // pred_fallthru
      _
    // Predicated region
    $region14: #{lstm_model_forward_impl.1} parent=1 // pred_check
      _
    $region15: #{lstm_model_forward_impl.1} parent=1 // pred_check_branch
      %31 = sbr.rel (0) target = $region17
    $region16: #{lstm_model_forward_impl.1} parent=1 // pred_region
      _
    $region17: #{lstm_model_forward_impl.1} parent=1 // pred_fallthru
      _
    // Predicated region
    $region18: #{lstm_model_forward_impl.1} parent=1 // pred_check
      _
    $region19: #{lstm_model_forward_impl.1} parent=1 // pred_check_branch
      %33 = sbr.rel (0) target = $region21
    $region20: #{lstm_model_forward_impl.1} parent=1 // pred_region
      _
    $region21: #{lstm_model_forward_impl.1} parent=1 // pred_fallthru
      _
    // Predicated region
    $region22: #{lstm_model_forward_impl.1} parent=1 // pred_check
      _
    $region23: #{lstm_model_forward_impl.1} parent=1 // pred_check_branch
      %35 = sbr.rel (0) target = $region25
    $region24: #{lstm_model_forward_impl.1} parent=1 // pred_region
      _
    $region25: #{lstm_model_forward_impl.1} parent=1 // pred_fallthru
      _
    // Predicated region
    $region26: #{lstm_model_forward_impl.1} parent=1 // pred_check
      _
    $region27: #{lstm_model_forward_impl.1} parent=1 // pred_check_branch
      %37 = sbr.rel (0) target = $region29
    $region28: #{lstm_model_forward_impl.1} parent=1 // pred_region
      %39 = vsyncadd [#allocation4], 0
      %s40 = sshll.u32 %s6, 4
      %s41 = int_to_ptr.hbm [resolvable:$true] %s40
      %s42 = sshll.u32 [#allocation3], 4
      %s43 = int_to_ptr.vmem [resolvable:$true] %s42
      %48 = dma.hbm_to_vmem [thread:$0]  %s41, 512, %s43, [#allocation4], 128, 128, 8
    $region29: #{lstm_model_forward_impl.1} parent=1 // pred_fallthru
      _
    // Predicated region
    $region30: #{lstm_model_forward_impl.1} parent=1 // pred_check
      _
    $region31: #{lstm_model_forward_impl.1} parent=1 // pred_check_branch
      %50 = sbr.rel (0) target = $region33
    $region32: #{lstm_model_forward_impl.1} parent=1 // pred_region
      _
    $region33: #{lstm_model_forward_impl.1} parent=1 // pred_fallthru
      _
    // Predicated region
    $region34: #{lstm_model_forward_impl.1} parent=1 // pred_check
      _
    $region35: #{lstm_model_forward_impl.1} parent=1 // pred_check_branch
      %52 = sbr.rel (0) target = $region37
    $region36: #{lstm_model_forward_impl.1} parent=1 // pred_region
      %54 = vsyncadd [#allocation6], 0
      %s55 = sshll.u32 %s8, 4
      %s56 = int_to_ptr.hbm [resolvable:$true] %s55
      %s57 = sshll.u32 [#allocation5], 4
      %s58 = int_to_ptr.vmem [resolvable:$true] %s57
      %63 = dma.hbm_to_vmem [thread:$0]  %s56, 256, %s58, [#allocation6], 128, 128, 8
    $region37: #{lstm_model_forward_impl.1} parent=1 // pred_fallthru
      _
    // Predicated region
    $region38: #{lstm_model_forward_impl.1} parent=1 // pred_check
      _
    $region39: #{lstm_model_forward_impl.1} parent=1 // pred_check_branch
      %65 = sbr.rel (0) target = $region41
    $region40: #{lstm_model_forward_impl.1} parent=1 // pred_region
      %67 = vsyncadd [#allocation6], 0
      %s68 = sshll.u32 %s9, 4
      %s69 = int_to_ptr.hbm [resolvable:$true] %s68
      %s70 = sshll.u32 [#allocation7], 4
      %s71 = int_to_ptr.vmem [resolvable:$true] %s70
      %76 = dma.hbm_to_vmem [thread:$0]  %s69, 512, %s71, [#allocation6], 128, 128, 8
    $region41: #{lstm_model_forward_impl.1} parent=1 // pred_fallthru
      _
    // Predicated region
    $region42: #{lstm_model_forward_impl.1} parent=1 // pred_check
      _
    $region43: #{lstm_model_forward_impl.1} parent=1 // pred_check_branch
      %78 = sbr.rel (0) target = $region45
    $region44: #{lstm_model_forward_impl.1} parent=1 // pred_region
      _
    $region45: #{lstm_model_forward_impl.1} parent=1 // pred_fallthru
      _
    // Predicated region
    $region46: #{lstm_model_forward_impl.1} parent=1 // pred_check
      _
    $region47: #{lstm_model_forward_impl.1} parent=1 // pred_check_branch
      %80 = sbr.rel (0) target = $region49
    $region48: #{lstm_model_forward_impl.1} parent=1 // pred_region
      %82 = vsyncadd [#allocation9], 0
      %s83 = sshll.u32 %s11, 4
      %s84 = int_to_ptr.hbm [resolvable:$true] %s83
      %s85 = sshll.u32 [#allocation8], 4
      %s86 = int_to_ptr.vmem [resolvable:$true] %s85
      %91 = dma.hbm_to_vmem [thread:$0]  %s84, 512, %s86, [#allocation9], 128, 128, 8
    $region49: #{lstm_model_forward_impl.1} parent=1 // pred_fallthru
      _
    // Predicated region
    $region50: #{lstm_model_forward_impl.1} parent=1 // pred_check
      _
    $region51: #{lstm_model_forward_impl.1} parent=1 // pred_check_branch
      %93 = sbr.rel (0) target = $region53
    $region52: #{lstm_model_forward_impl.1} parent=1 // pred_region
      %95 = vsyncadd [#allocation9], 0
      %s96 = sshll.u32 %s12, 4
      %s97 = int_to_ptr.hbm [resolvable:$true] %s96
      %s98 = sshll.u32 [#allocation10], 4
      %s99 = int_to_ptr.vmem [resolvable:$true] %s98
      %104 = dma.hbm_to_vmem [thread:$0]  %s97, 512, %s99, [#allocation9], 128, 128, 8
    $region53: #{lstm_model_forward_impl.1} parent=1 // pred_fallthru
      _
    // Predicated region
    $region54: #{lstm_model_forward_impl.1} parent=1 // pred_check
      _
    $region55: #{lstm_model_forward_impl.1} parent=1 // pred_check_branch
      %106 = sbr.rel (0) target = $region57
    $region56: #{lstm_model_forward_impl.1} parent=1 // pred_region
      _
    $region57: #{lstm_model_forward_impl.1} parent=1 // pred_fallthru
      _
    // Predicated region
    $region58: #{lstm_model_forward_impl.1} parent=1 // pred_check
      _
    $region59: #{lstm_model_forward_impl.1} parent=1 // pred_check_branch
      %108 = sbr.rel (0) target = $region61
    $region60: #{lstm_model_forward_impl.1} parent=1 // pred_region
      _
    $region61: #{lstm_model_forward_impl.1} parent=1 // pred_fallthru
      _
    // Predicated region
    $region62: #{lstm_model_forward_impl.1} parent=1 // pred_check
      _
    $region63: #{lstm_model_forward_impl.1} parent=1 // pred_check_branch
      %110 = sbr.rel (0) target = $region65
    $region64: #{lstm_model_forward_impl.1} parent=1 // pred_region
      _
    $region65: #{lstm_model_forward_impl.1} parent=1 // pred_fallthru
      _
    // Predicated region
    $region66: #{lstm_model_forward_impl.1} parent=1 // pred_check
      _
    $region67: #{lstm_model_forward_impl.1} parent=1 // pred_check_branch
      %112 = sbr.rel (0) target = $region69
    $region68: #{lstm_model_forward_impl.1} parent=1 // pred_region
      %114 = dma.done [#allocation4], 512
    $region69: #{lstm_model_forward_impl.1} parent=1 // pred_fallthru
      _
    // Predicated region
    $region70: #{lstm_model_forward_impl.1} parent=1 // pred_check
      _
    $region71: #{lstm_model_forward_impl.1} parent=1 // pred_check_branch
      %116 = sbr.rel (0) target = $region73
    $region72: #{lstm_model_forward_impl.1} parent=1 // pred_region
      %118 = dma.done [#allocation6], 256
    $region73: #{lstm_model_forward_impl.1} parent=1 // pred_fallthru
      _
    // Predicated region
    $region74: #{lstm_model_forward_impl.1} parent=1 // pred_check
      _
    $region75: #{lstm_model_forward_impl.1} parent=1 // pred_check_branch
      %120 = sbr.rel (0) target = $region77
    $region76: #{lstm_model_forward_impl.1} parent=1 // pred_region
      %122 = dma.done [#allocation6], 512
    $region77: #{lstm_model_forward_impl.1} parent=1 // pred_fallthru
      _
    // Predicated region
    $region78: #{lstm_model_forward_impl.1} parent=1 // pred_check
      _
    $region79: #{lstm_model_forward_impl.1} parent=1 // pred_check_branch
      %124 = sbr.rel (0) target = $region81
    $region80: #{lstm_model_forward_impl.1} parent=1 // pred_region
      %126 = dma.done [#allocation9], 512
    $region81: #{lstm_model_forward_impl.1} parent=1 // pred_fallthru
      _
    // Predicated region
    $region82: #{lstm_model_forward_impl.1} parent=1 // pred_check
      _
    $region83: #{lstm_model_forward_impl.1} parent=1 // pred_check_branch
      %128 = sbr.rel (0) target = $region85
    $region84: #{lstm_model_forward_impl.1} parent=1 // pred_region
      %130 = dma.done [#allocation9], 512
    $region85: #{lstm_model_forward_impl.1} parent=1 // pred_fallthru
      _
    %v131 = vld [vmem:[%s14] sm:$0xff]
    %v132 = vld [vmem:[%s14 + $0x8] sm:$0xff]
    %v133 = vld [vmem:[%s14 + $0x10] sm:$0xff]
    %v134 = vld [vmem:[%s14 + $0x18] sm:$0xff]
    %v135 = vld [vmem:[%s15] sm:$0x1]
    %v136 = vld [vmem:[%s2] sm:$0xff]
    %v137 = vld [vmem:[%s2 + $0x8] sm:$0xff]
    %v138 = vld [vmem:[%s3] sm:$0xff]
    %v139 = vld [vmem:[%s3 + $0x8] sm:$0xff]
    %v140 = vld [vmem:[%s3 + $0x10] sm:$0xff]
    %v141 = vld [vmem:[%s3 + $0x18] sm:$0xff]
    %v142 = vld [vmem:[%s4] sm:$0x1]
    %v144 = vperm.slane %v142, 0
    %v146 = vld [vmem:[%s5] sm:$0xff]
    %v147 = vld [vmem:[%s5 + $0x8] sm:$0xff]
    %v148 = vld [vmem:[%s5 + $0x10] sm:$0xff]
    %v149 = vld [vmem:[%s5 + $0x18] sm:$0xff]
    %v150 = vld [vmem:[#allocation3] sm:$0xff]
    %v151 = vld [vmem:[#allocation3 + $0x8] sm:$0xff]
    %v152 = vld [vmem:[#allocation3 + $0x10] sm:$0xff]
    %v153 = vld [vmem:[#allocation3 + $0x18] sm:$0xff]
    %v154 = vld [vmem:[%s7] sm:$0x1]
    %v156 = vperm.slane %v154, 0
    %v158 = vld [vmem:[#allocation5] sm:$0xff]
    %v159 = vld [vmem:[#allocation5 + $0x8] sm:$0xff]
    %v160 = vld [vmem:[#allocation7] sm:$0xff]
    %v161 = vld [vmem:[#allocation7 + $0x8] sm:$0xff]
    %v162 = vld [vmem:[#allocation7 + $0x10] sm:$0xff]
    %v163 = vld [vmem:[#allocation7 + $0x18] sm:$0xff]
    %v164 = vld [vmem:[%s10] sm:$0x1]
    %v166 = vperm.slane %v164, 0
    %v168 = vld [vmem:[#allocation8] sm:$0xff]
    %v169 = vld [vmem:[#allocation8 + $0x8] sm:$0xff]
    %v170 = vld [vmem:[#allocation8 + $0x10] sm:$0xff]
    %v171 = vld [vmem:[#allocation8 + $0x18] sm:$0xff]
    %v172 = vld [vmem:[#allocation10] sm:$0xff]
    %v173 = vld [vmem:[#allocation10 + $0x8] sm:$0xff]
    %v174 = vld [vmem:[#allocation10 + $0x10] sm:$0xff]
    %v175 = vld [vmem:[#allocation10 + $0x18] sm:$0xff]
    %v176 = vld [vmem:[%s13] sm:$0x1]
    %v178 = vperm.slane %v176, 0
    %v180 = vld [vmem:[%s0] sm:$0x3]
    %vm181 = vcmask 261120
    %v183 = vsel %vm181, 0.0, 0
    %185 = vmatpush.msra.mxu0 0.0
    %186 = vmatpush.msra.mxu0 0.0
    %187 = vmatpush.msra.mxu0 0.0
    %188 = vmatpush.msra.mxu0 0.0
    %189 = vmatpush.msra.mxu0 0.0
    %190 = vmatpush.msra.mxu0 0.0
    %191 = vmatpush.msra.mxu0 0.0
    %192 = vmatpush.msra.mxu0 0.0
    %193 = vmatpush.msra.mxu0 0.0
    %194 = vmatpush.msra.mxu0 0.0
    %195 = vmatpush.msra.mxu0 0.0
    %196 = vmatpush.msra.mxu0 0.0
    %197 = vmatpush.msra.mxu0 %v141
    %198 = vmatpush.msra.mxu0 %v140
    %199 = vmatpush.msra.mxu0 %v139
    %200 = vmatpush.msra.mxu0 %v138
    %201 = vmatmul.f32.gmra.mxu0 %v183
    %v202 = vpop.f32.mrf.mxu0
    %v203 = vadd.f32 0.0, %v202
    %204 = vdwg.mxu0
    %vm205 = vcmask 130048
    %v207 = vsel %vm205, %v180, 0
    %209 = vmatpush.msra.mxu0 0.0
    %210 = vmatpush.msra.mxu0 0.0
    %211 = vmatpush.msra.mxu0 0.0
    %212 = vmatpush.msra.mxu0 0.0
    %213 = vmatpush.msra.mxu0 0.0
    %214 = vmatpush.msra.mxu0 0.0
    %215 = vmatpush.msra.mxu0 0.0
    %216 = vmatpush.msra.mxu0 0.0
    %217 = vmatpush.msra.mxu0 0.0
    %218 = vmatpush.msra.mxu0 0.0
    %219 = vmatpush.msra.mxu0 0.0
    %220 = vmatpush.msra.mxu0 0.0
    %221 = vmatpush.msra.mxu0 0.0
    %222 = vmatpush.msra.mxu0 0.0
    %223 = vmatpush.msra.mxu0 %v137
    %224 = vmatpush.msra.mxu0 %v136
    %225 = vmatmul.f32.gmra.mxu0 %v207
    %v226 = vpop.f32.mrf.mxu0
    %v227 = vadd.f32 %v203, %v226
    %228 = vdwg.mxu0
    %v229 = vadd.f32 %v227, %v144
    %v230 = vxor.u32 %v229, 2147483648
    %v231 = vmul.f32 %v230, 1.442695
    %v232 = vpow.pop %v231
    %v233 = vadd.f32 %v232, 1.0
    %v234 = vrcp.pop %v233
    %v235 = vmul.f32 %v233, %v234
    %v236 = vsub.f32 1.0, %v235
    %v237 = vmul.f32 %v234, %v236
    %v238 = vadd.f32 %v234, %v237
    %vm239 = vweird.f32 %v233
    %vm240 = vweird.f32 %v234
    %vm241 = vmor %vm239, %vm240
    %v242 = vsel %vm241, %v234, %v238
    %v243 = vand.u32 2147483647, %v233
    %vm244 = vcmp.eq.f32.partialorder %v243, 8.507059e+37
    %v245 = vand.u32 %v233, 2147483648
    %v246 = vor.u32 1.1754944e-38, %v245
    %v247 = vsel %vm244, %v246, %v242
    %v248 = vmul.f32 1.0, %v247
    %v249 = vtanh.pop %v229
    %v250 = vmul.f32 %v248, 0.0
    %252 = vrot.lane.b32.xlu0 %v249, 64
    %v253 = vpop.permute.xlu0 %252
    %v255 = vmul.f32 %v248, %v253
    %257 = vrot.lane.b32.xlu0 %v255, 32
    %v258 = vpop.permute.xlu0 %257
    %v260 = vadd.f32 %v250, %v258
    %v261 = vtanh.pop %v260
    %263 = vrot.lane.b32.xlu0 %v261, 64
    %v264 = vpop.permute.xlu0 %263
    %v266 = vmul.f32 %v248, %v264
    %267 = vmatpush.msra.mxu0 0.0
    %268 = vmatpush.msra.mxu0 0.0
    %269 = vmatpush.msra.mxu0 0.0
    %270 = vmatpush.msra.mxu0 0.0
    %271 = vmatpush.msra.mxu0 0.0
    %272 = vmatpush.msra.mxu0 0.0
    %273 = vmatpush.msra.mxu0 0.0
    %274 = vmatpush.msra.mxu0 0.0
    %275 = vmatpush.msra.mxu0 0.0
    %276 = vmatpush.msra.mxu0 0.0
    %277 = vmatpush.msra.mxu0 0.0
    %278 = vmatpush.msra.mxu0 0.0
    %279 = vmatpush.msra.mxu0 %v153
    %280 = vmatpush.msra.mxu0 %v152
    %281 = vmatpush.msra.mxu0 %v151
    %282 = vmatpush.msra.mxu0 %v150
    %283 = vmatmul.f32.gmra.mxu0 %v183
    %v284 = vpop.f32.mrf.mxu0
    %v285 = vadd.f32 0.0, %v284
    %286 = vdwg.mxu0
    %288 = vrot.lane.b32.xlu0 %v266, 32
    %v289 = vpop.permute.xlu0 %288
    %v290 = vsel %vm181, %v289, 0
    %292 = vmatpush.msra.mxu0 0.0
    %293 = vmatpush.msra.mxu0 0.0
    %294 = vmatpush.msra.mxu0 0.0
    %295 = vmatpush.msra.mxu0 0.0
    %296 = vmatpush.msra.mxu0 0.0
    %297 = vmatpush.msra.mxu0 0.0
    %298 = vmatpush.msra.mxu0 0.0
    %299 = vmatpush.msra.mxu0 0.0
    %300 = vmatpush.msra.mxu0 0.0
    %301 = vmatpush.msra.mxu0 0.0
    %302 = vmatpush.msra.mxu0 0.0
    %303 = vmatpush.msra.mxu0 0.0
    %304 = vmatpush.msra.mxu0 %v149
    %305 = vmatpush.msra.mxu0 %v148
    %306 = vmatpush.msra.mxu0 %v147
    %307 = vmatpush.msra.mxu0 %v146
    %308 = vmatmul.f32.gmra.mxu0 %v290
    %v309 = vpop.f32.mrf.mxu0
    %v310 = vadd.f32 %v285, %v309
    %311 = vdwg.mxu0
    %v312 = vadd.f32 %v310, %v156
    %v313 = vxor.u32 %v312, 2147483648
    %v314 = vmul.f32 %v313, 1.442695
    %v315 = vpow.pop %v314
    %v316 = vadd.f32 %v315, 1.0
    %v317 = vrcp.pop %v316
    %v318 = vmul.f32 %v316, %v317
    %v319 = vsub.f32 1.0, %v318
    %v320 = vmul.f32 %v317, %v319
    %v321 = vadd.f32 %v317, %v320
    %vm322 = vweird.f32 %v316
    %vm323 = vweird.f32 %v317
    %vm324 = vmor %vm322, %vm323
    %v325 = vsel %vm324, %v317, %v321
    %v326 = vand.u32 2147483647, %v316
    %vm327 = vcmp.eq.f32.partialorder %v326, 8.507059e+37
    %v328 = vand.u32 %v316, 2147483648
    %v329 = vor.u32 1.1754944e-38, %v328
    %v330 = vsel %vm327, %v329, %v325
    %v331 = vmul.f32 1.0, %v330
    %v332 = vtanh.pop %v312
    %v333 = vmul.f32 %v331, 0.0
    %335 = vrot.lane.b32.xlu0 %v332, 64
    %v336 = vpop.permute.xlu0 %335
    %v338 = vmul.f32 %v331, %v336
    %340 = vrot.lane.b32.xlu0 %v338, 32
    %v341 = vpop.permute.xlu0 %340
    %v343 = vadd.f32 %v333, %v341
    %v344 = vtanh.pop %v343
    %346 = vrot.lane.b32.xlu0 %v344, 64
    %v347 = vpop.permute.xlu0 %346
    %v349 = vmul.f32 %v331, %v347
    %s350 = scalar_lea.vmem %s0, 2
    %v351 = vld [vmem:[%s350] sm:$0x3]
    %352 = vmatpush.msra.mxu0 0.0
    %353 = vmatpush.msra.mxu0 0.0
    %354 = vmatpush.msra.mxu0 0.0
    %355 = vmatpush.msra.mxu0 0.0
    %356 = vmatpush.msra.mxu0 0.0
    %357 = vmatpush.msra.mxu0 0.0
    %358 = vmatpush.msra.mxu0 0.0
    %359 = vmatpush.msra.mxu0 0.0
    %360 = vmatpush.msra.mxu0 0.0
    %361 = vmatpush.msra.mxu0 0.0
    %362 = vmatpush.msra.mxu0 0.0
    %363 = vmatpush.msra.mxu0 0.0
    %364 = vmatpush.msra.mxu0 %v141
    %365 = vmatpush.msra.mxu0 %v140
    %366 = vmatpush.msra.mxu0 %v139
    %367 = vmatpush.msra.mxu0 %v138
    %368 = vmatmul.f32.gmra.mxu0 %v290
    %v369 = vpop.f32.mrf.mxu0
    %v370 = vadd.f32 0.0, %v369
    %371 = vdwg.mxu0
    %v373 = vsel %vm205, %v351, 0
    %375 = vmatpush.msra.mxu0 0.0
    %376 = vmatpush.msra.mxu0 0.0
    %377 = vmatpush.msra.mxu0 0.0
    %378 = vmatpush.msra.mxu0 0.0
    %379 = vmatpush.msra.mxu0 0.0
    %380 = vmatpush.msra.mxu0 0.0
    %381 = vmatpush.msra.mxu0 0.0
    %382 = vmatpush.msra.mxu0 0.0
    %383 = vmatpush.msra.mxu0 0.0
    %384 = vmatpush.msra.mxu0 0.0
    %385 = vmatpush.msra.mxu0 0.0
    %386 = vmatpush.msra.mxu0 0.0
    %387 = vmatpush.msra.mxu0 0.0
    %388 = vmatpush.msra.mxu0 0.0
    %389 = vmatpush.msra.mxu0 %v137
    %390 = vmatpush.msra.mxu0 %v136
    %391 = vmatmul.f32.gmra.mxu0 %v373
    %v392 = vpop.f32.mrf.mxu0
    %v393 = vadd.f32 %v370, %v392
    %394 = vdwg.mxu0
    %v395 = vadd.f32 %v393, %v144
    %v396 = vxor.u32 %v395, 2147483648
    %v397 = vmul.f32 %v396, 1.442695
    %v398 = vpow.pop %v397
    %v399 = vadd.f32 %v398, 1.0
    %v400 = vrcp.pop %v399
    %v401 = vmul.f32 %v399, %v400
    %v402 = vsub.f32 1.0, %v401
    %v403 = vmul.f32 %v400, %v402
    %v404 = vadd.f32 %v400, %v403
    %vm405 = vweird.f32 %v399
    %vm406 = vweird.f32 %v400
    %vm407 = vmor %vm405, %vm406
    %v408 = vsel %vm407, %v400, %v404
    %v409 = vand.u32 2147483647, %v399
    %vm410 = vcmp.eq.f32.partialorder %v409, 8.507059e+37
    %v411 = vand.u32 %v399, 2147483648
    %v412 = vor.u32 1.1754944e-38, %v411
    %v413 = vsel %vm410, %v412, %v408
    %v414 = vmul.f32 1.0, %v413
    %v415 = vtanh.pop %v395
    %v416 = vmul.f32 %v414, %v260
    %418 = vrot.lane.b32.xlu0 %v415, 64
    %v419 = vpop.permute.xlu0 %418
    %v421 = vmul.f32 %v414, %v419
    %423 = vrot.lane.b32.xlu0 %v421, 32
    %v424 = vpop.permute.xlu0 %423
    %v426 = vadd.f32 %v416, %v424
    %v427 = vtanh.pop %v426
    %429 = vrot.lane.b32.xlu0 %v427, 64
    %v430 = vpop.permute.xlu0 %429
    %v432 = vmul.f32 %v414, %v430
    %434 = vrot.lane.b32.xlu0 %v349, 32
    %v435 = vpop.permute.xlu0 %434
    %v436 = vsel %vm181, %v435, 0
    %438 = vmatpush.msra.mxu0 0.0
    %439 = vmatpush.msra.mxu0 0.0
    %440 = vmatpush.msra.mxu0 0.0
    %441 = vmatpush.msra.mxu0 0.0
    %442 = vmatpush.msra.mxu0 0.0
    %443 = vmatpush.msra.mxu0 0.0
    %444 = vmatpush.msra.mxu0 0.0
    %445 = vmatpush.msra.mxu0 0.0
    %446 = vmatpush.msra.mxu0 0.0
    %447 = vmatpush.msra.mxu0 0.0
    %448 = vmatpush.msra.mxu0 0.0
    %449 = vmatpush.msra.mxu0 0.0
    %450 = vmatpush.msra.mxu0 %v153
    %451 = vmatpush.msra.mxu0 %v152
    %452 = vmatpush.msra.mxu0 %v151
    %453 = vmatpush.msra.mxu0 %v150
    %454 = vmatmul.f32.gmra.mxu0 %v436
    %v455 = vpop.f32.mrf.mxu0
    %v456 = vadd.f32 0.0, %v455
    %457 = vdwg.mxu0
    %459 = vrot.lane.b32.xlu0 %v432, 32
    %v460 = vpop.permute.xlu0 %459
    %v461 = vsel %vm181, %v460, 0
    %463 = vmatpush.msra.mxu0 0.0
    %464 = vmatpush.msra.mxu0 0.0
    %465 = vmatpush.msra.mxu0 0.0
    %466 = vmatpush.msra.mxu0 0.0
    %467 = vmatpush.msra.mxu0 0.0
    %468 = vmatpush.msra.mxu0 0.0
    %469 = vmatpush.msra.mxu0 0.0
    %470 = vmatpush.msra.mxu0 0.0
    %471 = vmatpush.msra.mxu0 0.0
    %472 = vmatpush.msra.mxu0 0.0
    %473 = vmatpush.msra.mxu0 0.0
    %474 = vmatpush.msra.mxu0 0.0
    %475 = vmatpush.msra.mxu0 %v149
    %476 = vmatpush.msra.mxu0 %v148
    %477 = vmatpush.msra.mxu0 %v147
    %478 = vmatpush.msra.mxu0 %v146
    %479 = vmatmul.f32.gmra.mxu0 %v461
    %v480 = vpop.f32.mrf.mxu0
    %v481 = vadd.f32 %v456, %v480
    %482 = vdwg.mxu0
    %v483 = vadd.f32 %v481, %v156
    %v484 = vxor.u32 %v483, 2147483648
    %v485 = vmul.f32 %v484, 1.442695
    %v486 = vpow.pop %v485
    %v487 = vadd.f32 %v486, 1.0
    %v488 = vrcp.pop %v487
    %v489 = vmul.f32 %v487, %v488
    %v490 = vsub.f32 1.0, %v489
    %v491 = vmul.f32 %v488, %v490
    %v492 = vadd.f32 %v488, %v491
    %vm493 = vweird.f32 %v487
    %vm494 = vweird.f32 %v488
    %vm495 = vmor %vm493, %vm494
    %v496 = vsel %vm495, %v488, %v492
    %v497 = vand.u32 2147483647, %v487
    %vm498 = vcmp.eq.f32.partialorder %v497, 8.507059e+37
    %v499 = vand.u32 %v487, 2147483648
    %v500 = vor.u32 1.1754944e-38, %v499
    %v501 = vsel %vm498, %v500, %v496
    %v502 = vmul.f32 1.0, %v501
    %v503 = vtanh.pop %v483
    %v504 = vmul.f32 %v502, %v343
    %506 = vrot.lane.b32.xlu0 %v503, 64
    %v507 = vpop.permute.xlu0 %506
    %v509 = vmul.f32 %v502, %v507
    %511 = vrot.lane.b32.xlu0 %v509, 32
    %v512 = vpop.permute.xlu0 %511
    %v514 = vadd.f32 %v504, %v512
    %v515 = vtanh.pop %v514
    %517 = vrot.lane.b32.xlu0 %v515, 64
    %v518 = vpop.permute.xlu0 %517
    %v520 = vmul.f32 %v502, %v518
    %s521 = scalar_lea.vmem %s0, 4
    %v522 = vld [vmem:[%s521] sm:$0x3]
    %523 = vmatpush.msra.mxu0 0.0
    %524 = vmatpush.msra.mxu0 0.0
    %525 = vmatpush.msra.mxu0 0.0
    %526 = vmatpush.msra.mxu0 0.0
    %527 = vmatpush.msra.mxu0 0.0
    %528 = vmatpush.msra.mxu0 0.0
    %529 = vmatpush.msra.mxu0 0.0
    %530 = vmatpush.msra.mxu0 0.0
    %531 = vmatpush.msra.mxu0 0.0
    %532 = vmatpush.msra.mxu0 0.0
    %533 = vmatpush.msra.mxu0 0.0
    %534 = vmatpush.msra.mxu0 0.0
    %535 = vmatpush.msra.mxu0 %v141
    %536 = vmatpush.msra.mxu0 %v140
    %537 = vmatpush.msra.mxu0 %v139
    %538 = vmatpush.msra.mxu0 %v138
    %539 = vmatmul.f32.gmra.mxu0 %v461
    %v540 = vpop.f32.mrf.mxu0
    %v541 = vadd.f32 0.0, %v540
    %542 = vdwg.mxu0
    %v544 = vsel %vm205, %v522, 0
    %546 = vmatpush.msra.mxu0 0.0
    %547 = vmatpush.msra.mxu0 0.0
    %548 = vmatpush.msra.mxu0 0.0
    %549 = vmatpush.msra.mxu0 0.0
    %550 = vmatpush.msra.mxu0 0.0
    %551 = vmatpush.msra.mxu0 0.0
    %552 = vmatpush.msra.mxu0 0.0
    %553 = vmatpush.msra.mxu0 0.0
    %554 = vmatpush.msra.mxu0 0.0
    %555 = vmatpush.msra.mxu0 0.0
    %556 = vmatpush.msra.mxu0 0.0
    %557 = vmatpush.msra.mxu0 0.0
    %558 = vmatpush.msra.mxu0 0.0
    %559 = vmatpush.msra.mxu0 0.0
    %560 = vmatpush.msra.mxu0 %v137
    %561 = vmatpush.msra.mxu0 %v136
    %562 = vmatmul.f32.gmra.mxu0 %v544
    %v563 = vpop.f32.mrf.mxu0
    %v564 = vadd.f32 %v541, %v563
    %565 = vdwg.mxu0
    %v566 = vadd.f32 %v564, %v144
    %v567 = vxor.u32 %v566, 2147483648
    %v568 = vmul.f32 %v567, 1.442695
    %v569 = vpow.pop %v568
    %v570 = vadd.f32 %v569, 1.0
    %v571 = vrcp.pop %v570
    %v572 = vmul.f32 %v570, %v571
    %v573 = vsub.f32 1.0, %v572
    %v574 = vmul.f32 %v571, %v573
    %v575 = vadd.f32 %v571, %v574
    %vm576 = vweird.f32 %v570
    %vm577 = vweird.f32 %v571
    %vm578 = vmor %vm576, %vm577
    %v579 = vsel %vm578, %v571, %v575
    %v580 = vand.u32 2147483647, %v570
    %vm581 = vcmp.eq.f32.partialorder %v580, 8.507059e+37
    %v582 = vand.u32 %v570, 2147483648
    %v583 = vor.u32 1.1754944e-38, %v582
    %v584 = vsel %vm581, %v583, %v579
    %v585 = vmul.f32 1.0, %v584
    %v586 = vtanh.pop %v566
    %v587 = vmul.f32 %v585, %v426
    %589 = vrot.lane.b32.xlu0 %v586, 64
    %v590 = vpop.permute.xlu0 %589
    %v592 = vmul.f32 %v585, %v590
    %594 = vrot.lane.b32.xlu0 %v592, 32
    %v595 = vpop.permute.xlu0 %594
    %v597 = vadd.f32 %v587, %v595
    %v598 = vtanh.pop %v597
    %600 = vrot.lane.b32.xlu0 %v598, 64
    %v601 = vpop.permute.xlu0 %600
    %v603 = vmul.f32 %v585, %v601
    %605 = vrot.lane.b32.xlu0 %v520, 32
    %v606 = vpop.permute.xlu0 %605
    %v607 = vsel %vm181, %v606, 0
    %609 = vmatpush.msra.mxu0 0.0
    %610 = vmatpush.msra.mxu0 0.0
    %611 = vmatpush.msra.mxu0 0.0
    %612 = vmatpush.msra.mxu0 0.0
    %613 = vmatpush.msra.mxu0 0.0
    %614 = vmatpush.msra.mxu0 0.0
    %615 = vmatpush.msra.mxu0 0.0
    %616 = vmatpush.msra.mxu0 0.0
    %617 = vmatpush.msra.mxu0 0.0
    %618 = vmatpush.msra.mxu0 0.0
    %619 = vmatpush.msra.mxu0 0.0
    %620 = vmatpush.msra.mxu0 0.0
    %621 = vmatpush.msra.mxu0 %v153
    %622 = vmatpush.msra.mxu0 %v152
    %623 = vmatpush.msra.mxu0 %v151
    %624 = vmatpush.msra.mxu0 %v150
    %625 = vmatmul.f32.gmra.mxu0 %v607
    %v626 = vpop.f32.mrf.mxu0
    %v627 = vadd.f32 0.0, %v626
    %628 = vdwg.mxu0
    %630 = vrot.lane.b32.xlu0 %v603, 32
    %v631 = vpop.permute.xlu0 %630
    %v632 = vsel %vm181, %v631, 0
    %634 = vmatpush.msra.mxu0 0.0
    %635 = vmatpush.msra.mxu0 0.0
    %636 = vmatpush.msra.mxu0 0.0
    %637 = vmatpush.msra.mxu0 0.0
    %638 = vmatpush.msra.mxu0 0.0
    %639 = vmatpush.msra.mxu0 0.0
    %640 = vmatpush.msra.mxu0 0.0
    %641 = vmatpush.msra.mxu0 0.0
    %642 = vmatpush.msra.mxu0 0.0
    %643 = vmatpush.msra.mxu0 0.0
    %644 = vmatpush.msra.mxu0 0.0
    %645 = vmatpush.msra.mxu0 0.0
    %646 = vmatpush.msra.mxu0 %v149
    %647 = vmatpush.msra.mxu0 %v148
    %648 = vmatpush.msra.mxu0 %v147
    %649 = vmatpush.msra.mxu0 %v146
    %650 = vmatmul.f32.gmra.mxu0 %v632
    %v651 = vpop.f32.mrf.mxu0
    %v652 = vadd.f32 %v627, %v651
    %653 = vdwg.mxu0
    %v654 = vadd.f32 %v652, %v156
    %v655 = vxor.u32 %v654, 2147483648
    %v656 = vmul.f32 %v655, 1.442695
    %v657 = vpow.pop %v656
    %v658 = vadd.f32 %v657, 1.0
    %v659 = vrcp.pop %v658
    %v660 = vmul.f32 %v658, %v659
    %v661 = vsub.f32 1.0, %v660
    %v662 = vmul.f32 %v659, %v661
    %v663 = vadd.f32 %v659, %v662
    %vm664 = vweird.f32 %v658
    %vm665 = vweird.f32 %v659
    %vm666 = vmor %vm664, %vm665
    %v667 = vsel %vm666, %v659, %v663
    %v668 = vand.u32 2147483647, %v658
    %vm669 = vcmp.eq.f32.partialorder %v668, 8.507059e+37
    %v670 = vand.u32 %v658, 2147483648
    %v671 = vor.u32 1.1754944e-38, %v670
    %v672 = vsel %vm669, %v671, %v667
    %v673 = vmul.f32 1.0, %v672
    %v674 = vtanh.pop %v654
    %v675 = vmul.f32 %v673, %v514
    %677 = vrot.lane.b32.xlu0 %v674, 64
    %v678 = vpop.permute.xlu0 %677
    %v680 = vmul.f32 %v673, %v678
    %682 = vrot.lane.b32.xlu0 %v680, 32
    %v683 = vpop.permute.xlu0 %682
    %v685 = vadd.f32 %v675, %v683
    %v686 = vtanh.pop %v685
    %688 = vrot.lane.b32.xlu0 %v686, 64
    %v689 = vpop.permute.xlu0 %688
    %v691 = vmul.f32 %v673, %v689
    %s692 = scalar_lea.vmem %s0, 6
    %v693 = vld [vmem:[%s692] sm:$0x3]
    %694 = vmatpush.msra.mxu0 0.0
    %695 = vmatpush.msra.mxu0 0.0
    %696 = vmatpush.msra.mxu0 0.0
    %697 = vmatpush.msra.mxu0 0.0
    %698 = vmatpush.msra.mxu0 0.0
    %699 = vmatpush.msra.mxu0 0.0
    %700 = vmatpush.msra.mxu0 0.0
    %701 = vmatpush.msra.mxu0 0.0
    %702 = vmatpush.msra.mxu0 0.0
    %703 = vmatpush.msra.mxu0 0.0
    %704 = vmatpush.msra.mxu0 0.0
    %705 = vmatpush.msra.mxu0 0.0
    %706 = vmatpush.msra.mxu0 %v141
    %707 = vmatpush.msra.mxu0 %v140
    %708 = vmatpush.msra.mxu0 %v139
    %709 = vmatpush.msra.mxu0 %v138
    %710 = vmatmul.f32.gmra.mxu0 %v632
    %v711 = vpop.f32.mrf.mxu0
    %v712 = vadd.f32 0.0, %v711
    %713 = vdwg.mxu0
    %v715 = vsel %vm205, %v693, 0
    %717 = vmatpush.msra.mxu0 0.0
    %718 = vmatpush.msra.mxu0 0.0
    %719 = vmatpush.msra.mxu0 0.0
    %720 = vmatpush.msra.mxu0 0.0
    %721 = vmatpush.msra.mxu0 0.0
    %722 = vmatpush.msra.mxu0 0.0
    %723 = vmatpush.msra.mxu0 0.0
    %724 = vmatpush.msra.mxu0 0.0
    %725 = vmatpush.msra.mxu0 0.0
    %726 = vmatpush.msra.mxu0 0.0
    %727 = vmatpush.msra.mxu0 0.0
    %728 = vmatpush.msra.mxu0 0.0
    %729 = vmatpush.msra.mxu0 0.0
    %730 = vmatpush.msra.mxu0 0.0
    %731 = vmatpush.msra.mxu0 %v137
    %732 = vmatpush.msra.mxu0 %v136
    %733 = vmatmul.f32.gmra.mxu0 %v715
    %v734 = vpop.f32.mrf.mxu0
    %v735 = vadd.f32 %v712, %v734
    %736 = vdwg.mxu0
    %v737 = vadd.f32 %v735, %v144
    %v738 = vxor.u32 %v737, 2147483648
    %v739 = vmul.f32 %v738, 1.442695
    %v740 = vpow.pop %v739
    %v741 = vadd.f32 %v740, 1.0
    %v742 = vrcp.pop %v741
    %v743 = vmul.f32 %v741, %v742
    %v744 = vsub.f32 1.0, %v743
    %v745 = vmul.f32 %v742, %v744
    %v746 = vadd.f32 %v742, %v745
    %vm747 = vweird.f32 %v741
    %vm748 = vweird.f32 %v742
    %vm749 = vmor %vm747, %vm748
    %v750 = vsel %vm749, %v742, %v746
    %v751 = vand.u32 2147483647, %v741
    %vm752 = vcmp.eq.f32.partialorder %v751, 8.507059e+37
    %v753 = vand.u32 %v741, 2147483648
    %v754 = vor.u32 1.1754944e-38, %v753
    %v755 = vsel %vm752, %v754, %v750
    %v756 = vmul.f32 1.0, %v755
    %v757 = vtanh.pop %v737
    %v758 = vmul.f32 %v756, %v597
    %760 = vrot.lane.b32.xlu0 %v757, 64
    %v761 = vpop.permute.xlu0 %760
    %v763 = vmul.f32 %v756, %v761
    %765 = vrot.lane.b32.xlu0 %v763, 32
    %v766 = vpop.permute.xlu0 %765
    %v768 = vadd.f32 %v758, %v766
    %v769 = vtanh.pop %v768
    %771 = vrot.lane.b32.xlu0 %v769, 64
    %v772 = vpop.permute.xlu0 %771
    %v774 = vmul.f32 %v756, %v772
    %776 = vrot.lane.b32.xlu0 %v691, 32
    %v777 = vpop.permute.xlu0 %776
    %v778 = vsel %vm181, %v777, 0
    %780 = vmatpush.msra.mxu0 0.0
    %781 = vmatpush.msra.mxu0 0.0
    %782 = vmatpush.msra.mxu0 0.0
    %783 = vmatpush.msra.mxu0 0.0
    %784 = vmatpush.msra.mxu0 0.0
    %785 = vmatpush.msra.mxu0 0.0
    %786 = vmatpush.msra.mxu0 0.0
    %787 = vmatpush.msra.mxu0 0.0
    %788 = vmatpush.msra.mxu0 0.0
    %789 = vmatpush.msra.mxu0 0.0
    %790 = vmatpush.msra.mxu0 0.0
    %791 = vmatpush.msra.mxu0 0.0
    %792 = vmatpush.msra.mxu0 %v153
    %793 = vmatpush.msra.mxu0 %v152
    %794 = vmatpush.msra.mxu0 %v151
    %795 = vmatpush.msra.mxu0 %v150
    %796 = vmatmul.f32.gmra.mxu0 %v778
    %v797 = vpop.f32.mrf.mxu0
    %v798 = vadd.f32 0.0, %v797
    %799 = vdwg.mxu0
    %801 = vrot.lane.b32.xlu0 %v774, 32
    %v802 = vpop.permute.xlu0 %801
    %v803 = vsel %vm181, %v802, 0
    %805 = vmatpush.msra.mxu0 0.0
    %806 = vmatpush.msra.mxu0 0.0
    %807 = vmatpush.msra.mxu0 0.0
    %808 = vmatpush.msra.mxu0 0.0
    %809 = vmatpush.msra.mxu0 0.0
    %810 = vmatpush.msra.mxu0 0.0
    %811 = vmatpush.msra.mxu0 0.0
    %812 = vmatpush.msra.mxu0 0.0
    %813 = vmatpush.msra.mxu0 0.0
    %814 = vmatpush.msra.mxu0 0.0
    %815 = vmatpush.msra.mxu0 0.0
    %816 = vmatpush.msra.mxu0 0.0
    %817 = vmatpush.msra.mxu0 %v149
    %818 = vmatpush.msra.mxu0 %v148
    %819 = vmatpush.msra.mxu0 %v147
    %820 = vmatpush.msra.mxu0 %v146
    %821 = vmatmul.f32.gmra.mxu0 %v803
    %v822 = vpop.f32.mrf.mxu0
    %v823 = vadd.f32 %v798, %v822
    %824 = vdwg.mxu0
    %v825 = vadd.f32 %v823, %v156
    %v826 = vxor.u32 %v825, 2147483648
    %v827 = vmul.f32 %v826, 1.442695
    %v828 = vpow.pop %v827
    %v829 = vadd.f32 %v828, 1.0
    %v830 = vrcp.pop %v829
    %v831 = vmul.f32 %v829, %v830
    %v832 = vsub.f32 1.0, %v831
    %v833 = vmul.f32 %v830, %v832
    %v834 = vadd.f32 %v830, %v833
    %vm835 = vweird.f32 %v829
    %vm836 = vweird.f32 %v830
    %vm837 = vmor %vm835, %vm836
    %v838 = vsel %vm837, %v830, %v834
    %v839 = vand.u32 2147483647, %v829
    %vm840 = vcmp.eq.f32.partialorder %v839, 8.507059e+37
    %v841 = vand.u32 %v829, 2147483648
    %v842 = vor.u32 1.1754944e-38, %v841
    %v843 = vsel %vm840, %v842, %v838
    %v844 = vmul.f32 1.0, %v843
    %v845 = vtanh.pop %v825
    %v846 = vmul.f32 %v844, %v685
    %848 = vrot.lane.b32.xlu0 %v845, 64
    %v849 = vpop.permute.xlu0 %848
    %v851 = vmul.f32 %v844, %v849
    %853 = vrot.lane.b32.xlu0 %v851, 32
    %v854 = vpop.permute.xlu0 %853
    %v856 = vadd.f32 %v846, %v854
    %v857 = vtanh.pop %v856
    %859 = vrot.lane.b32.xlu0 %v857, 64
    %v860 = vpop.permute.xlu0 %859
    %v862 = vmul.f32 %v844, %v860
    %s863 = scalar_lea.vmem %s0, 8
    %v864 = vld [vmem:[%s863] sm:$0x3]
    %865 = vmatpush.msra.mxu0 0.0
    %866 = vmatpush.msra.mxu0 0.0
    %867 = vmatpush.msra.mxu0 0.0
    %868 = vmatpush.msra.mxu0 0.0
    %869 = vmatpush.msra.mxu0 0.0
    %870 = vmatpush.msra.mxu0 0.0
    %871 = vmatpush.msra.mxu0 0.0
    %872 = vmatpush.msra.mxu0 0.0
    %873 = vmatpush.msra.mxu0 0.0
    %874 = vmatpush.msra.mxu0 0.0
    %875 = vmatpush.msra.mxu0 0.0
    %876 = vmatpush.msra.mxu0 0.0
    %877 = vmatpush.msra.mxu0 %v141
    %878 = vmatpush.msra.mxu0 %v140
    %879 = vmatpush.msra.mxu0 %v139
    %880 = vmatpush.msra.mxu0 %v138
    %881 = vmatmul.f32.gmra.mxu0 %v803
    %v882 = vpop.f32.mrf.mxu0
    %v883 = vadd.f32 0.0, %v882
    %884 = vdwg.mxu0
    %v886 = vsel %vm205, %v864, 0
    %888 = vmatpush.msra.mxu0 0.0
    %889 = vmatpush.msra.mxu0 0.0
    %890 = vmatpush.msra.mxu0 0.0
    %891 = vmatpush.msra.mxu0 0.0
    %892 = vmatpush.msra.mxu0 0.0
    %893 = vmatpush.msra.mxu0 0.0
    %894 = vmatpush.msra.mxu0 0.0
    %895 = vmatpush.msra.mxu0 0.0
    %896 = vmatpush.msra.mxu0 0.0
    %897 = vmatpush.msra.mxu0 0.0
    %898 = vmatpush.msra.mxu0 0.0
    %899 = vmatpush.msra.mxu0 0.0
    %900 = vmatpush.msra.mxu0 0.0
    %901 = vmatpush.msra.mxu0 0.0
    %902 = vmatpush.msra.mxu0 %v137
    %903 = vmatpush.msra.mxu0 %v136
    %904 = vmatmul.f32.gmra.mxu0 %v886
    %v905 = vpop.f32.mrf.mxu0
    %v906 = vadd.f32 %v883, %v905
    %907 = vdwg.mxu0
    %v908 = vadd.f32 %v906, %v144
    %v909 = vxor.u32 %v908, 2147483648
    %v910 = vmul.f32 %v909, 1.442695
    %v911 = vpow.pop %v910
    %v912 = vadd.f32 %v911, 1.0
    %v913 = vrcp.pop %v912
    %v914 = vmul.f32 %v912, %v913
    %v915 = vsub.f32 1.0, %v914
    %v916 = vmul.f32 %v913, %v915
    %v917 = vadd.f32 %v913, %v916
    %vm918 = vweird.f32 %v912
    %vm919 = vweird.f32 %v913
    %vm920 = vmor %vm918, %vm919
    %v921 = vsel %vm920, %v913, %v917
    %v922 = vand.u32 2147483647, %v912
    %vm923 = vcmp.eq.f32.partialorder %v922, 8.507059e+37
    %v924 = vand.u32 %v912, 2147483648
    %v925 = vor.u32 1.1754944e-38, %v924
    %v926 = vsel %vm923, %v925, %v921
    %v927 = vmul.f32 1.0, %v926
    %v928 = vtanh.pop %v908
    %v929 = vmul.f32 %v927, %v768
    %931 = vrot.lane.b32.xlu0 %v928, 64
    %v932 = vpop.permute.xlu0 %931
    %v934 = vmul.f32 %v927, %v932
    %936 = vrot.lane.b32.xlu0 %v934, 32
    %v937 = vpop.permute.xlu0 %936
    %v939 = vadd.f32 %v929, %v937
    %v940 = vtanh.pop %v939
    %942 = vrot.lane.b32.xlu0 %v940, 64
    %v943 = vpop.permute.xlu0 %942
    %v945 = vmul.f32 %v927, %v943
    %947 = vrot.lane.b32.xlu0 %v862, 32
    %v948 = vpop.permute.xlu0 %947
    %v949 = vsel %vm181, %v948, 0
    %951 = vmatpush.msra.mxu0 0.0
    %952 = vmatpush.msra.mxu0 0.0
    %953 = vmatpush.msra.mxu0 0.0
    %954 = vmatpush.msra.mxu0 0.0
    %955 = vmatpush.msra.mxu0 0.0
    %956 = vmatpush.msra.mxu0 0.0
    %957 = vmatpush.msra.mxu0 0.0
    %958 = vmatpush.msra.mxu0 0.0
    %959 = vmatpush.msra.mxu0 0.0
    %960 = vmatpush.msra.mxu0 0.0
    %961 = vmatpush.msra.mxu0 0.0
    %962 = vmatpush.msra.mxu0 0.0
    %963 = vmatpush.msra.mxu0 %v153
    %964 = vmatpush.msra.mxu0 %v152
    %965 = vmatpush.msra.mxu0 %v151
    %966 = vmatpush.msra.mxu0 %v150
    %967 = vmatmul.f32.gmra.mxu0 %v949
    %v968 = vpop.f32.mrf.mxu0
    %v969 = vadd.f32 0.0, %v968
    %970 = vdwg.mxu0
    %972 = vrot.lane.b32.xlu0 %v945, 32
    %v973 = vpop.permute.xlu0 %972
    %v974 = vsel %vm181, %v973, 0
    %976 = vmatpush.msra.mxu0 0.0
    %977 = vmatpush.msra.mxu0 0.0
    %978 = vmatpush.msra.mxu0 0.0
    %979 = vmatpush.msra.mxu0 0.0
    %980 = vmatpush.msra.mxu0 0.0
    %981 = vmatpush.msra.mxu0 0.0
    %982 = vmatpush.msra.mxu0 0.0
    %983 = vmatpush.msra.mxu0 0.0
    %984 = vmatpush.msra.mxu0 0.0
    %985 = vmatpush.msra.mxu0 0.0
    %986 = vmatpush.msra.mxu0 0.0
    %987 = vmatpush.msra.mxu0 0.0
    %988 = vmatpush.msra.mxu0 %v149
    %989 = vmatpush.msra.mxu0 %v148
    %990 = vmatpush.msra.mxu0 %v147
    %991 = vmatpush.msra.mxu0 %v146
    %992 = vmatmul.f32.gmra.mxu0 %v974
    %v993 = vpop.f32.mrf.mxu0
    %v994 = vadd.f32 %v969, %v993
    %995 = vdwg.mxu0
    %v996 = vadd.f32 %v994, %v156
    %v997 = vxor.u32 %v996, 2147483648
    %v998 = vmul.f32 %v997, 1.442695
    %v999 = vpow.pop %v998
    %v1000 = vadd.f32 %v999, 1.0
    %v1001 = vrcp.pop %v1000
    %v1002 = vmul.f32 %v1000, %v1001
    %v1003 = vsub.f32 1.0, %v1002
    %v1004 = vmul.f32 %v1001, %v1003
    %v1005 = vadd.f32 %v1001, %v1004
    %vm1006 = vweird.f32 %v1000
    %vm1007 = vweird.f32 %v1001
    %vm1008 = vmor %vm1006, %vm1007
    %v1009 = vsel %vm1008, %v1001, %v1005
    %v1010 = vand.u32 2147483647, %v1000
    %vm1011 = vcmp.eq.f32.partialorder %v1010, 8.507059e+37
    %v1012 = vand.u32 %v1000, 2147483648
    %v1013 = vor.u32 1.1754944e-38, %v1012
    %v1014 = vsel %vm1011, %v1013, %v1009
    %v1015 = vmul.f32 1.0, %v1014
    %v1016 = vtanh.pop %v996
    %v1017 = vmul.f32 %v1015, %v856
    %1019 = vrot.lane.b32.xlu0 %v1016, 64
    %v1020 = vpop.permute.xlu0 %1019
    %v1022 = vmul.f32 %v1015, %v1020
    %1024 = vrot.lane.b32.xlu0 %v1022, 32
    %v1025 = vpop.permute.xlu0 %1024
    %v1027 = vadd.f32 %v1017, %v1025
    %v1028 = vtanh.pop %v1027
    %1030 = vrot.lane.b32.xlu0 %v1028, 64
    %v1031 = vpop.permute.xlu0 %1030
    %v1033 = vmul.f32 %v1015, %v1031
    %s1034 = scalar_lea.vmem %s0, 10
    %v1035 = vld [vmem:[%s1034] sm:$0x3]
    %1036 = vmatpush.msra.mxu0 0.0
    %1037 = vmatpush.msra.mxu0 0.0
    %1038 = vmatpush.msra.mxu0 0.0
    %1039 = vmatpush.msra.mxu0 0.0
    %1040 = vmatpush.msra.mxu0 0.0
    %1041 = vmatpush.msra.mxu0 0.0
    %1042 = vmatpush.msra.mxu0 0.0
    %1043 = vmatpush.msra.mxu0 0.0
    %1044 = vmatpush.msra.mxu0 0.0
    %1045 = vmatpush.msra.mxu0 0.0
    %1046 = vmatpush.msra.mxu0 0.0
    %1047 = vmatpush.msra.mxu0 0.0
    %1048 = vmatpush.msra.mxu0 %v141
    %1049 = vmatpush.msra.mxu0 %v140
    %1050 = vmatpush.msra.mxu0 %v139
    %1051 = vmatpush.msra.mxu0 %v138
    %1052 = vmatmul.f32.gmra.mxu0 %v974
    %v1053 = vpop.f32.mrf.mxu0
    %v1054 = vadd.f32 0.0, %v1053
    %1055 = vdwg.mxu0
    %v1057 = vsel %vm205, %v1035, 0
    %1059 = vmatpush.msra.mxu0 0.0
    %1060 = vmatpush.msra.mxu0 0.0
    %1061 = vmatpush.msra.mxu0 0.0
    %1062 = vmatpush.msra.mxu0 0.0
    %1063 = vmatpush.msra.mxu0 0.0
    %1064 = vmatpush.msra.mxu0 0.0
    %1065 = vmatpush.msra.mxu0 0.0
    %1066 = vmatpush.msra.mxu0 0.0
    %1067 = vmatpush.msra.mxu0 0.0
    %1068 = vmatpush.msra.mxu0 0.0
    %1069 = vmatpush.msra.mxu0 0.0
    %1070 = vmatpush.msra.mxu0 0.0
    %1071 = vmatpush.msra.mxu0 0.0
    %1072 = vmatpush.msra.mxu0 0.0
    %1073 = vmatpush.msra.mxu0 %v137
    %1074 = vmatpush.msra.mxu0 %v136
    %1075 = vmatmul.f32.gmra.mxu0 %v1057
    %v1076 = vpop.f32.mrf.mxu0
    %v1077 = vadd.f32 %v1054, %v1076
    %1078 = vdwg.mxu0
    %v1079 = vadd.f32 %v1077, %v144
    %v1080 = vxor.u32 %v1079, 2147483648
    %v1081 = vmul.f32 %v1080, 1.442695
    %v1082 = vpow.pop %v1081
    %v1083 = vadd.f32 %v1082, 1.0
    %v1084 = vrcp.pop %v1083
    %v1085 = vmul.f32 %v1083, %v1084
    %v1086 = vsub.f32 1.0, %v1085
    %v1087 = vmul.f32 %v1084, %v1086
    %v1088 = vadd.f32 %v1084, %v1087
    %vm1089 = vweird.f32 %v1083
    %vm1090 = vweird.f32 %v1084
    %vm1091 = vmor %vm1089, %vm1090
    %v1092 = vsel %vm1091, %v1084, %v1088
    %v1093 = vand.u32 2147483647, %v1083
    %vm1094 = vcmp.eq.f32.partialorder %v1093, 8.507059e+37
    %v1095 = vand.u32 %v1083, 2147483648
    %v1096 = vor.u32 1.1754944e-38, %v1095
    %v1097 = vsel %vm1094, %v1096, %v1092
    %v1098 = vmul.f32 1.0, %v1097
    %v1099 = vtanh.pop %v1079
    %v1100 = vmul.f32 %v1098, %v939
    %1102 = vrot.lane.b32.xlu0 %v1099, 64
    %v1103 = vpop.permute.xlu0 %1102
    %v1105 = vmul.f32 %v1098, %v1103
    %1107 = vrot.lane.b32.xlu0 %v1105, 32
    %v1108 = vpop.permute.xlu0 %1107
    %v1110 = vadd.f32 %v1100, %v1108
    %v1111 = vtanh.pop %v1110
    %1113 = vrot.lane.b32.xlu0 %v1111, 64
    %v1114 = vpop.permute.xlu0 %1113
    %v1116 = vmul.f32 %v1098, %v1114
    %1118 = vrot.lane.b32.xlu0 %v1033, 32
    %v1119 = vpop.permute.xlu0 %1118
    %v1120 = vsel %vm181, %v1119, 0
    %1122 = vmatpush.msra.mxu0 0.0
    %1123 = vmatpush.msra.mxu0 0.0
    %1124 = vmatpush.msra.mxu0 0.0
    %1125 = vmatpush.msra.mxu0 0.0
    %1126 = vmatpush.msra.mxu0 0.0
    %1127 = vmatpush.msra.mxu0 0.0
    %1128 = vmatpush.msra.mxu0 0.0
    %1129 = vmatpush.msra.mxu0 0.0
    %1130 = vmatpush.msra.mxu0 0.0
    %1131 = vmatpush.msra.mxu0 0.0
    %1132 = vmatpush.msra.mxu0 0.0
    %1133 = vmatpush.msra.mxu0 0.0
    %1134 = vmatpush.msra.mxu0 %v153
    %1135 = vmatpush.msra.mxu0 %v152
    %1136 = vmatpush.msra.mxu0 %v151
    %1137 = vmatpush.msra.mxu0 %v150
    %1138 = vmatmul.f32.gmra.mxu0 %v1120
    %v1139 = vpop.f32.mrf.mxu0
    %v1140 = vadd.f32 0.0, %v1139
    %1141 = vdwg.mxu0
    %1143 = vrot.lane.b32.xlu0 %v1116, 32
    %v1144 = vpop.permute.xlu0 %1143
    %v1145 = vsel %vm181, %v1144, 0
    %1147 = vmatpush.msra.mxu0 0.0
    %1148 = vmatpush.msra.mxu0 0.0
    %1149 = vmatpush.msra.mxu0 0.0
    %1150 = vmatpush.msra.mxu0 0.0
    %1151 = vmatpush.msra.mxu0 0.0
    %1152 = vmatpush.msra.mxu0 0.0
    %1153 = vmatpush.msra.mxu0 0.0
    %1154 = vmatpush.msra.mxu0 0.0
    %1155 = vmatpush.msra.mxu0 0.0
    %1156 = vmatpush.msra.mxu0 0.0
    %1157 = vmatpush.msra.mxu0 0.0
    %1158 = vmatpush.msra.mxu0 0.0
    %1159 = vmatpush.msra.mxu0 %v149
    %1160 = vmatpush.msra.mxu0 %v148
    %1161 = vmatpush.msra.mxu0 %v147
    %1162 = vmatpush.msra.mxu0 %v146
    %1163 = vmatmul.f32.gmra.mxu0 %v1145
    %v1164 = vpop.f32.mrf.mxu0
    %v1165 = vadd.f32 %v1140, %v1164
    %1166 = vdwg.mxu0
    %v1167 = vadd.f32 %v1165, %v156
    %v1168 = vxor.u32 %v1167, 2147483648
    %v1169 = vmul.f32 %v1168, 1.442695
    %v1170 = vpow.pop %v1169
    %v1171 = vadd.f32 %v1170, 1.0
    %v1172 = vrcp.pop %v1171
    %v1173 = vmul.f32 %v1171, %v1172
    %v1174 = vsub.f32 1.0, %v1173
    %v1175 = vmul.f32 %v1172, %v1174
    %v1176 = vadd.f32 %v1172, %v1175
    %vm1177 = vweird.f32 %v1171
    %vm1178 = vweird.f32 %v1172
    %vm1179 = vmor %vm1177, %vm1178
    %v1180 = vsel %vm1179, %v1172, %v1176
    %v1181 = vand.u32 2147483647, %v1171
    %vm1182 = vcmp.eq.f32.partialorder %v1181, 8.507059e+37
    %v1183 = vand.u32 %v1171, 2147483648
    %v1184 = vor.u32 1.1754944e-38, %v1183
    %v1185 = vsel %vm1182, %v1184, %v1180
    %v1186 = vmul.f32 1.0, %v1185
    %v1187 = vtanh.pop %v1167
    %v1188 = vmul.f32 %v1186, %v1027
    %1190 = vrot.lane.b32.xlu0 %v1187, 64
    %v1191 = vpop.permute.xlu0 %1190
    %v1193 = vmul.f32 %v1186, %v1191
    %1195 = vrot.lane.b32.xlu0 %v1193, 32
    %v1196 = vpop.permute.xlu0 %1195
    %v1198 = vadd.f32 %v1188, %v1196
    %v1199 = vtanh.pop %v1198
    %1201 = vrot.lane.b32.xlu0 %v1199, 64
    %v1202 = vpop.permute.xlu0 %1201
    %v1204 = vmul.f32 %v1186, %v1202
    %s1205 = scalar_lea.vmem %s0, 12
    %v1206 = vld [vmem:[%s1205] sm:$0x3]
    %1207 = vmatpush.msra.mxu0 0.0
    %1208 = vmatpush.msra.mxu0 0.0
    %1209 = vmatpush.msra.mxu0 0.0
    %1210 = vmatpush.msra.mxu0 0.0
    %1211 = vmatpush.msra.mxu0 0.0
    %1212 = vmatpush.msra.mxu0 0.0
    %1213 = vmatpush.msra.mxu0 0.0
    %1214 = vmatpush.msra.mxu0 0.0
    %1215 = vmatpush.msra.mxu0 0.0
    %1216 = vmatpush.msra.mxu0 0.0
    %1217 = vmatpush.msra.mxu0 0.0
    %1218 = vmatpush.msra.mxu0 0.0
    %1219 = vmatpush.msra.mxu0 %v141
    %1220 = vmatpush.msra.mxu0 %v140
    %1221 = vmatpush.msra.mxu0 %v139
    %1222 = vmatpush.msra.mxu0 %v138
    %1223 = vmatmul.f32.gmra.mxu0 %v1145
    %v1224 = vpop.f32.mrf.mxu0
    %v1225 = vadd.f32 0.0, %v1224
    %1226 = vdwg.mxu0
    %v1228 = vsel %vm205, %v1206, 0
    %1230 = vmatpush.msra.mxu0 0.0
    %1231 = vmatpush.msra.mxu0 0.0
    %1232 = vmatpush.msra.mxu0 0.0
    %1233 = vmatpush.msra.mxu0 0.0
    %1234 = vmatpush.msra.mxu0 0.0
    %1235 = vmatpush.msra.mxu0 0.0
    %1236 = vmatpush.msra.mxu0 0.0
    %1237 = vmatpush.msra.mxu0 0.0
    %1238 = vmatpush.msra.mxu0 0.0
    %1239 = vmatpush.msra.mxu0 0.0
    %1240 = vmatpush.msra.mxu0 0.0
    %1241 = vmatpush.msra.mxu0 0.0
    %1242 = vmatpush.msra.mxu0 0.0
    %1243 = vmatpush.msra.mxu0 0.0
    %1244 = vmatpush.msra.mxu0 %v137
    %1245 = vmatpush.msra.mxu0 %v136
    %1246 = vmatmul.f32.gmra.mxu0 %v1228
    %v1247 = vpop.f32.mrf.mxu0
    %v1248 = vadd.f32 %v1225, %v1247
    %1249 = vdwg.mxu0
    %v1250 = vadd.f32 %v1248, %v144
    %v1251 = vxor.u32 %v1250, 2147483648
    %v1252 = vmul.f32 %v1251, 1.442695
    %v1253 = vpow.pop %v1252
    %v1254 = vadd.f32 %v1253, 1.0
    %v1255 = vrcp.pop %v1254
    %v1256 = vmul.f32 %v1254, %v1255
    %v1257 = vsub.f32 1.0, %v1256
    %v1258 = vmul.f32 %v1255, %v1257
    %v1259 = vadd.f32 %v1255, %v1258
    %vm1260 = vweird.f32 %v1254
    %vm1261 = vweird.f32 %v1255
    %vm1262 = vmor %vm1260, %vm1261
    %v1263 = vsel %vm1262, %v1255, %v1259
    %v1264 = vand.u32 2147483647, %v1254
    %vm1265 = vcmp.eq.f32.partialorder %v1264, 8.507059e+37
    %v1266 = vand.u32 %v1254, 2147483648
    %v1267 = vor.u32 1.1754944e-38, %v1266
    %v1268 = vsel %vm1265, %v1267, %v1263
    %v1269 = vmul.f32 1.0, %v1268
    %v1270 = vtanh.pop %v1250
    %v1271 = vmul.f32 %v1269, %v1110
    %1273 = vrot.lane.b32.xlu0 %v1270, 64
    %v1274 = vpop.permute.xlu0 %1273
    %v1276 = vmul.f32 %v1269, %v1274
    %1278 = vrot.lane.b32.xlu0 %v1276, 32
    %v1279 = vpop.permute.xlu0 %1278
    %v1281 = vadd.f32 %v1271, %v1279
    %v1282 = vtanh.pop %v1281
    %1284 = vrot.lane.b32.xlu0 %v1282, 64
    %v1285 = vpop.permute.xlu0 %1284
    %v1287 = vmul.f32 %v1269, %v1285
    %1289 = vrot.lane.b32.xlu0 %v1204, 32
    %v1290 = vpop.permute.xlu0 %1289
    %v1291 = vsel %vm181, %v1290, 0
    %1293 = vmatpush.msra.mxu0 0.0
    %1294 = vmatpush.msra.mxu0 0.0
    %1295 = vmatpush.msra.mxu0 0.0
    %1296 = vmatpush.msra.mxu0 0.0
    %1297 = vmatpush.msra.mxu0 0.0
    %1298 = vmatpush.msra.mxu0 0.0
    %1299 = vmatpush.msra.mxu0 0.0
    %1300 = vmatpush.msra.mxu0 0.0
    %1301 = vmatpush.msra.mxu0 0.0
    %1302 = vmatpush.msra.mxu0 0.0
    %1303 = vmatpush.msra.mxu0 0.0
    %1304 = vmatpush.msra.mxu0 0.0
    %1305 = vmatpush.msra.mxu0 %v153
    %1306 = vmatpush.msra.mxu0 %v152
    %1307 = vmatpush.msra.mxu0 %v151
    %1308 = vmatpush.msra.mxu0 %v150
    %1309 = vmatmul.f32.gmra.mxu0 %v1291
    %v1310 = vpop.f32.mrf.mxu0
    %v1311 = vadd.f32 0.0, %v1310
    %1312 = vdwg.mxu0
    %1314 = vrot.lane.b32.xlu0 %v1287, 32
    %v1315 = vpop.permute.xlu0 %1314
    %v1316 = vsel %vm181, %v1315, 0
    %1318 = vmatpush.msra.mxu0 0.0
    %1319 = vmatpush.msra.mxu0 0.0
    %1320 = vmatpush.msra.mxu0 0.0
    %1321 = vmatpush.msra.mxu0 0.0
    %1322 = vmatpush.msra.mxu0 0.0
    %1323 = vmatpush.msra.mxu0 0.0
    %1324 = vmatpush.msra.mxu0 0.0
    %1325 = vmatpush.msra.mxu0 0.0
    %1326 = vmatpush.msra.mxu0 0.0
    %1327 = vmatpush.msra.mxu0 0.0
    %1328 = vmatpush.msra.mxu0 0.0
    %1329 = vmatpush.msra.mxu0 0.0
    %1330 = vmatpush.msra.mxu0 %v149
    %1331 = vmatpush.msra.mxu0 %v148
    %1332 = vmatpush.msra.mxu0 %v147
    %1333 = vmatpush.msra.mxu0 %v146
    %1334 = vmatmul.f32.gmra.mxu0 %v1316
    %v1335 = vpop.f32.mrf.mxu0
    %v1336 = vadd.f32 %v1311, %v1335
    %1337 = vdwg.mxu0
    %v1338 = vadd.f32 %v1336, %v156
    %v1339 = vxor.u32 %v1338, 2147483648
    %v1340 = vmul.f32 %v1339, 1.442695
    %v1341 = vpow.pop %v1340
    %v1342 = vadd.f32 %v1341, 1.0
    %v1343 = vrcp.pop %v1342
    %v1344 = vmul.f32 %v1342, %v1343
    %v1345 = vsub.f32 1.0, %v1344
    %v1346 = vmul.f32 %v1343, %v1345
    %v1347 = vadd.f32 %v1343, %v1346
    %vm1348 = vweird.f32 %v1342
    %vm1349 = vweird.f32 %v1343
    %vm1350 = vmor %vm1348, %vm1349
    %v1351 = vsel %vm1350, %v1343, %v1347
    %v1352 = vand.u32 2147483647, %v1342
    %vm1353 = vcmp.eq.f32.partialorder %v1352, 8.507059e+37
    %v1354 = vand.u32 %v1342, 2147483648
    %v1355 = vor.u32 1.1754944e-38, %v1354
    %v1356 = vsel %vm1353, %v1355, %v1351
    %v1357 = vmul.f32 1.0, %v1356
    %v1358 = vtanh.pop %v1338
    %v1359 = vmul.f32 %v1357, %v1198
    %1361 = vrot.lane.b32.xlu0 %v1358, 64
    %v1362 = vpop.permute.xlu0 %1361
    %v1364 = vmul.f32 %v1357, %v1362
    %1366 = vrot.lane.b32.xlu0 %v1364, 32
    %v1367 = vpop.permute.xlu0 %1366
    %v1369 = vadd.f32 %v1359, %v1367
    %v1370 = vtanh.pop %v1369
    %1372 = vrot.lane.b32.xlu0 %v1370, 64
    %v1373 = vpop.permute.xlu0 %1372
    %v1375 = vmul.f32 %v1357, %v1373
    %s1376 = scalar_lea.vmem %s0, 14
    %v1377 = vld [vmem:[%s1376] sm:$0x3]
    %1378 = vmatpush.msra.mxu0 0.0
    %1379 = vmatpush.msra.mxu0 0.0
    %1380 = vmatpush.msra.mxu0 0.0
    %1381 = vmatpush.msra.mxu0 0.0
    %1382 = vmatpush.msra.mxu0 0.0
    %1383 = vmatpush.msra.mxu0 0.0
    %1384 = vmatpush.msra.mxu0 0.0
    %1385 = vmatpush.msra.mxu0 0.0
    %1386 = vmatpush.msra.mxu0 0.0
    %1387 = vmatpush.msra.mxu0 0.0
    %1388 = vmatpush.msra.mxu0 0.0
    %1389 = vmatpush.msra.mxu0 0.0
    %1390 = vmatpush.msra.mxu0 %v141
    %1391 = vmatpush.msra.mxu0 %v140
    %1392 = vmatpush.msra.mxu0 %v139
    %1393 = vmatpush.msra.mxu0 %v138
    %1394 = vmatmul.f32.gmra.mxu0 %v1316
    %v1395 = vpop.f32.mrf.mxu0
    %v1396 = vadd.f32 0.0, %v1395
    %1397 = vdwg.mxu0
    %v1399 = vsel %vm205, %v1377, 0
    %1401 = vmatpush.msra.mxu0 0.0
    %1402 = vmatpush.msra.mxu0 0.0
    %1403 = vmatpush.msra.mxu0 0.0
    %1404 = vmatpush.msra.mxu0 0.0
    %1405 = vmatpush.msra.mxu0 0.0
    %1406 = vmatpush.msra.mxu0 0.0
    %1407 = vmatpush.msra.mxu0 0.0
    %1408 = vmatpush.msra.mxu0 0.0
    %1409 = vmatpush.msra.mxu0 0.0
    %1410 = vmatpush.msra.mxu0 0.0
    %1411 = vmatpush.msra.mxu0 0.0
    %1412 = vmatpush.msra.mxu0 0.0
    %1413 = vmatpush.msra.mxu0 0.0
    %1414 = vmatpush.msra.mxu0 0.0
    %1415 = vmatpush.msra.mxu0 %v137
    %1416 = vmatpush.msra.mxu0 %v136
    %1417 = vmatmul.f32.gmra.mxu0 %v1399
    %v1418 = vpop.f32.mrf.mxu0
    %v1419 = vadd.f32 %v1396, %v1418
    %1420 = vdwg.mxu0
    %v1421 = vadd.f32 %v1419, %v144
    %v1422 = vxor.u32 %v1421, 2147483648
    %v1423 = vmul.f32 %v1422, 1.442695
    %v1424 = vpow.pop %v1423
    %v1425 = vadd.f32 %v1424, 1.0
    %v1426 = vrcp.pop %v1425
    %v1427 = vmul.f32 %v1425, %v1426
    %v1428 = vsub.f32 1.0, %v1427
    %v1429 = vmul.f32 %v1426, %v1428
    %v1430 = vadd.f32 %v1426, %v1429
    %vm1431 = vweird.f32 %v1425
    %vm1432 = vweird.f32 %v1426
    %vm1433 = vmor %vm1431, %vm1432
    %v1434 = vsel %vm1433, %v1426, %v1430
    %v1435 = vand.u32 2147483647, %v1425
    %vm1436 = vcmp.eq.f32.partialorder %v1435, 8.507059e+37
    %v1437 = vand.u32 %v1425, 2147483648
    %v1438 = vor.u32 1.1754944e-38, %v1437
    %v1439 = vsel %vm1436, %v1438, %v1434
    %v1440 = vmul.f32 1.0, %v1439
    %v1441 = vtanh.pop %v1421
    %v1442 = vmul.f32 %v1440, %v1281
    %1444 = vrot.lane.b32.xlu0 %v1441, 64
    %v1445 = vpop.permute.xlu0 %1444
    %v1447 = vmul.f32 %v1440, %v1445
    %1449 = vrot.lane.b32.xlu0 %v1447, 32
    %v1450 = vpop.permute.xlu0 %1449
    %v1452 = vadd.f32 %v1442, %v1450
    %v1453 = vtanh.pop %v1452
    %1455 = vrot.lane.b32.xlu0 %v1453, 64
    %v1456 = vpop.permute.xlu0 %1455
    %v1458 = vmul.f32 %v1440, %v1456
    %1460 = vrot.lane.b32.xlu0 %v1375, 32
    %v1461 = vpop.permute.xlu0 %1460
    %v1462 = vsel %vm181, %v1461, 0
    %1464 = vmatpush.msra.mxu0 0.0
    %1465 = vmatpush.msra.mxu0 0.0
    %1466 = vmatpush.msra.mxu0 0.0
    %1467 = vmatpush.msra.mxu0 0.0
    %1468 = vmatpush.msra.mxu0 0.0
    %1469 = vmatpush.msra.mxu0 0.0
    %1470 = vmatpush.msra.mxu0 0.0
    %1471 = vmatpush.msra.mxu0 0.0
    %1472 = vmatpush.msra.mxu0 0.0
    %1473 = vmatpush.msra.mxu0 0.0
    %1474 = vmatpush.msra.mxu0 0.0
    %1475 = vmatpush.msra.mxu0 0.0
    %1476 = vmatpush.msra.mxu0 %v153
    %1477 = vmatpush.msra.mxu0 %v152
    %1478 = vmatpush.msra.mxu0 %v151
    %1479 = vmatpush.msra.mxu0 %v150
    %1480 = vmatmul.f32.gmra.mxu0 %v1462
    %v1481 = vpop.f32.mrf.mxu0
    %v1482 = vadd.f32 0.0, %v1481
    %1483 = vdwg.mxu0
    %1485 = vrot.lane.b32.xlu0 %v1458, 32
    %v1486 = vpop.permute.xlu0 %1485
    %v1487 = vsel %vm181, %v1486, 0
    %1489 = vmatpush.msra.mxu0 0.0
    %1490 = vmatpush.msra.mxu0 0.0
    %1491 = vmatpush.msra.mxu0 0.0
    %1492 = vmatpush.msra.mxu0 0.0
    %1493 = vmatpush.msra.mxu0 0.0
    %1494 = vmatpush.msra.mxu0 0.0
    %1495 = vmatpush.msra.mxu0 0.0
    %1496 = vmatpush.msra.mxu0 0.0
    %1497 = vmatpush.msra.mxu0 0.0
    %1498 = vmatpush.msra.mxu0 0.0
    %1499 = vmatpush.msra.mxu0 0.0
    %1500 = vmatpush.msra.mxu0 0.0
    %1501 = vmatpush.msra.mxu0 %v149
    %1502 = vmatpush.msra.mxu0 %v148
    %1503 = vmatpush.msra.mxu0 %v147
    %1504 = vmatpush.msra.mxu0 %v146
    %1505 = vmatmul.f32.gmra.mxu0 %v1487
    %v1506 = vpop.f32.mrf.mxu0
    %v1507 = vadd.f32 %v1482, %v1506
    %1508 = vdwg.mxu0
    %v1509 = vadd.f32 %v1507, %v156
    %v1510 = vxor.u32 %v1509, 2147483648
    %v1511 = vmul.f32 %v1510, 1.442695
    %v1512 = vpow.pop %v1511
    %v1513 = vadd.f32 %v1512, 1.0
    %v1514 = vrcp.pop %v1513
    %v1515 = vmul.f32 %v1513, %v1514
    %v1516 = vsub.f32 1.0, %v1515
    %v1517 = vmul.f32 %v1514, %v1516
    %v1518 = vadd.f32 %v1514, %v1517
    %vm1519 = vweird.f32 %v1513
    %vm1520 = vweird.f32 %v1514
    %vm1521 = vmor %vm1519, %vm1520
    %v1522 = vsel %vm1521, %v1514, %v1518
    %v1523 = vand.u32 2147483647, %v1513
    %vm1524 = vcmp.eq.f32.partialorder %v1523, 8.507059e+37
    %v1525 = vand.u32 %v1513, 2147483648
    %v1526 = vor.u32 1.1754944e-38, %v1525
    %v1527 = vsel %vm1524, %v1526, %v1522
    %v1528 = vmul.f32 1.0, %v1527
    %v1529 = vtanh.pop %v1509
    %v1530 = vmul.f32 %v1528, %v1369
    %1532 = vrot.lane.b32.xlu0 %v1529, 64
    %v1533 = vpop.permute.xlu0 %1532
    %v1535 = vmul.f32 %v1528, %v1533
    %1537 = vrot.lane.b32.xlu0 %v1535, 32
    %v1538 = vpop.permute.xlu0 %1537
    %v1540 = vadd.f32 %v1530, %v1538
    %v1541 = vtanh.pop %v1540
    %1543 = vrot.lane.b32.xlu0 %v1541, 64
    %v1544 = vpop.permute.xlu0 %1543
    %v1546 = vmul.f32 %v1528, %v1544
    %v1547 = vld [vmem:[%s1] sm:$0x3]
    %1548 = vmatpush.msra.mxu0 0.0
    %1549 = vmatpush.msra.mxu0 0.0
    %1550 = vmatpush.msra.mxu0 0.0
    %1551 = vmatpush.msra.mxu0 0.0
    %1552 = vmatpush.msra.mxu0 0.0
    %1553 = vmatpush.msra.mxu0 0.0
    %1554 = vmatpush.msra.mxu0 0.0
    %1555 = vmatpush.msra.mxu0 0.0
    %1556 = vmatpush.msra.mxu0 0.0
    %1557 = vmatpush.msra.mxu0 0.0
    %1558 = vmatpush.msra.mxu0 0.0
    %1559 = vmatpush.msra.mxu0 0.0
    %1560 = vmatpush.msra.mxu0 %v163
    %1561 = vmatpush.msra.mxu0 %v162
    %1562 = vmatpush.msra.mxu0 %v161
    %1563 = vmatpush.msra.mxu0 %v160
    %1564 = vmatmul.f32.gmra.mxu0 %v1487
    %v1565 = vpop.f32.mrf.mxu0
    %v1566 = vadd.f32 0.0, %v1565
    %1567 = vdwg.mxu0
    %v1569 = vsel %vm205, %v1547, 0
    %1571 = vmatpush.msra.mxu0 0.0
    %1572 = vmatpush.msra.mxu0 0.0
    %1573 = vmatpush.msra.mxu0 0.0
    %1574 = vmatpush.msra.mxu0 0.0
    %1575 = vmatpush.msra.mxu0 0.0
    %1576 = vmatpush.msra.mxu0 0.0
    %1577 = vmatpush.msra.mxu0 0.0
    %1578 = vmatpush.msra.mxu0 0.0
    %1579 = vmatpush.msra.mxu0 0.0
    %1580 = vmatpush.msra.mxu0 0.0
    %1581 = vmatpush.msra.mxu0 0.0
    %1582 = vmatpush.msra.mxu0 0.0
    %1583 = vmatpush.msra.mxu0 0.0
    %1584 = vmatpush.msra.mxu0 0.0
    %1585 = vmatpush.msra.mxu0 %v159
    %1586 = vmatpush.msra.mxu0 %v158
    %1587 = vmatmul.f32.gmra.mxu0 %v1569
    %v1588 = vpop.f32.mrf.mxu0
    %v1589 = vadd.f32 %v1566, %v1588
    %1590 = vdwg.mxu0
    %v1591 = vadd.f32 %v1589, %v166
    %v1592 = vxor.u32 %v1591, 2147483648
    %v1593 = vmul.f32 %v1592, 1.442695
    %v1594 = vpow.pop %v1593
    %v1595 = vadd.f32 %v1594, 1.0
    %v1596 = vrcp.pop %v1595
    %v1597 = vmul.f32 %v1595, %v1596
    %v1598 = vsub.f32 1.0, %v1597
    %v1599 = vmul.f32 %v1596, %v1598
    %v1600 = vadd.f32 %v1596, %v1599
    %vm1601 = vweird.f32 %v1595
    %vm1602 = vweird.f32 %v1596
    %vm1603 = vmor %vm1601, %vm1602
    %v1604 = vsel %vm1603, %v1596, %v1600
    %v1605 = vand.u32 2147483647, %v1595
    %vm1606 = vcmp.eq.f32.partialorder %v1605, 8.507059e+37
    %v1607 = vand.u32 %v1595, 2147483648
    %v1608 = vor.u32 1.1754944e-38, %v1607
    %v1609 = vsel %vm1606, %v1608, %v1604
    %v1610 = vmul.f32 1.0, %v1609
    %v1611 = vtanh.pop %v1591
    %v1612 = vmul.f32 %v1610, %v1452
    %1614 = vrot.lane.b32.xlu0 %v1611, 64
    %v1615 = vpop.permute.xlu0 %1614
    %v1617 = vmul.f32 %v1610, %v1615
    %1619 = vrot.lane.b32.xlu0 %v1617, 32
    %v1620 = vpop.permute.xlu0 %1619
    %v1622 = vadd.f32 %v1612, %v1620
    %v1623 = vtanh.pop %v1622
    %1625 = vrot.lane.b32.xlu0 %v1623, 64
    %v1626 = vpop.permute.xlu0 %1625
    %v1628 = vmul.f32 %v1610, %v1626
    %1630 = vrot.lane.b32.xlu0 %v1546, 32
    %v1631 = vpop.permute.xlu0 %1630
    %v1632 = vsel %vm181, %v1631, 0
    %1634 = vmatpush.msra.mxu0 0.0
    %1635 = vmatpush.msra.mxu0 0.0
    %1636 = vmatpush.msra.mxu0 0.0
    %1637 = vmatpush.msra.mxu0 0.0
    %1638 = vmatpush.msra.mxu0 0.0
    %1639 = vmatpush.msra.mxu0 0.0
    %1640 = vmatpush.msra.mxu0 0.0
    %1641 = vmatpush.msra.mxu0 0.0
    %1642 = vmatpush.msra.mxu0 0.0
    %1643 = vmatpush.msra.mxu0 0.0
    %1644 = vmatpush.msra.mxu0 0.0
    %1645 = vmatpush.msra.mxu0 0.0
    %1646 = vmatpush.msra.mxu0 %v175
    %1647 = vmatpush.msra.mxu0 %v174
    %1648 = vmatpush.msra.mxu0 %v173
    %1649 = vmatpush.msra.mxu0 %v172
    %1650 = vmatmul.f32.gmra.mxu0 %v1632
    %v1651 = vpop.f32.mrf.mxu0
    %v1652 = vadd.f32 0.0, %v1651
    %1653 = vdwg.mxu0
    %1655 = vrot.lane.b32.xlu0 %v1628, 32
    %v1656 = vpop.permute.xlu0 %1655
    %v1657 = vsel %vm181, %v1656, 0
    %1659 = vmatpush.msra.mxu0 0.0
    %1660 = vmatpush.msra.mxu0 0.0
    %1661 = vmatpush.msra.mxu0 0.0
    %1662 = vmatpush.msra.mxu0 0.0
    %1663 = vmatpush.msra.mxu0 0.0
    %1664 = vmatpush.msra.mxu0 0.0
    %1665 = vmatpush.msra.mxu0 0.0
    %1666 = vmatpush.msra.mxu0 0.0
    %1667 = vmatpush.msra.mxu0 0.0
    %1668 = vmatpush.msra.mxu0 0.0
    %1669 = vmatpush.msra.mxu0 0.0
    %1670 = vmatpush.msra.mxu0 0.0
    %1671 = vmatpush.msra.mxu0 %v171
    %1672 = vmatpush.msra.mxu0 %v170
    %1673 = vmatpush.msra.mxu0 %v169
    %1674 = vmatpush.msra.mxu0 %v168
    %1675 = vmatmul.f32.gmra.mxu0 %v1657
    %v1676 = vpop.f32.mrf.mxu0
    %v1677 = vadd.f32 %v1652, %v1676
    %1678 = vdwg.mxu0
    %v1679 = vadd.f32 %v1677, %v178
    %v1680 = vxor.u32 %v1679, 2147483648
    %v1681 = vmul.f32 %v1680, 1.442695
    %v1682 = vpow.pop %v1681
    %v1683 = vadd.f32 %v1682, 1.0
    %v1684 = vrcp.pop %v1683
    %v1685 = vmul.f32 %v1683, %v1684
    %v1686 = vsub.f32 1.0, %v1685
    %v1687 = vmul.f32 %v1684, %v1686
    %v1688 = vadd.f32 %v1684, %v1687
    %vm1689 = vweird.f32 %v1683
    %vm1690 = vweird.f32 %v1684
    %vm1691 = vmor %vm1689, %vm1690
    %v1692 = vsel %vm1691, %v1684, %v1688
    %v1693 = vand.u32 2147483647, %v1683
    %vm1694 = vcmp.eq.f32.partialorder %v1693, 8.507059e+37
    %v1695 = vand.u32 %v1683, 2147483648
    %v1696 = vor.u32 1.1754944e-38, %v1695
    %v1697 = vsel %vm1694, %v1696, %v1692
    %v1698 = vmul.f32 1.0, %v1697
    %v1699 = vtanh.pop %v1679
    %v1700 = vmul.f32 %v1698, %v1540
    %1702 = vrot.lane.b32.xlu0 %v1699, 64
    %v1703 = vpop.permute.xlu0 %1702
    %v1705 = vmul.f32 %v1698, %v1703
    %1707 = vrot.lane.b32.xlu0 %v1705, 32
    %v1708 = vpop.permute.xlu0 %1707
    %v1710 = vadd.f32 %v1700, %v1708
    %v1711 = vtanh.pop %v1710
    %1713 = vrot.lane.b32.xlu0 %v1711, 64
    %v1714 = vpop.permute.xlu0 %1713
    %v1716 = vmul.f32 %v1698, %v1714
    %1718 = vrot.lane.b32.xlu0 %v1716, 32
    %v1719 = vpop.permute.xlu0 %1718
    %vm1721 = vcmask 254976
    %1722 = vst.msk [vmem:[#allocation2] sm:$0x3] %vm1721, %v1719
    %s1723 = scalar_lea.vmem %s1, 2
    %v1724 = vld [vmem:[%s1723] sm:$0x3]
    %1725 = vmatpush.msra.mxu0 0.0
    %1726 = vmatpush.msra.mxu0 0.0
    %1727 = vmatpush.msra.mxu0 0.0
    %1728 = vmatpush.msra.mxu0 0.0
    %1729 = vmatpush.msra.mxu0 0.0
    %1730 = vmatpush.msra.mxu0 0.0
    %1731 = vmatpush.msra.mxu0 0.0
    %1732 = vmatpush.msra.mxu0 0.0
    %1733 = vmatpush.msra.mxu0 0.0
    %1734 = vmatpush.msra.mxu0 0.0
    %1735 = vmatpush.msra.mxu0 0.0
    %1736 = vmatpush.msra.mxu0 0.0
    %1737 = vmatpush.msra.mxu0 %v163
    %1738 = vmatpush.msra.mxu0 %v162
    %1739 = vmatpush.msra.mxu0 %v161
    %1740 = vmatpush.msra.mxu0 %v160
    %1741 = vmatmul.f32.gmra.mxu0 %v1657
    %v1742 = vpop.f32.mrf.mxu0
    %v1743 = vadd.f32 0.0, %v1742
    %1744 = vdwg.mxu0
    %v1746 = vsel %vm205, %v1724, 0
    %1748 = vmatpush.msra.mxu0 0.0
    %1749 = vmatpush.msra.mxu0 0.0
    %1750 = vmatpush.msra.mxu0 0.0
    %1751 = vmatpush.msra.mxu0 0.0
    %1752 = vmatpush.msra.mxu0 0.0
    %1753 = vmatpush.msra.mxu0 0.0
    %1754 = vmatpush.msra.mxu0 0.0
    %1755 = vmatpush.msra.mxu0 0.0
    %1756 = vmatpush.msra.mxu0 0.0
    %1757 = vmatpush.msra.mxu0 0.0
    %1758 = vmatpush.msra.mxu0 0.0
    %1759 = vmatpush.msra.mxu0 0.0
    %1760 = vmatpush.msra.mxu0 0.0
    %1761 = vmatpush.msra.mxu0 0.0
    %1762 = vmatpush.msra.mxu0 %v159
    %1763 = vmatpush.msra.mxu0 %v158
    %1764 = vmatmul.f32.gmra.mxu0 %v1746
    %v1765 = vpop.f32.mrf.mxu0
    %v1766 = vadd.f32 %v1743, %v1765
    %1767 = vdwg.mxu0
    %v1768 = vadd.f32 %v1766, %v166
    %v1769 = vxor.u32 %v1768, 2147483648
    %v1770 = vmul.f32 %v1769, 1.442695
    %v1771 = vpow.pop %v1770
    %v1772 = vadd.f32 %v1771, 1.0
    %v1773 = vrcp.pop %v1772
    %v1774 = vmul.f32 %v1772, %v1773
    %v1775 = vsub.f32 1.0, %v1774
    %v1776 = vmul.f32 %v1773, %v1775
    %v1777 = vadd.f32 %v1773, %v1776
    %vm1778 = vweird.f32 %v1772
    %vm1779 = vweird.f32 %v1773
    %vm1780 = vmor %vm1778, %vm1779
    %v1781 = vsel %vm1780, %v1773, %v1777
    %v1782 = vand.u32 2147483647, %v1772
    %vm1783 = vcmp.eq.f32.partialorder %v1782, 8.507059e+37
    %v1784 = vand.u32 %v1772, 2147483648
    %v1785 = vor.u32 1.1754944e-38, %v1784
    %v1786 = vsel %vm1783, %v1785, %v1781
    %v1787 = vmul.f32 1.0, %v1786
    %v1788 = vtanh.pop %v1768
    %v1789 = vmul.f32 %v1787, %v1622
    %1791 = vrot.lane.b32.xlu0 %v1788, 64
    %v1792 = vpop.permute.xlu0 %1791
    %v1794 = vmul.f32 %v1787, %v1792
    %1796 = vrot.lane.b32.xlu0 %v1794, 32
    %v1797 = vpop.permute.xlu0 %1796
    %v1799 = vadd.f32 %v1789, %v1797
    %v1800 = vtanh.pop %v1799
    %1802 = vrot.lane.b32.xlu0 %v1800, 64
    %v1803 = vpop.permute.xlu0 %1802
    %v1805 = vmul.f32 %v1787, %v1803
    %v1806 = vsel %vm181, %v1719, 0
    %1808 = vmatpush.msra.mxu0 0.0
    %1809 = vmatpush.msra.mxu0 0.0
    %1810 = vmatpush.msra.mxu0 0.0
    %1811 = vmatpush.msra.mxu0 0.0
    %1812 = vmatpush.msra.mxu0 0.0
    %1813 = vmatpush.msra.mxu0 0.0
    %1814 = vmatpush.msra.mxu0 0.0
    %1815 = vmatpush.msra.mxu0 0.0
    %1816 = vmatpush.msra.mxu0 0.0
    %1817 = vmatpush.msra.mxu0 0.0
    %1818 = vmatpush.msra.mxu0 0.0
    %1819 = vmatpush.msra.mxu0 0.0
    %1820 = vmatpush.msra.mxu0 %v175
    %1821 = vmatpush.msra.mxu0 %v174
    %1822 = vmatpush.msra.mxu0 %v173
    %1823 = vmatpush.msra.mxu0 %v172
    %1824 = vmatmul.f32.gmra.mxu0 %v1806
    %v1825 = vpop.f32.mrf.mxu0
    %v1826 = vadd.f32 0.0, %v1825
    %1827 = vdwg.mxu0
    %1829 = vrot.lane.b32.xlu0 %v1805, 32
    %v1830 = vpop.permute.xlu0 %1829
    %v1831 = vsel %vm181, %v1830, 0
    %1833 = vmatpush.msra.mxu0 0.0
    %1834 = vmatpush.msra.mxu0 0.0
    %1835 = vmatpush.msra.mxu0 0.0
    %1836 = vmatpush.msra.mxu0 0.0
    %1837 = vmatpush.msra.mxu0 0.0
    %1838 = vmatpush.msra.mxu0 0.0
    %1839 = vmatpush.msra.mxu0 0.0
    %1840 = vmatpush.msra.mxu0 0.0
    %1841 = vmatpush.msra.mxu0 0.0
    %1842 = vmatpush.msra.mxu0 0.0
    %1843 = vmatpush.msra.mxu0 0.0
    %1844 = vmatpush.msra.mxu0 0.0
    %1845 = vmatpush.msra.mxu0 %v171
    %1846 = vmatpush.msra.mxu0 %v170
    %1847 = vmatpush.msra.mxu0 %v169
    %1848 = vmatpush.msra.mxu0 %v168
    %1849 = vmatmul.f32.gmra.mxu0 %v1831
    %v1850 = vpop.f32.mrf.mxu0
    %v1851 = vadd.f32 %v1826, %v1850
    %1852 = vdwg.mxu0
    %v1853 = vadd.f32 %v1851, %v178
    %v1854 = vxor.u32 %v1853, 2147483648
    %v1855 = vmul.f32 %v1854, 1.442695
    %v1856 = vpow.pop %v1855
    %v1857 = vadd.f32 %v1856, 1.0
    %v1858 = vrcp.pop %v1857
    %v1859 = vmul.f32 %v1857, %v1858
    %v1860 = vsub.f32 1.0, %v1859
    %v1861 = vmul.f32 %v1858, %v1860
    %v1862 = vadd.f32 %v1858, %v1861
    %vm1863 = vweird.f32 %v1857
    %vm1864 = vweird.f32 %v1858
    %vm1865 = vmor %vm1863, %vm1864
    %v1866 = vsel %vm1865, %v1858, %v1862
    %v1867 = vand.u32 2147483647, %v1857
    %vm1868 = vcmp.eq.f32.partialorder %v1867, 8.507059e+37
    %v1869 = vand.u32 %v1857, 2147483648
    %v1870 = vor.u32 1.1754944e-38, %v1869
    %v1871 = vsel %vm1868, %v1870, %v1866
    %v1872 = vmul.f32 1.0, %v1871
    %v1873 = vtanh.pop %v1853
    %v1874 = vmul.f32 %v1872, %v1710
    %1876 = vrot.lane.b32.xlu0 %v1873, 64
    %v1877 = vpop.permute.xlu0 %1876
    %v1879 = vmul.f32 %v1872, %v1877
    %1881 = vrot.lane.b32.xlu0 %v1879, 32
    %v1882 = vpop.permute.xlu0 %1881
    %v1884 = vadd.f32 %v1874, %v1882
    %v1885 = vtanh.pop %v1884
    %1887 = vrot.lane.b32.xlu0 %v1885, 64
    %v1888 = vpop.permute.xlu0 %1887
    %v1890 = vmul.f32 %v1872, %v1888
    %1892 = vrot.lane.b32.xlu0 %v1890, 32
    %v1893 = vpop.permute.xlu0 %1892
    %1895 = vst.msk [vmem:[#allocation2 + $0x2] sm:$0x3] %vm1721, %v1893
    %s1896 = scalar_lea.vmem %s1, 4
    %v1897 = vld [vmem:[%s1896] sm:$0x3]
    %1898 = vmatpush.msra.mxu0 0.0
    %1899 = vmatpush.msra.mxu0 0.0
    %1900 = vmatpush.msra.mxu0 0.0
    %1901 = vmatpush.msra.mxu0 0.0
    %1902 = vmatpush.msra.mxu0 0.0
    %1903 = vmatpush.msra.mxu0 0.0
    %1904 = vmatpush.msra.mxu0 0.0
    %1905 = vmatpush.msra.mxu0 0.0
    %1906 = vmatpush.msra.mxu0 0.0
    %1907 = vmatpush.msra.mxu0 0.0
    %1908 = vmatpush.msra.mxu0 0.0
    %1909 = vmatpush.msra.mxu0 0.0
    %1910 = vmatpush.msra.mxu0 %v163
    %1911 = vmatpush.msra.mxu0 %v162
    %1912 = vmatpush.msra.mxu0 %v161
    %1913 = vmatpush.msra.mxu0 %v160
    %1914 = vmatmul.f32.gmra.mxu0 %v1831
    %v1915 = vpop.f32.mrf.mxu0
    %v1916 = vadd.f32 0.0, %v1915
    %1917 = vdwg.mxu0
    %v1919 = vsel %vm205, %v1897, 0
    %1921 = vmatpush.msra.mxu0 0.0
    %1922 = vmatpush.msra.mxu0 0.0
    %1923 = vmatpush.msra.mxu0 0.0
    %1924 = vmatpush.msra.mxu0 0.0
    %1925 = vmatpush.msra.mxu0 0.0
    %1926 = vmatpush.msra.mxu0 0.0
    %1927 = vmatpush.msra.mxu0 0.0
    %1928 = vmatpush.msra.mxu0 0.0
    %1929 = vmatpush.msra.mxu0 0.0
    %1930 = vmatpush.msra.mxu0 0.0
    %1931 = vmatpush.msra.mxu0 0.0
    %1932 = vmatpush.msra.mxu0 0.0
    %1933 = vmatpush.msra.mxu0 0.0
    %1934 = vmatpush.msra.mxu0 0.0
    %1935 = vmatpush.msra.mxu0 %v159
    %1936 = vmatpush.msra.mxu0 %v158
    %1937 = vmatmul.f32.gmra.mxu0 %v1919
    %v1938 = vpop.f32.mrf.mxu0
    %v1939 = vadd.f32 %v1916, %v1938
    %1940 = vdwg.mxu0
    %v1941 = vadd.f32 %v1939, %v166
    %v1942 = vxor.u32 %v1941, 2147483648
    %v1943 = vmul.f32 %v1942, 1.442695
    %v1944 = vpow.pop %v1943
    %v1945 = vadd.f32 %v1944, 1.0
    %v1946 = vrcp.pop %v1945
    %v1947 = vmul.f32 %v1945, %v1946
    %v1948 = vsub.f32 1.0, %v1947
    %v1949 = vmul.f32 %v1946, %v1948
    %v1950 = vadd.f32 %v1946, %v1949
    %vm1951 = vweird.f32 %v1945
    %vm1952 = vweird.f32 %v1946
    %vm1953 = vmor %vm1951, %vm1952
    %v1954 = vsel %vm1953, %v1946, %v1950
    %v1955 = vand.u32 2147483647, %v1945
    %vm1956 = vcmp.eq.f32.partialorder %v1955, 8.507059e+37
    %v1957 = vand.u32 %v1945, 2147483648
    %v1958 = vor.u32 1.1754944e-38, %v1957
    %v1959 = vsel %vm1956, %v1958, %v1954
    %v1960 = vmul.f32 1.0, %v1959
    %v1961 = vtanh.pop %v1941
    %v1962 = vmul.f32 %v1960, %v1799
    %1964 = vrot.lane.b32.xlu0 %v1961, 64
    %v1965 = vpop.permute.xlu0 %1964
    %v1967 = vmul.f32 %v1960, %v1965
    %1969 = vrot.lane.b32.xlu0 %v1967, 32
    %v1970 = vpop.permute.xlu0 %1969
    %v1972 = vadd.f32 %v1962, %v1970
    %v1973 = vtanh.pop %v1972
    %1975 = vrot.lane.b32.xlu0 %v1973, 64
    %v1976 = vpop.permute.xlu0 %1975
    %v1978 = vmul.f32 %v1960, %v1976
    %v1979 = vsel %vm181, %v1893, 0
    %1981 = vmatpush.msra.mxu0 0.0
    %1982 = vmatpush.msra.mxu0 0.0
    %1983 = vmatpush.msra.mxu0 0.0
    %1984 = vmatpush.msra.mxu0 0.0
    %1985 = vmatpush.msra.mxu0 0.0
    %1986 = vmatpush.msra.mxu0 0.0
    %1987 = vmatpush.msra.mxu0 0.0
    %1988 = vmatpush.msra.mxu0 0.0
    %1989 = vmatpush.msra.mxu0 0.0
    %1990 = vmatpush.msra.mxu0 0.0
    %1991 = vmatpush.msra.mxu0 0.0
    %1992 = vmatpush.msra.mxu0 0.0
    %1993 = vmatpush.msra.mxu0 %v175
    %1994 = vmatpush.msra.mxu0 %v174
    %1995 = vmatpush.msra.mxu0 %v173
    %1996 = vmatpush.msra.mxu0 %v172
    %1997 = vmatmul.f32.gmra.mxu0 %v1979
    %v1998 = vpop.f32.mrf.mxu0
    %v1999 = vadd.f32 0.0, %v1998
    %2000 = vdwg.mxu0
    %2002 = vrot.lane.b32.xlu0 %v1978, 32
    %v2003 = vpop.permute.xlu0 %2002
    %v2004 = vsel %vm181, %v2003, 0
    %2006 = vmatpush.msra.mxu0 0.0
    %2007 = vmatpush.msra.mxu0 0.0
    %2008 = vmatpush.msra.mxu0 0.0
    %2009 = vmatpush.msra.mxu0 0.0
    %2010 = vmatpush.msra.mxu0 0.0
    %2011 = vmatpush.msra.mxu0 0.0
    %2012 = vmatpush.msra.mxu0 0.0
    %2013 = vmatpush.msra.mxu0 0.0
    %2014 = vmatpush.msra.mxu0 0.0
    %2015 = vmatpush.msra.mxu0 0.0
    %2016 = vmatpush.msra.mxu0 0.0
    %2017 = vmatpush.msra.mxu0 0.0
    %2018 = vmatpush.msra.mxu0 %v171
    %2019 = vmatpush.msra.mxu0 %v170
    %2020 = vmatpush.msra.mxu0 %v169
    %2021 = vmatpush.msra.mxu0 %v168
    %2022 = vmatmul.f32.gmra.mxu0 %v2004
    %v2023 = vpop.f32.mrf.mxu0
    %v2024 = vadd.f32 %v1999, %v2023
    %2025 = vdwg.mxu0
    %v2026 = vadd.f32 %v2024, %v178
    %v2027 = vxor.u32 %v2026, 2147483648
    %v2028 = vmul.f32 %v2027, 1.442695
    %v2029 = vpow.pop %v2028
    %v2030 = vadd.f32 %v2029, 1.0
    %v2031 = vrcp.pop %v2030
    %v2032 = vmul.f32 %v2030, %v2031
    %v2033 = vsub.f32 1.0, %v2032
    %v2034 = vmul.f32 %v2031, %v2033
    %v2035 = vadd.f32 %v2031, %v2034
    %vm2036 = vweird.f32 %v2030
    %vm2037 = vweird.f32 %v2031
    %vm2038 = vmor %vm2036, %vm2037
    %v2039 = vsel %vm2038, %v2031, %v2035
    %v2040 = vand.u32 2147483647, %v2030
    %vm2041 = vcmp.eq.f32.partialorder %v2040, 8.507059e+37
    %v2042 = vand.u32 %v2030, 2147483648
    %v2043 = vor.u32 1.1754944e-38, %v2042
    %v2044 = vsel %vm2041, %v2043, %v2039
    %v2045 = vmul.f32 1.0, %v2044
    %v2046 = vtanh.pop %v2026
    %v2047 = vmul.f32 %v2045, %v1884
    %2049 = vrot.lane.b32.xlu0 %v2046, 64
    %v2050 = vpop.permute.xlu0 %2049
    %v2052 = vmul.f32 %v2045, %v2050
    %2054 = vrot.lane.b32.xlu0 %v2052, 32
    %v2055 = vpop.permute.xlu0 %2054
    %v2057 = vadd.f32 %v2047, %v2055
    %v2058 = vtanh.pop %v2057
    %2060 = vrot.lane.b32.xlu0 %v2058, 64
    %v2061 = vpop.permute.xlu0 %2060
    %v2063 = vmul.f32 %v2045, %v2061
    %2065 = vrot.lane.b32.xlu0 %v2063, 32
    %v2066 = vpop.permute.xlu0 %2065
    %2068 = vst.msk [vmem:[#allocation2 + $0x4] sm:$0x3] %vm1721, %v2066
    %s2069 = scalar_lea.vmem %s1, 6
    %v2070 = vld [vmem:[%s2069] sm:$0x3]
    %2071 = vmatpush.msra.mxu0 0.0
    %2072 = vmatpush.msra.mxu0 0.0
    %2073 = vmatpush.msra.mxu0 0.0
    %2074 = vmatpush.msra.mxu0 0.0
    %2075 = vmatpush.msra.mxu0 0.0
    %2076 = vmatpush.msra.mxu0 0.0
    %2077 = vmatpush.msra.mxu0 0.0
    %2078 = vmatpush.msra.mxu0 0.0
    %2079 = vmatpush.msra.mxu0 0.0
    %2080 = vmatpush.msra.mxu0 0.0
    %2081 = vmatpush.msra.mxu0 0.0
    %2082 = vmatpush.msra.mxu0 0.0
    %2083 = vmatpush.msra.mxu0 %v163
    %2084 = vmatpush.msra.mxu0 %v162
    %2085 = vmatpush.msra.mxu0 %v161
    %2086 = vmatpush.msra.mxu0 %v160
    %2087 = vmatmul.f32.gmra.mxu0 %v2004
    %v2088 = vpop.f32.mrf.mxu0
    %v2089 = vadd.f32 0.0, %v2088
    %2090 = vdwg.mxu0
    %v2092 = vsel %vm205, %v2070, 0
    %2094 = vmatpush.msra.mxu0 0.0
    %2095 = vmatpush.msra.mxu0 0.0
    %2096 = vmatpush.msra.mxu0 0.0
    %2097 = vmatpush.msra.mxu0 0.0
    %2098 = vmatpush.msra.mxu0 0.0
    %2099 = vmatpush.msra.mxu0 0.0
    %2100 = vmatpush.msra.mxu0 0.0
    %2101 = vmatpush.msra.mxu0 0.0
    %2102 = vmatpush.msra.mxu0 0.0
    %2103 = vmatpush.msra.mxu0 0.0
    %2104 = vmatpush.msra.mxu0 0.0
    %2105 = vmatpush.msra.mxu0 0.0
    %2106 = vmatpush.msra.mxu0 0.0
    %2107 = vmatpush.msra.mxu0 0.0
    %2108 = vmatpush.msra.mxu0 %v159
    %2109 = vmatpush.msra.mxu0 %v158
    %2110 = vmatmul.f32.gmra.mxu0 %v2092
    %v2111 = vpop.f32.mrf.mxu0
    %v2112 = vadd.f32 %v2089, %v2111
    %2113 = vdwg.mxu0
    %v2114 = vadd.f32 %v2112, %v166
    %v2115 = vxor.u32 %v2114, 2147483648
    %v2116 = vmul.f32 %v2115, 1.442695
    %v2117 = vpow.pop %v2116
    %v2118 = vadd.f32 %v2117, 1.0
    %v2119 = vrcp.pop %v2118
    %v2120 = vmul.f32 %v2118, %v2119
    %v2121 = vsub.f32 1.0, %v2120
    %v2122 = vmul.f32 %v2119, %v2121
    %v2123 = vadd.f32 %v2119, %v2122
    %vm2124 = vweird.f32 %v2118
    %vm2125 = vweird.f32 %v2119
    %vm2126 = vmor %vm2124, %vm2125
    %v2127 = vsel %vm2126, %v2119, %v2123
    %v2128 = vand.u32 2147483647, %v2118
    %vm2129 = vcmp.eq.f32.partialorder %v2128, 8.507059e+37
    %v2130 = vand.u32 %v2118, 2147483648
    %v2131 = vor.u32 1.1754944e-38, %v2130
    %v2132 = vsel %vm2129, %v2131, %v2127
    %v2133 = vmul.f32 1.0, %v2132
    %v2134 = vtanh.pop %v2114
    %v2135 = vmul.f32 %v2133, %v1972
    %2137 = vrot.lane.b32.xlu0 %v2134, 64
    %v2138 = vpop.permute.xlu0 %2137
    %v2140 = vmul.f32 %v2133, %v2138
    %2142 = vrot.lane.b32.xlu0 %v2140, 32
    %v2143 = vpop.permute.xlu0 %2142
    %v2145 = vadd.f32 %v2135, %v2143
    %v2146 = vtanh.pop %v2145
    %2148 = vrot.lane.b32.xlu0 %v2146, 64
    %v2149 = vpop.permute.xlu0 %2148
    %v2151 = vmul.f32 %v2133, %v2149
    %v2152 = vsel %vm181, %v2066, 0
    %2154 = vmatpush.msra.mxu0 0.0
    %2155 = vmatpush.msra.mxu0 0.0
    %2156 = vmatpush.msra.mxu0 0.0
    %2157 = vmatpush.msra.mxu0 0.0
    %2158 = vmatpush.msra.mxu0 0.0
    %2159 = vmatpush.msra.mxu0 0.0
    %2160 = vmatpush.msra.mxu0 0.0
    %2161 = vmatpush.msra.mxu0 0.0
    %2162 = vmatpush.msra.mxu0 0.0
    %2163 = vmatpush.msra.mxu0 0.0
    %2164 = vmatpush.msra.mxu0 0.0
    %2165 = vmatpush.msra.mxu0 0.0
    %2166 = vmatpush.msra.mxu0 %v175
    %2167 = vmatpush.msra.mxu0 %v174
    %2168 = vmatpush.msra.mxu0 %v173
    %2169 = vmatpush.msra.mxu0 %v172
    %2170 = vmatmul.f32.gmra.mxu0 %v2152
    %v2171 = vpop.f32.mrf.mxu0
    %v2172 = vadd.f32 0.0, %v2171
    %2173 = vdwg.mxu0
    %2175 = vrot.lane.b32.xlu0 %v2151, 32
    %v2176 = vpop.permute.xlu0 %2175
    %v2177 = vsel %vm181, %v2176, 0
    %2179 = vmatpush.msra.mxu0 0.0
    %2180 = vmatpush.msra.mxu0 0.0
    %2181 = vmatpush.msra.mxu0 0.0
    %2182 = vmatpush.msra.mxu0 0.0
    %2183 = vmatpush.msra.mxu0 0.0
    %2184 = vmatpush.msra.mxu0 0.0
    %2185 = vmatpush.msra.mxu0 0.0
    %2186 = vmatpush.msra.mxu0 0.0
    %2187 = vmatpush.msra.mxu0 0.0
    %2188 = vmatpush.msra.mxu0 0.0
    %2189 = vmatpush.msra.mxu0 0.0
    %2190 = vmatpush.msra.mxu0 0.0
    %2191 = vmatpush.msra.mxu0 %v171
    %2192 = vmatpush.msra.mxu0 %v170
    %2193 = vmatpush.msra.mxu0 %v169
    %2194 = vmatpush.msra.mxu0 %v168
    %2195 = vmatmul.f32.gmra.mxu0 %v2177
    %v2196 = vpop.f32.mrf.mxu0
    %v2197 = vadd.f32 %v2172, %v2196
    %2198 = vdwg.mxu0
    %v2199 = vadd.f32 %v2197, %v178
    %v2200 = vxor.u32 %v2199, 2147483648
    %v2201 = vmul.f32 %v2200, 1.442695
    %v2202 = vpow.pop %v2201
    %v2203 = vadd.f32 %v2202, 1.0
    %v2204 = vrcp.pop %v2203
    %v2205 = vmul.f32 %v2203, %v2204
    %v2206 = vsub.f32 1.0, %v2205
    %v2207 = vmul.f32 %v2204, %v2206
    %v2208 = vadd.f32 %v2204, %v2207
    %vm2209 = vweird.f32 %v2203
    %vm2210 = vweird.f32 %v2204
    %vm2211 = vmor %vm2209, %vm2210
    %v2212 = vsel %vm2211, %v2204, %v2208
    %v2213 = vand.u32 2147483647, %v2203
    %vm2214 = vcmp.eq.f32.partialorder %v2213, 8.507059e+37
    %v2215 = vand.u32 %v2203, 2147483648
    %v2216 = vor.u32 1.1754944e-38, %v2215
    %v2217 = vsel %vm2214, %v2216, %v2212
    %v2218 = vmul.f32 1.0, %v2217
    %v2219 = vtanh.pop %v2199
    %v2220 = vmul.f32 %v2218, %v2057
    %2222 = vrot.lane.b32.xlu0 %v2219, 64
    %v2223 = vpop.permute.xlu0 %2222
    %v2225 = vmul.f32 %v2218, %v2223
    %2227 = vrot.lane.b32.xlu0 %v2225, 32
    %v2228 = vpop.permute.xlu0 %2227
    %v2230 = vadd.f32 %v2220, %v2228
    %v2231 = vtanh.pop %v2230
    %2233 = vrot.lane.b32.xlu0 %v2231, 64
    %v2234 = vpop.permute.xlu0 %2233
    %v2236 = vmul.f32 %v2218, %v2234
    %2238 = vrot.lane.b32.xlu0 %v2236, 32
    %v2239 = vpop.permute.xlu0 %2238
    %2241 = vst.msk [vmem:[#allocation2 + $0x6] sm:$0x3] %vm1721, %v2239
    %s2242 = scalar_lea.vmem %s1, 8
    %v2243 = vld [vmem:[%s2242] sm:$0x3]
    %2244 = vmatpush.msra.mxu0 0.0
    %2245 = vmatpush.msra.mxu0 0.0
    %2246 = vmatpush.msra.mxu0 0.0
    %2247 = vmatpush.msra.mxu0 0.0
    %2248 = vmatpush.msra.mxu0 0.0
    %2249 = vmatpush.msra.mxu0 0.0
    %2250 = vmatpush.msra.mxu0 0.0
    %2251 = vmatpush.msra.mxu0 0.0
    %2252 = vmatpush.msra.mxu0 0.0
    %2253 = vmatpush.msra.mxu0 0.0
    %2254 = vmatpush.msra.mxu0 0.0
    %2255 = vmatpush.msra.mxu0 0.0
    %2256 = vmatpush.msra.mxu0 %v163
    %2257 = vmatpush.msra.mxu0 %v162
    %2258 = vmatpush.msra.mxu0 %v161
    %2259 = vmatpush.msra.mxu0 %v160
    %2260 = vmatmul.f32.gmra.mxu0 %v2177
    %v2261 = vpop.f32.mrf.mxu0
    %v2262 = vadd.f32 0.0, %v2261
    %2263 = vdwg.mxu0
    %v2265 = vsel %vm205, %v2243, 0
    %2267 = vmatpush.msra.mxu0 0.0
    %2268 = vmatpush.msra.mxu0 0.0
    %2269 = vmatpush.msra.mxu0 0.0
    %2270 = vmatpush.msra.mxu0 0.0
    %2271 = vmatpush.msra.mxu0 0.0
    %2272 = vmatpush.msra.mxu0 0.0
    %2273 = vmatpush.msra.mxu0 0.0
    %2274 = vmatpush.msra.mxu0 0.0
    %2275 = vmatpush.msra.mxu0 0.0
    %2276 = vmatpush.msra.mxu0 0.0
    %2277 = vmatpush.msra.mxu0 0.0
    %2278 = vmatpush.msra.mxu0 0.0
    %2279 = vmatpush.msra.mxu0 0.0
    %2280 = vmatpush.msra.mxu0 0.0
    %2281 = vmatpush.msra.mxu0 %v159
    %2282 = vmatpush.msra.mxu0 %v158
    %2283 = vmatmul.f32.gmra.mxu0 %v2265
    %v2284 = vpop.f32.mrf.mxu0
    %v2285 = vadd.f32 %v2262, %v2284
    %2286 = vdwg.mxu0
    %v2287 = vadd.f32 %v2285, %v166
    %v2288 = vxor.u32 %v2287, 2147483648
    %v2289 = vmul.f32 %v2288, 1.442695
    %v2290 = vpow.pop %v2289
    %v2291 = vadd.f32 %v2290, 1.0
    %v2292 = vrcp.pop %v2291
    %v2293 = vmul.f32 %v2291, %v2292
    %v2294 = vsub.f32 1.0, %v2293
    %v2295 = vmul.f32 %v2292, %v2294
    %v2296 = vadd.f32 %v2292, %v2295
    %vm2297 = vweird.f32 %v2291
    %vm2298 = vweird.f32 %v2292
    %vm2299 = vmor %vm2297, %vm2298
    %v2300 = vsel %vm2299, %v2292, %v2296
    %v2301 = vand.u32 2147483647, %v2291
    %vm2302 = vcmp.eq.f32.partialorder %v2301, 8.507059e+37
    %v2303 = vand.u32 %v2291, 2147483648
    %v2304 = vor.u32 1.1754944e-38, %v2303
    %v2305 = vsel %vm2302, %v2304, %v2300
    %v2306 = vmul.f32 1.0, %v2305
    %v2307 = vtanh.pop %v2287
    %v2308 = vmul.f32 %v2306, %v2145
    %2310 = vrot.lane.b32.xlu0 %v2307, 64
    %v2311 = vpop.permute.xlu0 %2310
    %v2313 = vmul.f32 %v2306, %v2311
    %2315 = vrot.lane.b32.xlu0 %v2313, 32
    %v2316 = vpop.permute.xlu0 %2315
    %v2318 = vadd.f32 %v2308, %v2316
    %v2319 = vtanh.pop %v2318
    %2321 = vrot.lane.b32.xlu0 %v2319, 64
    %v2322 = vpop.permute.xlu0 %2321
    %v2324 = vmul.f32 %v2306, %v2322
    %v2325 = vsel %vm181, %v2239, 0
    %2327 = vmatpush.msra.mxu0 0.0
    %2328 = vmatpush.msra.mxu0 0.0
    %2329 = vmatpush.msra.mxu0 0.0
    %2330 = vmatpush.msra.mxu0 0.0
    %2331 = vmatpush.msra.mxu0 0.0
    %2332 = vmatpush.msra.mxu0 0.0
    %2333 = vmatpush.msra.mxu0 0.0
    %2334 = vmatpush.msra.mxu0 0.0
    %2335 = vmatpush.msra.mxu0 0.0
    %2336 = vmatpush.msra.mxu0 0.0
    %2337 = vmatpush.msra.mxu0 0.0
    %2338 = vmatpush.msra.mxu0 0.0
    %2339 = vmatpush.msra.mxu0 %v175
    %2340 = vmatpush.msra.mxu0 %v174
    %2341 = vmatpush.msra.mxu0 %v173
    %2342 = vmatpush.msra.mxu0 %v172
    %2343 = vmatmul.f32.gmra.mxu0 %v2325
    %v2344 = vpop.f32.mrf.mxu0
    %v2345 = vadd.f32 0.0, %v2344
    %2346 = vdwg.mxu0
    %2348 = vrot.lane.b32.xlu0 %v2324, 32
    %v2349 = vpop.permute.xlu0 %2348
    %v2350 = vsel %vm181, %v2349, 0
    %2352 = vmatpush.msra.mxu0 0.0
    %2353 = vmatpush.msra.mxu0 0.0
    %2354 = vmatpush.msra.mxu0 0.0
    %2355 = vmatpush.msra.mxu0 0.0
    %2356 = vmatpush.msra.mxu0 0.0
    %2357 = vmatpush.msra.mxu0 0.0
    %2358 = vmatpush.msra.mxu0 0.0
    %2359 = vmatpush.msra.mxu0 0.0
    %2360 = vmatpush.msra.mxu0 0.0
    %2361 = vmatpush.msra.mxu0 0.0
    %2362 = vmatpush.msra.mxu0 0.0
    %2363 = vmatpush.msra.mxu0 0.0
    %2364 = vmatpush.msra.mxu0 %v171
    %2365 = vmatpush.msra.mxu0 %v170
    %2366 = vmatpush.msra.mxu0 %v169
    %2367 = vmatpush.msra.mxu0 %v168
    %2368 = vmatmul.f32.gmra.mxu0 %v2350
    %v2369 = vpop.f32.mrf.mxu0
    %v2370 = vadd.f32 %v2345, %v2369
    %2371 = vdwg.mxu0
    %v2372 = vadd.f32 %v2370, %v178
    %v2373 = vxor.u32 %v2372, 2147483648
    %v2374 = vmul.f32 %v2373, 1.442695
    %v2375 = vpow.pop %v2374
    %v2376 = vadd.f32 %v2375, 1.0
    %v2377 = vrcp.pop %v2376
    %v2378 = vmul.f32 %v2376, %v2377
    %v2379 = vsub.f32 1.0, %v2378
    %v2380 = vmul.f32 %v2377, %v2379
    %v2381 = vadd.f32 %v2377, %v2380
    %vm2382 = vweird.f32 %v2376
    %vm2383 = vweird.f32 %v2377
    %vm2384 = vmor %vm2382, %vm2383
    %v2385 = vsel %vm2384, %v2377, %v2381
    %v2386 = vand.u32 2147483647, %v2376
    %vm2387 = vcmp.eq.f32.partialorder %v2386, 8.507059e+37
    %v2388 = vand.u32 %v2376, 2147483648
    %v2389 = vor.u32 1.1754944e-38, %v2388
    %v2390 = vsel %vm2387, %v2389, %v2385
    %v2391 = vmul.f32 1.0, %v2390
    %v2392 = vtanh.pop %v2372
    %v2393 = vmul.f32 %v2391, %v2230
    %2395 = vrot.lane.b32.xlu0 %v2392, 64
    %v2396 = vpop.permute.xlu0 %2395
    %v2398 = vmul.f32 %v2391, %v2396
    %2400 = vrot.lane.b32.xlu0 %v2398, 32
    %v2401 = vpop.permute.xlu0 %2400
    %v2403 = vadd.f32 %v2393, %v2401
    %v2404 = vtanh.pop %v2403
    %2406 = vrot.lane.b32.xlu0 %v2404, 64
    %v2407 = vpop.permute.xlu0 %2406
    %v2409 = vmul.f32 %v2391, %v2407
    %2411 = vrot.lane.b32.xlu0 %v2409, 32
    %v2412 = vpop.permute.xlu0 %2411
    %2414 = vst.msk [vmem:[#allocation2 + $0x8] sm:$0x3] %vm1721, %v2412
    %s2415 = scalar_lea.vmem %s1, 10
    %v2416 = vld [vmem:[%s2415] sm:$0x3]
    %2417 = vmatpush.msra.mxu0 0.0
    %2418 = vmatpush.msra.mxu0 0.0
    %2419 = vmatpush.msra.mxu0 0.0
    %2420 = vmatpush.msra.mxu0 0.0
    %2421 = vmatpush.msra.mxu0 0.0
    %2422 = vmatpush.msra.mxu0 0.0
    %2423 = vmatpush.msra.mxu0 0.0
    %2424 = vmatpush.msra.mxu0 0.0
    %2425 = vmatpush.msra.mxu0 0.0
    %2426 = vmatpush.msra.mxu0 0.0
    %2427 = vmatpush.msra.mxu0 0.0
    %2428 = vmatpush.msra.mxu0 0.0
    %2429 = vmatpush.msra.mxu0 %v163
    %2430 = vmatpush.msra.mxu0 %v162
    %2431 = vmatpush.msra.mxu0 %v161
    %2432 = vmatpush.msra.mxu0 %v160
    %2433 = vmatmul.f32.gmra.mxu0 %v2350
    %v2434 = vpop.f32.mrf.mxu0
    %v2435 = vadd.f32 0.0, %v2434
    %2436 = vdwg.mxu0
    %v2438 = vsel %vm205, %v2416, 0
    %2440 = vmatpush.msra.mxu0 0.0
    %2441 = vmatpush.msra.mxu0 0.0
    %2442 = vmatpush.msra.mxu0 0.0
    %2443 = vmatpush.msra.mxu0 0.0
    %2444 = vmatpush.msra.mxu0 0.0
    %2445 = vmatpush.msra.mxu0 0.0
    %2446 = vmatpush.msra.mxu0 0.0
    %2447 = vmatpush.msra.mxu0 0.0
    %2448 = vmatpush.msra.mxu0 0.0
    %2449 = vmatpush.msra.mxu0 0.0
    %2450 = vmatpush.msra.mxu0 0.0
    %2451 = vmatpush.msra.mxu0 0.0
    %2452 = vmatpush.msra.mxu0 0.0
    %2453 = vmatpush.msra.mxu0 0.0
    %2454 = vmatpush.msra.mxu0 %v159
    %2455 = vmatpush.msra.mxu0 %v158
    %2456 = vmatmul.f32.gmra.mxu0 %v2438
    %v2457 = vpop.f32.mrf.mxu0
    %v2458 = vadd.f32 %v2435, %v2457
    %2459 = vdwg.mxu0
    %v2460 = vadd.f32 %v2458, %v166
    %v2461 = vxor.u32 %v2460, 2147483648
    %v2462 = vmul.f32 %v2461, 1.442695
    %v2463 = vpow.pop %v2462
    %v2464 = vadd.f32 %v2463, 1.0
    %v2465 = vrcp.pop %v2464
    %v2466 = vmul.f32 %v2464, %v2465
    %v2467 = vsub.f32 1.0, %v2466
    %v2468 = vmul.f32 %v2465, %v2467
    %v2469 = vadd.f32 %v2465, %v2468
    %vm2470 = vweird.f32 %v2464
    %vm2471 = vweird.f32 %v2465
    %vm2472 = vmor %vm2470, %vm2471
    %v2473 = vsel %vm2472, %v2465, %v2469
    %v2474 = vand.u32 2147483647, %v2464
    %vm2475 = vcmp.eq.f32.partialorder %v2474, 8.507059e+37
    %v2476 = vand.u32 %v2464, 2147483648
    %v2477 = vor.u32 1.1754944e-38, %v2476
    %v2478 = vsel %vm2475, %v2477, %v2473
    %v2479 = vmul.f32 1.0, %v2478
    %v2480 = vtanh.pop %v2460
    %v2481 = vmul.f32 %v2479, %v2318
    %2483 = vrot.lane.b32.xlu0 %v2480, 64
    %v2484 = vpop.permute.xlu0 %2483
    %v2486 = vmul.f32 %v2479, %v2484
    %2488 = vrot.lane.b32.xlu0 %v2486, 32
    %v2489 = vpop.permute.xlu0 %2488
    %v2491 = vadd.f32 %v2481, %v2489
    %v2492 = vtanh.pop %v2491
    %2494 = vrot.lane.b32.xlu0 %v2492, 64
    %v2495 = vpop.permute.xlu0 %2494
    %v2497 = vmul.f32 %v2479, %v2495
    %v2498 = vsel %vm181, %v2412, 0
    %2500 = vmatpush.msra.mxu0 0.0
    %2501 = vmatpush.msra.mxu0 0.0
    %2502 = vmatpush.msra.mxu0 0.0
    %2503 = vmatpush.msra.mxu0 0.0
    %2504 = vmatpush.msra.mxu0 0.0
    %2505 = vmatpush.msra.mxu0 0.0
    %2506 = vmatpush.msra.mxu0 0.0
    %2507 = vmatpush.msra.mxu0 0.0
    %2508 = vmatpush.msra.mxu0 0.0
    %2509 = vmatpush.msra.mxu0 0.0
    %2510 = vmatpush.msra.mxu0 0.0
    %2511 = vmatpush.msra.mxu0 0.0
    %2512 = vmatpush.msra.mxu0 %v175
    %2513 = vmatpush.msra.mxu0 %v174
    %2514 = vmatpush.msra.mxu0 %v173
    %2515 = vmatpush.msra.mxu0 %v172
    %2516 = vmatmul.f32.gmra.mxu0 %v2498
    %v2517 = vpop.f32.mrf.mxu0
    %v2518 = vadd.f32 0.0, %v2517
    %2519 = vdwg.mxu0
    %2521 = vrot.lane.b32.xlu0 %v2497, 32
    %v2522 = vpop.permute.xlu0 %2521
    %v2523 = vsel %vm181, %v2522, 0
    %2525 = vmatpush.msra.mxu0 0.0
    %2526 = vmatpush.msra.mxu0 0.0
    %2527 = vmatpush.msra.mxu0 0.0
    %2528 = vmatpush.msra.mxu0 0.0
    %2529 = vmatpush.msra.mxu0 0.0
    %2530 = vmatpush.msra.mxu0 0.0
    %2531 = vmatpush.msra.mxu0 0.0
    %2532 = vmatpush.msra.mxu0 0.0
    %2533 = vmatpush.msra.mxu0 0.0
    %2534 = vmatpush.msra.mxu0 0.0
    %2535 = vmatpush.msra.mxu0 0.0
    %2536 = vmatpush.msra.mxu0 0.0
    %2537 = vmatpush.msra.mxu0 %v171
    %2538 = vmatpush.msra.mxu0 %v170
    %2539 = vmatpush.msra.mxu0 %v169
    %2540 = vmatpush.msra.mxu0 %v168
    %2541 = vmatmul.f32.gmra.mxu0 %v2523
    %v2542 = vpop.f32.mrf.mxu0
    %v2543 = vadd.f32 %v2518, %v2542
    %2544 = vdwg.mxu0
    %v2545 = vadd.f32 %v2543, %v178
    %v2546 = vxor.u32 %v2545, 2147483648
    %v2547 = vmul.f32 %v2546, 1.442695
    %v2548 = vpow.pop %v2547
    %v2549 = vadd.f32 %v2548, 1.0
    %v2550 = vrcp.pop %v2549
    %v2551 = vmul.f32 %v2549, %v2550
    %v2552 = vsub.f32 1.0, %v2551
    %v2553 = vmul.f32 %v2550, %v2552
    %v2554 = vadd.f32 %v2550, %v2553
    %vm2555 = vweird.f32 %v2549
    %vm2556 = vweird.f32 %v2550
    %vm2557 = vmor %vm2555, %vm2556
    %v2558 = vsel %vm2557, %v2550, %v2554
    %v2559 = vand.u32 2147483647, %v2549
    %vm2560 = vcmp.eq.f32.partialorder %v2559, 8.507059e+37
    %v2561 = vand.u32 %v2549, 2147483648
    %v2562 = vor.u32 1.1754944e-38, %v2561
    %v2563 = vsel %vm2560, %v2562, %v2558
    %v2564 = vmul.f32 1.0, %v2563
    %v2565 = vtanh.pop %v2545
    %v2566 = vmul.f32 %v2564, %v2403
    %2568 = vrot.lane.b32.xlu0 %v2565, 64
    %v2569 = vpop.permute.xlu0 %2568
    %v2571 = vmul.f32 %v2564, %v2569
    %2573 = vrot.lane.b32.xlu0 %v2571, 32
    %v2574 = vpop.permute.xlu0 %2573
    %v2576 = vadd.f32 %v2566, %v2574
    %v2577 = vtanh.pop %v2576
    %2579 = vrot.lane.b32.xlu0 %v2577, 64
    %v2580 = vpop.permute.xlu0 %2579
    %v2582 = vmul.f32 %v2564, %v2580
    %2584 = vrot.lane.b32.xlu0 %v2582, 32
    %v2585 = vpop.permute.xlu0 %2584
    %2587 = vst.msk [vmem:[#allocation2 + $0xa] sm:$0x3] %vm1721, %v2585
    %s2588 = scalar_lea.vmem %s1, 12
    %v2589 = vld [vmem:[%s2588] sm:$0x3]
    %2590 = vmatpush.msra.mxu0 0.0
    %2591 = vmatpush.msra.mxu0 0.0
    %2592 = vmatpush.msra.mxu0 0.0
    %2593 = vmatpush.msra.mxu0 0.0
    %2594 = vmatpush.msra.mxu0 0.0
    %2595 = vmatpush.msra.mxu0 0.0
    %2596 = vmatpush.msra.mxu0 0.0
    %2597 = vmatpush.msra.mxu0 0.0
    %2598 = vmatpush.msra.mxu0 0.0
    %2599 = vmatpush.msra.mxu0 0.0
    %2600 = vmatpush.msra.mxu0 0.0
    %2601 = vmatpush.msra.mxu0 0.0
    %2602 = vmatpush.msra.mxu0 %v163
    %2603 = vmatpush.msra.mxu0 %v162
    %2604 = vmatpush.msra.mxu0 %v161
    %2605 = vmatpush.msra.mxu0 %v160
    %2606 = vmatmul.f32.gmra.mxu0 %v2523
    %v2607 = vpop.f32.mrf.mxu0
    %v2608 = vadd.f32 0.0, %v2607
    %2609 = vdwg.mxu0
    %v2611 = vsel %vm205, %v2589, 0
    %2613 = vmatpush.msra.mxu0 0.0
    %2614 = vmatpush.msra.mxu0 0.0
    %2615 = vmatpush.msra.mxu0 0.0
    %2616 = vmatpush.msra.mxu0 0.0
    %2617 = vmatpush.msra.mxu0 0.0
    %2618 = vmatpush.msra.mxu0 0.0
    %2619 = vmatpush.msra.mxu0 0.0
    %2620 = vmatpush.msra.mxu0 0.0
    %2621 = vmatpush.msra.mxu0 0.0
    %2622 = vmatpush.msra.mxu0 0.0
    %2623 = vmatpush.msra.mxu0 0.0
    %2624 = vmatpush.msra.mxu0 0.0
    %2625 = vmatpush.msra.mxu0 0.0
    %2626 = vmatpush.msra.mxu0 0.0
    %2627 = vmatpush.msra.mxu0 %v159
    %2628 = vmatpush.msra.mxu0 %v158
    %2629 = vmatmul.f32.gmra.mxu0 %v2611
    %v2630 = vpop.f32.mrf.mxu0
    %v2631 = vadd.f32 %v2608, %v2630
    %2632 = vdwg.mxu0
    %v2633 = vadd.f32 %v2631, %v166
    %v2634 = vxor.u32 %v2633, 2147483648
    %v2635 = vmul.f32 %v2634, 1.442695
    %v2636 = vpow.pop %v2635
    %v2637 = vadd.f32 %v2636, 1.0
    %v2638 = vrcp.pop %v2637
    %v2639 = vmul.f32 %v2637, %v2638
    %v2640 = vsub.f32 1.0, %v2639
    %v2641 = vmul.f32 %v2638, %v2640
    %v2642 = vadd.f32 %v2638, %v2641
    %vm2643 = vweird.f32 %v2637
    %vm2644 = vweird.f32 %v2638
    %vm2645 = vmor %vm2643, %vm2644
    %v2646 = vsel %vm2645, %v2638, %v2642
    %v2647 = vand.u32 2147483647, %v2637
    %vm2648 = vcmp.eq.f32.partialorder %v2647, 8.507059e+37
    %v2649 = vand.u32 %v2637, 2147483648
    %v2650 = vor.u32 1.1754944e-38, %v2649
    %v2651 = vsel %vm2648, %v2650, %v2646
    %v2652 = vmul.f32 1.0, %v2651
    %v2653 = vtanh.pop %v2633
    %v2654 = vmul.f32 %v2652, %v2491
    %2656 = vrot.lane.b32.xlu0 %v2653, 64
    %v2657 = vpop.permute.xlu0 %2656
    %v2659 = vmul.f32 %v2652, %v2657
    %2661 = vrot.lane.b32.xlu0 %v2659, 32
    %v2662 = vpop.permute.xlu0 %2661
    %v2664 = vadd.f32 %v2654, %v2662
    %v2665 = vtanh.pop %v2664
    %2667 = vrot.lane.b32.xlu0 %v2665, 64
    %v2668 = vpop.permute.xlu0 %2667
    %v2670 = vmul.f32 %v2652, %v2668
    %v2671 = vsel %vm181, %v2585, 0
    %2673 = vmatpush.msra.mxu0 0.0
    %2674 = vmatpush.msra.mxu0 0.0
    %2675 = vmatpush.msra.mxu0 0.0
    %2676 = vmatpush.msra.mxu0 0.0
    %2677 = vmatpush.msra.mxu0 0.0
    %2678 = vmatpush.msra.mxu0 0.0
    %2679 = vmatpush.msra.mxu0 0.0
    %2680 = vmatpush.msra.mxu0 0.0
    %2681 = vmatpush.msra.mxu0 0.0
    %2682 = vmatpush.msra.mxu0 0.0
    %2683 = vmatpush.msra.mxu0 0.0
    %2684 = vmatpush.msra.mxu0 0.0
    %2685 = vmatpush.msra.mxu0 %v175
    %2686 = vmatpush.msra.mxu0 %v174
    %2687 = vmatpush.msra.mxu0 %v173
    %2688 = vmatpush.msra.mxu0 %v172
    %2689 = vmatmul.f32.gmra.mxu0 %v2671
    %v2690 = vpop.f32.mrf.mxu0
    %v2691 = vadd.f32 0.0, %v2690
    %2692 = vdwg.mxu0
    %2694 = vrot.lane.b32.xlu0 %v2670, 32
    %v2695 = vpop.permute.xlu0 %2694
    %v2696 = vsel %vm181, %v2695, 0
    %2698 = vmatpush.msra.mxu0 0.0
    %2699 = vmatpush.msra.mxu0 0.0
    %2700 = vmatpush.msra.mxu0 0.0
    %2701 = vmatpush.msra.mxu0 0.0
    %2702 = vmatpush.msra.mxu0 0.0
    %2703 = vmatpush.msra.mxu0 0.0
    %2704 = vmatpush.msra.mxu0 0.0
    %2705 = vmatpush.msra.mxu0 0.0
    %2706 = vmatpush.msra.mxu0 0.0
    %2707 = vmatpush.msra.mxu0 0.0
    %2708 = vmatpush.msra.mxu0 0.0
    %2709 = vmatpush.msra.mxu0 0.0
    %2710 = vmatpush.msra.mxu0 %v171
    %2711 = vmatpush.msra.mxu0 %v170
    %2712 = vmatpush.msra.mxu0 %v169
    %2713 = vmatpush.msra.mxu0 %v168
    %2714 = vmatmul.f32.gmra.mxu0 %v2696
    %v2715 = vpop.f32.mrf.mxu0
    %v2716 = vadd.f32 %v2691, %v2715
    %2717 = vdwg.mxu0
    %v2718 = vadd.f32 %v2716, %v178
    %v2719 = vxor.u32 %v2718, 2147483648
    %v2720 = vmul.f32 %v2719, 1.442695
    %v2721 = vpow.pop %v2720
    %v2722 = vadd.f32 %v2721, 1.0
    %v2723 = vrcp.pop %v2722
    %v2724 = vmul.f32 %v2722, %v2723
    %v2725 = vsub.f32 1.0, %v2724
    %v2726 = vmul.f32 %v2723, %v2725
    %v2727 = vadd.f32 %v2723, %v2726
    %vm2728 = vweird.f32 %v2722
    %vm2729 = vweird.f32 %v2723
    %vm2730 = vmor %vm2728, %vm2729
    %v2731 = vsel %vm2730, %v2723, %v2727
    %v2732 = vand.u32 2147483647, %v2722
    %vm2733 = vcmp.eq.f32.partialorder %v2732, 8.507059e+37
    %v2734 = vand.u32 %v2722, 2147483648
    %v2735 = vor.u32 1.1754944e-38, %v2734
    %v2736 = vsel %vm2733, %v2735, %v2731
    %v2737 = vmul.f32 1.0, %v2736
    %v2738 = vtanh.pop %v2718
    %v2739 = vmul.f32 %v2737, %v2576
    %2741 = vrot.lane.b32.xlu0 %v2738, 64
    %v2742 = vpop.permute.xlu0 %2741
    %v2744 = vmul.f32 %v2737, %v2742
    %2746 = vrot.lane.b32.xlu0 %v2744, 32
    %v2747 = vpop.permute.xlu0 %2746
    %v2749 = vadd.f32 %v2739, %v2747
    %v2750 = vtanh.pop %v2749
    %2752 = vrot.lane.b32.xlu0 %v2750, 64
    %v2753 = vpop.permute.xlu0 %2752
    %v2755 = vmul.f32 %v2737, %v2753
    %2757 = vrot.lane.b32.xlu0 %v2755, 32
    %v2758 = vpop.permute.xlu0 %2757
    %2760 = vst.msk [vmem:[#allocation2 + $0xc] sm:$0x3] %vm1721, %v2758
    %s2761 = scalar_lea.vmem %s1, 14
    %v2762 = vld [vmem:[%s2761] sm:$0x3]
    %2763 = vmatpush.msra.mxu0 0.0
    %2764 = vmatpush.msra.mxu0 0.0
    %2765 = vmatpush.msra.mxu0 0.0
    %2766 = vmatpush.msra.mxu0 0.0
    %2767 = vmatpush.msra.mxu0 0.0
    %2768 = vmatpush.msra.mxu0 0.0
    %2769 = vmatpush.msra.mxu0 0.0
    %2770 = vmatpush.msra.mxu0 0.0
    %2771 = vmatpush.msra.mxu0 0.0
    %2772 = vmatpush.msra.mxu0 0.0
    %2773 = vmatpush.msra.mxu0 0.0
    %2774 = vmatpush.msra.mxu0 0.0
    %2775 = vmatpush.msra.mxu0 %v163
    %2776 = vmatpush.msra.mxu0 %v162
    %2777 = vmatpush.msra.mxu0 %v161
    %2778 = vmatpush.msra.mxu0 %v160
    %2779 = vmatmul.f32.gmra.mxu0 %v2696
    %v2780 = vpop.f32.mrf.mxu0
    %v2781 = vadd.f32 0.0, %v2780
    %2782 = vdwg.mxu0
    %v2784 = vsel %vm205, %v2762, 0
    %2786 = vmatpush.msra.mxu0 0.0
    %2787 = vmatpush.msra.mxu0 0.0
    %2788 = vmatpush.msra.mxu0 0.0
    %2789 = vmatpush.msra.mxu0 0.0
    %2790 = vmatpush.msra.mxu0 0.0
    %2791 = vmatpush.msra.mxu0 0.0
    %2792 = vmatpush.msra.mxu0 0.0
    %2793 = vmatpush.msra.mxu0 0.0
    %2794 = vmatpush.msra.mxu0 0.0
    %2795 = vmatpush.msra.mxu0 0.0
    %2796 = vmatpush.msra.mxu0 0.0
    %2797 = vmatpush.msra.mxu0 0.0
    %2798 = vmatpush.msra.mxu0 0.0
    %2799 = vmatpush.msra.mxu0 0.0
    %2800 = vmatpush.msra.mxu0 %v159
    %2801 = vmatpush.msra.mxu0 %v158
    %2802 = vmatmul.f32.gmra.mxu0 %v2784
    %v2803 = vpop.f32.mrf.mxu0
    %v2804 = vadd.f32 %v2781, %v2803
    %2805 = vdwg.mxu0
    %v2806 = vadd.f32 %v2804, %v166
    %v2807 = vxor.u32 %v2806, 2147483648
    %v2808 = vmul.f32 %v2807, 1.442695
    %v2809 = vpow.pop %v2808
    %v2810 = vadd.f32 %v2809, 1.0
    %v2811 = vrcp.pop %v2810
    %v2812 = vmul.f32 %v2810, %v2811
    %v2813 = vsub.f32 1.0, %v2812
    %v2814 = vmul.f32 %v2811, %v2813
    %v2815 = vadd.f32 %v2811, %v2814
    %vm2816 = vweird.f32 %v2810
    %vm2817 = vweird.f32 %v2811
    %vm2818 = vmor %vm2816, %vm2817
    %v2819 = vsel %vm2818, %v2811, %v2815
    %v2820 = vand.u32 2147483647, %v2810
    %vm2821 = vcmp.eq.f32.partialorder %v2820, 8.507059e+37
    %v2822 = vand.u32 %v2810, 2147483648
    %v2823 = vor.u32 1.1754944e-38, %v2822
    %v2824 = vsel %vm2821, %v2823, %v2819
    %v2825 = vmul.f32 1.0, %v2824
    %v2826 = vtanh.pop %v2806
    %v2827 = vmul.f32 %v2825, %v2664
    %2829 = vrot.lane.b32.xlu0 %v2826, 64
    %v2830 = vpop.permute.xlu0 %2829
    %v2832 = vmul.f32 %v2825, %v2830
    %2834 = vrot.lane.b32.xlu0 %v2832, 32
    %v2835 = vpop.permute.xlu0 %2834
    %v2837 = vadd.f32 %v2827, %v2835
    %v2838 = vtanh.pop %v2837
    %2840 = vrot.lane.b32.xlu0 %v2838, 64
    %v2841 = vpop.permute.xlu0 %2840
    %v2843 = vmul.f32 %v2825, %v2841
    %v2844 = vsel %vm181, %v2758, 0
    %2846 = vmatpush.msra.mxu0 0.0
    %2847 = vmatpush.msra.mxu0 0.0
    %2848 = vmatpush.msra.mxu0 0.0
    %2849 = vmatpush.msra.mxu0 0.0
    %2850 = vmatpush.msra.mxu0 0.0
    %2851 = vmatpush.msra.mxu0 0.0
    %2852 = vmatpush.msra.mxu0 0.0
    %2853 = vmatpush.msra.mxu0 0.0
    %2854 = vmatpush.msra.mxu0 0.0
    %2855 = vmatpush.msra.mxu0 0.0
    %2856 = vmatpush.msra.mxu0 0.0
    %2857 = vmatpush.msra.mxu0 0.0
    %2858 = vmatpush.msra.mxu0 %v175
    %2859 = vmatpush.msra.mxu0 %v174
    %2860 = vmatpush.msra.mxu0 %v173
    %2861 = vmatpush.msra.mxu0 %v172
    %2862 = vmatmul.f32.gmra.mxu0 %v2844
    %v2863 = vpop.f32.mrf.mxu0
    %v2864 = vadd.f32 0.0, %v2863
    %2865 = vdwg.mxu0
    %2867 = vrot.lane.b32.xlu0 %v2843, 32
    %v2868 = vpop.permute.xlu0 %2867
    %v2869 = vsel %vm181, %v2868, 0
    %2871 = vmatpush.msra.mxu0 0.0
    %2872 = vmatpush.msra.mxu0 0.0
    %2873 = vmatpush.msra.mxu0 0.0
    %2874 = vmatpush.msra.mxu0 0.0
    %2875 = vmatpush.msra.mxu0 0.0
    %2876 = vmatpush.msra.mxu0 0.0
    %2877 = vmatpush.msra.mxu0 0.0
    %2878 = vmatpush.msra.mxu0 0.0
    %2879 = vmatpush.msra.mxu0 0.0
    %2880 = vmatpush.msra.mxu0 0.0
    %2881 = vmatpush.msra.mxu0 0.0
    %2882 = vmatpush.msra.mxu0 0.0
    %2883 = vmatpush.msra.mxu0 %v171
    %2884 = vmatpush.msra.mxu0 %v170
    %2885 = vmatpush.msra.mxu0 %v169
    %2886 = vmatpush.msra.mxu0 %v168
    %2887 = vmatmul.f32.gmra.mxu0 %v2869
    %v2888 = vpop.f32.mrf.mxu0
    %v2889 = vadd.f32 %v2864, %v2888
    %2890 = vdwg.mxu0
    %v2891 = vadd.f32 %v2889, %v178
    %v2892 = vxor.u32 %v2891, 2147483648
    %v2893 = vmul.f32 %v2892, 1.442695
    %v2894 = vpow.pop %v2893
    %v2895 = vadd.f32 %v2894, 1.0
    %v2896 = vrcp.pop %v2895
    %v2897 = vmul.f32 %v2895, %v2896
    %v2898 = vsub.f32 1.0, %v2897
    %v2899 = vmul.f32 %v2896, %v2898
    %v2900 = vadd.f32 %v2896, %v2899
    %vm2901 = vweird.f32 %v2895
    %vm2902 = vweird.f32 %v2896
    %vm2903 = vmor %vm2901, %vm2902
    %v2904 = vsel %vm2903, %v2896, %v2900
    %v2905 = vand.u32 2147483647, %v2895
    %vm2906 = vcmp.eq.f32.partialorder %v2905, 8.507059e+37
    %v2907 = vand.u32 %v2895, 2147483648
    %v2908 = vor.u32 1.1754944e-38, %v2907
    %v2909 = vsel %vm2906, %v2908, %v2904
    %v2910 = vmul.f32 1.0, %v2909
    %v2911 = vtanh.pop %v2891
    %v2912 = vmul.f32 %v2910, %v2749
    %2914 = vrot.lane.b32.xlu0 %v2911, 64
    %v2915 = vpop.permute.xlu0 %2914
    %v2917 = vmul.f32 %v2910, %v2915
    %2919 = vrot.lane.b32.xlu0 %v2917, 32
    %v2920 = vpop.permute.xlu0 %2919
    %v2922 = vadd.f32 %v2912, %v2920
    %v2923 = vtanh.pop %v2922
    %2925 = vrot.lane.b32.xlu0 %v2923, 64
    %v2926 = vpop.permute.xlu0 %2925
    %v2928 = vmul.f32 %v2910, %v2926
    %2930 = vrot.lane.b32.xlu0 %v2928, 32
    %v2931 = vpop.permute.xlu0 %2930
    %2933 = vst.msk [vmem:[#allocation2 + $0xe] sm:$0x3] %vm1721, %v2931
    %v2934 = vld [vmem:[#allocation2] sm:$0xff]
    %v2935 = vld [vmem:[#allocation2 + $0x8] sm:$0xff]
    %v2937 = vperm.slane %v135, 0
    %v2940 = vsel %vm181, %v2934, 0
    %v2943 = vsel %vm181, %v2935, 0
    %2945 = vmatpush.msra.mxu0 0.0
    %2946 = vmatpush.msra.mxu0 0.0
    %2947 = vmatpush.msra.mxu0 0.0
    %2948 = vmatpush.msra.mxu0 0.0
    %2949 = vmatpush.msra.mxu0 0.0
    %2950 = vmatpush.msra.mxu0 0.0
    %2951 = vmatpush.msra.mxu0 0.0
    %2952 = vmatpush.msra.mxu0 0.0
    %2953 = vmatpush.msra.mxu0 0.0
    %2954 = vmatpush.msra.mxu0 0.0
    %2955 = vmatpush.msra.mxu0 0.0
    %2956 = vmatpush.msra.mxu0 0.0
    %2957 = vmatpush.msra.mxu0 %v134
    %2958 = vmatpush.msra.mxu0 %v133
    %2959 = vmatpush.msra.mxu0 %v132
    %2960 = vmatpush.msra.mxu0 %v131
    %2961 = vmatmul.f32.gmra.mxu0 %v2940
    %v2962 = vpop.f32.mrf.mxu0
    %v2963 = vadd.f32 %v2937, %v2962
    %2964 = vmatmul.f32.gmra.mxu0 %v2943
    %v2965 = vpop.f32.mrf.mxu0
    %v2966 = vadd.f32 %v2937, %v2965
    %2967 = vdwg.mxu0
    %vm2968 = vcmask 31744
    %2969 = vst.msk [vmem:[%s16] sm:$0xff] %vm2968, %v2963
    %2970 = vst.msk [vmem:[%s16 + $0x8] sm:$0xff] %vm2968, %v2966
    // Predicated region
    $region86: #{lstm_model_forward_impl.1} parent=1 // pred_check
      _
    $region87: #{lstm_model_forward_impl.1} parent=1 // pred_check_branch
      %2972 = sbr.rel (0) target = $region89
    $region88: #{lstm_model_forward_impl.1} parent=1 // pred_region
      _
    $region89: #{lstm_model_forward_impl.1} parent=1 // pred_fallthru
      _
    // Predicated region
    $region90: #{lstm_model_forward_impl.1} parent=1 // pred_check
      _
    $region91: #{lstm_model_forward_impl.1} parent=1 // pred_check_branch
      %2974 = sbr.rel (0) target = $region93
    $region92: #{lstm_model_forward_impl.1} parent=1 // pred_region
      _
    $region93: #{lstm_model_forward_impl.1} parent=1 // pred_fallthru
      _
    %2975 = vsyncpa [#allocation4], 1
    %2976 = vsyncpa [#allocation6], 1
    %2977 = vsyncpa [#allocation9], 1

</llo_original>
